<compile_context>
chip_gen: v5e
topology: v5e:2x2
jax: 0.10.0
libtpu: 0.0.40
codegen_flags: <defaults>
</compile_context>

<pallas_src>
import functools

import jax
import jax.numpy as jnp
from jax.experimental import pallas as pl
from jax.experimental.pallas import tpu as pltpu


# --------------------------- in-kernel helpers ----------------------------- #
def _axis_angle_to_quat(ax, ay, az):
    """SPIN/VIBE batch_rodrigues front half: axis-angle -> unit quaternion.

    Uses rsqrt instead of sqrt + divides (EUP-friendly).  Inputs (BB, T, 24)."""
    eps = 1e-8
    axe, aye, aze = ax + eps, ay + eps, az + eps
    angle_sq = axe * axe + aye * aye + aze * aze
    inv_angle = jax.lax.rsqrt(angle_sq)
    half = 0.5 * angle_sq * inv_angle            # 0.5 * ||theta + eps||
    c = jnp.cos(half)
    si = jnp.sin(half) * inv_angle               # sin(half) / angle
    qw, qx, qy, qz = c, si * ax, si * ay, si * az
    inv_qn = jax.lax.rsqrt(qw * qw + qx * qx + qy * qy + qz * qz)
    return qw * inv_qn, qx * inv_qn, qy * inv_qn, qz * inv_qn


def _rot_entry(k, w, x, y, z):
    """k-th (row-major) entry of the quaternion rotation matrix."""
    if k == 0:
        return w * w + x * x - y * y - z * z
    if k == 1:
        return 2.0 * (x * y - w * z)
    if k == 2:
        return 2.0 * (w * y + x * z)
    if k == 3:
        return 2.0 * (w * z + x * y)
    if k == 4:
        return w * w - x * x + y * y - z * z
    if k == 5:
        return 2.0 * (y * z - w * x)
    if k == 6:
        return 2.0 * (x * z - w * y)
    if k == 7:
        return 2.0 * (w * x + y * z)
    return w * w - x * x - y * y + z * z


# -------------------------------- kernel ----------------------------------- #
def _glot_loss_kernel(p2x_ref, p2y_ref, r2x_ref, r2y_ref, r2c_ref,
                      p3x_ref, p3y_ref, p3z_ref, r3x_ref, r3y_ref, r3z_ref,
                      pax_ref, pay_ref, paz_ref, gax_ref, gay_ref, gaz_ref,
                      pb_ref, gb_ref, w3_ref, ws_ref,
                      o_ref, *, use_accel=True):
    i = pl.program_id(0)

    @pl.when(i == 0)
    def _init():
        o_ref[...] = jnp.zeros_like(o_ref)

    # ---------------- 2-D keypoint + accel (conf weighted) ----------------
    dx = p2x_ref[...] - r2x_ref[...]             # (BB, T, 49)
    dy = p2y_ref[...] - r2y_ref[...]
    conf = r2c_ref[...]                          # (BB, T, 49)
    s_kp2d = jnp.sum(conf * (dx * dx + dy * dy))

    # accel/vel computed IN-KERNEL (second / first difference along T);
    # zero-padded boundary frames have zero conf and zero diff -> omitted.
    if use_accel:
        adx = dx[:, 2:] - 2.0 * dx[:, 1:-1] + dx[:, :-2]
        ady = dy[:, 2:] - 2.0 * dy[:, 1:-1] + dy[:, :-2]
        aconf = conf[:, 1:-1]
    else:
        adx = dx[:, 1:] - dx[:, :-1]
        ady = dy[:, 1:] - dy[:, :-1]
        aconf = conf[:, :-1]
    s_a2d = jnp.sum(aconf * (adx * adx + ady * ady))

    # ------- 3-D keypoints (pelvis centered) + accel, masked by w_3d -------
    w3 = w3_ref[...]                             # (BB, T, 1)
    d3x = p3x_ref[...] - r3x_ref[...]            # (BB, T, 14) -- joints 25:39
    d3y = p3y_ref[...] - r3y_ref[...]
    d3z = p3z_ref[...] - r3z_ref[...]
    # (pred - pred_pelvis) - (gt - gt_pelvis) == d3 - pelvis(d3)
    pex = (d3x[:, :, 2:3] + d3x[:, :, 3:4]) * 0.5
    pey = (d3y[:, :, 2:3] + d3y[:, :, 3:4]) * 0.5
    pez = (d3z[:, :, 2:3] + d3z[:, :, 3:4]) * 0.5
    ex = d3x - pex
    ey = d3y - pey
    ez = d3z - pez
    s_kp3d = jnp.sum(w3 * (ex * ex + ey * ey + ez * ez))

    # 3-D accel: NO pelvis centering (matches torch accel_3d_loss).
    if use_accel:
        a3x = d3x[:, 2:] - 2.0 * d3x[:, 1:-1] + d3x[:, :-2]
        a3y = d3y[:, 2:] - 2.0 * d3y[:, 1:-1] + d3y[:, :-2]
        a3z = d3z[:, 2:] - 2.0 * d3z[:, 1:-1] + d3z[:, :-2]
        w3a = w3[:, 1:-1]
    else:
        a3x = d3x[:, 1:] - d3x[:, :-1]
        a3y = d3y[:, 1:] - d3y[:, :-1]
        a3z = d3z[:, 1:] - d3z[:, :-1]
        w3a = w3[:, :-1]
    s_a3d = jnp.sum(w3a * (a3x * a3x + a3y * a3y + a3z * a3z))

    # ----- SMPL pose (Rodrigues rotmat MSE) + betas, masked by w_smpl ------
    ws = ws_ref[...]                             # (BB, T, 1)
    pq = _axis_angle_to_quat(pax_ref[...], pay_ref[...], paz_ref[...])
    gq = _axis_angle_to_quat(gax_ref[...], gay_ref[...], gaz_ref[...])
    sq = jnp.zeros_like(pq[0])                   # (BB, T, 24)
    for k in range(9):                           # stream entries: few live vregs
        de = _rot_entry(k, *pq) - _rot_entry(k, *gq)
        sq = sq + de * de
    s_pose = jnp.sum(ws * sq)

    db = pb_ref[...] - gb_ref[...]               # (BB, T, 10)
    s_shape = jnp.sum(ws * db * db)

    # ---- accumulate the 6 raw partial sums into lanes 0..5 of the output ---
    lane = jax.lax.broadcasted_iota(jnp.int32, o_ref.shape, 1)
    zero = jnp.float32(0.0)
    vec = (jnp.where(lane == 0, s_kp2d, zero) +
           jnp.where(lane == 1, s_a2d, zero) +
           jnp.where(lane == 2, s_kp3d, zero) +
           jnp.where(lane == 3, s_a3d, zero) +
           jnp.where(lane == 4, s_pose, zero) +
           jnp.where(lane == 5, s_shape, zero))
    o_ref[...] += vec


# ----------------------------- wrapper -------------------------------------- #
def _pad_batch(x, target_b):
    pad = target_b - x.shape[0]
    if pad == 0:
        return x
    cfg = [(0, pad)] + [(0, 0)] * (x.ndim - 1)
    return jnp.pad(x, cfg)


def glot_loss_forward(outputs_mae, data_2d, data_3d, scores=None,
                      use_accel=True, block_batch=8,
                      e_loss_weight=60.0, e_3d_loss_weight=30.0,
                      e_pose_loss_weight=1.0, e_shape_loss_weight=0.001,
                      vel_or_accel_2d_weight=50.0, vel_or_accel_3d_weight=100.0):
    """JAX/Pallas equivalent of GLoTLoss.forward (scores unused, as in torch)."""
    f32 = jnp.float32

    if data_2d:
        sample_2d_count = data_2d['kp_2d'].shape[0]
        real_2d = jnp.concatenate(
            [data_2d['kp_2d'], data_3d['kp_2d']], axis=0).astype(f32)
    else:
        sample_2d_count = 0
        real_2d = data_3d['kp_2d'].astype(f32)

    real_3d = data_3d['kp_3d'].astype(f32)               # (B3, T, 49, 3)
    theta_gt = data_3d['theta'].astype(f32)               # (B3, T, 85)
    w_3d_f = data_3d['w_3d'].astype(f32)                  # (B3, T) or (B3, T, 1)
    w_smpl_f = data_3d['w_smpl'].astype(f32)

    preds = outputs_mae[-1]
    pred_kp2d = preds['kp_2d'].astype(f32)                      # (B2, T, 49, 2)
    pred_kp3d = preds['kp_3d'][sample_2d_count:].astype(f32)    # (B3, T, 49, 3)
    pred_theta = preds['theta'][sample_2d_count:].astype(f32)   # (B3, T, 85)

    B2, T = pred_kp2d.shape[0], pred_kp2d.shape[1]
    B3 = pred_kp3d.shape[0]

    # ---- lane-dense coordinate planes (frames on sublanes, feats on lanes) ----
    p2x, p2y = pred_kp2d[..., 0], pred_kp2d[..., 1]             # (B2, T, 49)
    r2x, r2y, r2c = real_2d[..., 0], real_2d[..., 1], real_2d[..., 2]

    pred3_s = pred_kp3d[:, :, 25:39, :]                         # (B3, T, 14, 3)
    real3_s = real_3d[:, :, 25:39, :]
    p3x, p3y, p3z = pred3_s[..., 0], pred3_s[..., 1], pred3_s[..., 2]
    r3x, r3y, r3z = real3_s[..., 0], real3_s[..., 1], real3_s[..., 2]

    pose_p = pred_theta[:, :, 3:75].reshape(B3, T, 24, 3)
    pose_g = theta_gt[:, :, 3:75].reshape(B3, T, 24, 3)
    pax, pay, paz = pose_p[..., 0], pose_p[..., 1], pose_p[..., 2]
    gax, gay, gaz = pose_g[..., 0], pose_g[..., 1], pose_g[..., 2]
    pbet = pred_theta[:, :, 75:]                                # (B3, T, 10)
    gbet = theta_gt[:, :, 75:]

    w3 = w_3d_f.reshape(B3, T, 1)
    ws = w_smpl_f.reshape(B3, T, 1)

    # ---- pad both batch axes to a common multiple of the block size ----------
    b_big = max(B2, B3)
    bb = min(block_batch, b_big)
    bp = bb * (-(-b_big // bb))           # ceil to multiple of bb

    args_2d = [_pad_batch(a, bp) for a in (p2x, p2y, r2x, r2y, r2c)]
    args_3d = [_pad_batch(a, bp) for a in (p3x, p3y, p3z, r3x, r3y, r3z,
                                           pax, pay, paz, gax, gay, gaz,
                                           pbet, gbet, w3, ws)]
    inputs = tuple(args_2d + args_3d)

    def spec(lanes):
        return pl.BlockSpec((bb, T, lanes), lambda i: (i, 0, 0))

    in_specs = ([spec(49)] * 5 + [spec(14)] * 6 + [spec(24)] * 6
                + [spec(10)] * 2 + [spec(1)] * 2)
    out_spec = pl.BlockSpec((1, 128), lambda i: (0, 0))

    sums = pl.pallas_call(
        functools.partial(_glot_loss_kernel, use_accel=use_accel),
        out_shape=jax.ShapeDtypeStruct((1, 128), f32),
        grid=(bp // bb,),
        in_specs=in_specs,
        out_specs=out_spec,
        compiler_params=pltpu.CompilerParams(
            dimension_semantics=("arbitrary",)),
    )(*inputs)[0]

    # ---- scalar finalize in JAX: denominators, safe counts, loss weights -----
    n2 = B2 * T
    denom2d = float(n2 * 49 * 2)
    cnt3 = jnp.sum(w_3d_f)
    cnts = jnp.sum(w_smpl_f)
    safe3 = jnp.maximum(cnt3, 1.0) * 42.0
    safep = jnp.maximum(cnts, 1.0)

    l_kp2d = sums[0] / denom2d * e_loss_weight
    l_a2d = sums[1] / denom2d * vel_or_accel_2d_weight
    l_kp3d = jnp.where(cnt3 > 0.0, sums[2] / safe3, 0.0) * e_3d_loss_weight
    l_a3d = jnp.where(cnt3 > 0.0, sums[3] / safe3, 0.0) * vel_or_accel_3d_weight
    # TODO(synk): torch drops loss_pose/loss_shape from the dict when w_smpl has
    # zero true entries; here they are returned as 0.0 (gen_loss value matches).
    l_pose = jnp.where(cnts > 0.0, sums[4] / (safep * 216.0), 0.0) * e_pose_loss_weight
    l_shape = jnp.where(cnts > 0.0, sums[5] / (safep * 10.0), 0.0) * e_shape_loss_weight

    loss_dict = {
        'loss_kp_2d_mae': l_kp2d,
        'loss_kp_3d_mae': l_kp3d,
        'loss_accel_2d_mae': l_a2d,
        'loss_accel_3d_mae': l_a3d,
        'loss_pose_mae': l_pose,
        'loss_shape_mae': l_shape,
    }
    gen_loss = l_kp2d + l_kp3d + l_a2d + l_a3d + l_pose + l_shape
    return gen_loss, loss_dict


# ------------------------------- demo --------------------------------------- #
if __name__ == "__main__":
    key = jax.random.PRNGKey(0)
    B, T, J = 2, 8, 49            # batch, seq_len, joints (VIBE/GLoT convention)
    ks = jax.random.split(key, 7)

    kp_2d = jax.random.normal(ks[0], (B, T, J, 3), jnp.float32)
    kp_2d = kp_2d.at[..., 2].set(jax.nn.sigmoid(kp_2d[..., 2]))   # confidences
    kp_3d = jax.random.normal(ks[1], (B, T, J, 3), jnp.float32) * 0.5
    theta = jax.random.normal(ks[2], (B, T, 85), jnp.float32) * 0.2
    w_3d = jnp.ones((B, T), jnp.float32).at[0, 0].set(0.0)
    w_smpl = jnp.ones((B, T), jnp.float32).at[1, 3].set(0.0)

    data_3d = {'kp_2d': kp_2d, 'kp_3d': kp_3d, 'theta': theta,
               'w_3d': w_3d, 'w_smpl': w_smpl}

    preds = {
        'kp_2d': jax.random.normal(ks[3], (B, T, J, 2), jnp.float32),
        'kp_3d': jax.random.normal(ks[4], (B, T, J, 3), jnp.float32) * 0.5,
        'theta': jax.random.normal(ks[5], (B, T, 85), jnp.float32) * 0.2,
    }
    outputs_mae = [preds]                                # generator_outputs[-1]
    scores = jax.random.normal(ks[6], (B, 2), jnp.float32)   # unused in forward

    gen_loss, loss_dict = glot_loss_forward(outputs_mae, None, data_3d, scores)
    jax.block_until_ready(gen_loss)
    print("KERNEL_OK")
</pallas_src>

<mosaic_0001>
module attributes {stable_mosaic.version = 11 : i64} {
  func.func @_glot_loss_kernel(%arg0: i32, %arg1: memref<2x8x49xf32, #tpu.memory_space<vmem>>, %arg2: memref<2x8x49xf32, #tpu.memory_space<vmem>>, %arg3: memref<2x8x49xf32, #tpu.memory_space<vmem>>, %arg4: memref<2x8x49xf32, #tpu.memory_space<vmem>>, %arg5: memref<2x8x49xf32, #tpu.memory_space<vmem>>, %arg6: memref<2x8x14xf32, #tpu.memory_space<vmem>>, %arg7: memref<2x8x14xf32, #tpu.memory_space<vmem>>, %arg8: memref<2x8x14xf32, #tpu.memory_space<vmem>>, %arg9: memref<2x8x14xf32, #tpu.memory_space<vmem>>, %arg10: memref<2x8x14xf32, #tpu.memory_space<vmem>>, %arg11: memref<2x8x14xf32, #tpu.memory_space<vmem>>, %arg12: memref<2x8x24xf32, #tpu.memory_space<vmem>>, %arg13: memref<2x8x24xf32, #tpu.memory_space<vmem>>, %arg14: memref<2x8x24xf32, #tpu.memory_space<vmem>>, %arg15: memref<2x8x24xf32, #tpu.memory_space<vmem>>, %arg16: memref<2x8x24xf32, #tpu.memory_space<vmem>>, %arg17: memref<2x8x24xf32, #tpu.memory_space<vmem>>, %arg18: memref<2x8x10xf32, #tpu.memory_space<vmem>>, %arg19: memref<2x8x10xf32, #tpu.memory_space<vmem>>, %arg20: memref<2x8x1xf32, #tpu.memory_space<vmem>>, %arg21: memref<2x8x1xf32, #tpu.memory_space<vmem>>, %arg22: memref<1x128xf32, #tpu.memory_space<vmem>>) attributes {dimension_semantics = [#tpu.dimension_semantics<arbitrary>], iteration_bounds = array<i64: 1>, scalar_prefetch = 0 : i64, scratch_operands = 0 : i64, tpu.core_type = #tpu.core_type<tc>, window_params = [{transform_indices = @transform_0, window_bounds = array<i64: 2, 8, 49>}, {transform_indices = @transform_1, window_bounds = array<i64: 2, 8, 49>}, {transform_indices = @transform_2, window_bounds = array<i64: 2, 8, 49>}, {transform_indices = @transform_3, window_bounds = array<i64: 2, 8, 49>}, {transform_indices = @transform_4, window_bounds = array<i64: 2, 8, 49>}, {transform_indices = @transform_5, window_bounds = array<i64: 2, 8, 14>}, {transform_indices = @transform_6, window_bounds = array<i64: 2, 8, 14>}, {transform_indices = @transform_7, window_bounds = array<i64: 2, 8, 14>}, {transform_indices = @transform_8, window_bounds = array<i64: 2, 8, 14>}, {transform_indices = @transform_9, window_bounds = array<i64: 2, 8, 14>}, {transform_indices = @transform_10, window_bounds = array<i64: 2, 8, 14>}, {transform_indices = @transform_11, window_bounds = array<i64: 2, 8, 24>}, {transform_indices = @transform_12, window_bounds = array<i64: 2, 8, 24>}, {transform_indices = @transform_13, window_bounds = array<i64: 2, 8, 24>}, {transform_indices = @transform_14, window_bounds = array<i64: 2, 8, 24>}, {transform_indices = @transform_15, window_bounds = array<i64: 2, 8, 24>}, {transform_indices = @transform_16, window_bounds = array<i64: 2, 8, 24>}, {transform_indices = @transform_17, window_bounds = array<i64: 2, 8, 10>}, {transform_indices = @transform_18, window_bounds = array<i64: 2, 8, 10>}, {transform_indices = @transform_19, window_bounds = array<i64: 2, 8, 1>}, {transform_indices = @transform_20, window_bounds = array<i64: 2, 8, 1>}, {pipeline_mode = #tpu.pipeline_mode<synchronous>, transform_indices = @transform_21, window_bounds = array<i64: 1, 128>}]} {
    %c0_i32 = arith.constant 0 : i32
    %0 = arith.cmpi eq, %arg0, %c0_i32 : i32
    %1 = arith.extui %0 : i1 to i32
    %c0_i32_0 = arith.constant 0 : i32
    %2 = arith.cmpi ne, %1, %c0_i32_0 : i32
    scf.if %2 {
      %cst_108 = arith.constant 0.000000e+00 : f32
      %374 = vector.broadcast %cst_108 : f32 to vector<1x128xf32>
      %c0_109 = arith.constant 0 : index
      %c0_110 = arith.constant 0 : index
      %375 = vector.load %arg22[%c0_109, %c0_110] : memref<1x128xf32, #tpu.memory_space<vmem>>, vector<1x128xf32>
      tpu.vector_store %arg22[%c0_109, %c0_110], %374 {strides = array<i32>} : memref<1x128xf32, #tpu.memory_space<vmem>>, vector<1x128xf32>,
    } else {
    }
    %c0 = arith.constant 0 : index
    %c0_1 = arith.constant 0 : index
    %c0_2 = arith.constant 0 : index
    %3 = vector.load %arg1[%c0, %c0_1, %c0_2] : memref<2x8x49xf32, #tpu.memory_space<vmem>>, vector<2x8x49xf32>
    %c0_3 = arith.constant 0 : index
    %c0_4 = arith.constant 0 : index
    %c0_5 = arith.constant 0 : index
    %4 = vector.load %arg3[%c0_3, %c0_4, %c0_5] : memref<2x8x49xf32, #tpu.memory_space<vmem>>, vector<2x8x49xf32>
    %5 = arith.subf %3, %4 : vector<2x8x49xf32>
    %c0_6 = arith.constant 0 : index
    %c0_7 = arith.constant 0 : index
    %c0_8 = arith.constant 0 : index
    %6 = vector.load %arg2[%c0_6, %c0_7, %c0_8] : memref<2x8x49xf32, #tpu.memory_space<vmem>>, vector<2x8x49xf32>
    %c0_9 = arith.constant 0 : index
    %c0_10 = arith.constant 0 : index
    %c0_11 = arith.constant 0 : index
    %7 = vector.load %arg4[%c0_9, %c0_10, %c0_11] : memref<2x8x49xf32, #tpu.memory_space<vmem>>, vector<2x8x49xf32>
    %8 = arith.subf %6, %7 : vector<2x8x49xf32>
    %c0_12 = arith.constant 0 : index
    %c0_13 = arith.constant 0 : index
    %c0_14 = arith.constant 0 : index
    %9 = vector.load %arg5[%c0_12, %c0_13, %c0_14] : memref<2x8x49xf32, #tpu.memory_space<vmem>>, vector<2x8x49xf32>
    %10 = arith.mulf %5, %5 : vector<2x8x49xf32>
    %11 = arith.mulf %8, %8 : vector<2x8x49xf32>
    %12 = arith.addf %10, %11 : vector<2x8x49xf32>
    %13 = arith.mulf %9, %12 : vector<2x8x49xf32>
    %14 = vector.shape_cast %13 : vector<2x8x49xf32> to vector<1x2x8x49xf32>
    %cst = arith.constant dense<0.000000e+00> : vector<1xf32>
    %15 = vector.multi_reduction <add>, %14, %cst [1, 2, 3] : vector<1x2x8x49xf32> to vector<1xf32>
    %16 = vector.shape_cast %15 : vector<1xf32> to vector<1x1x1x1xf32>
    %17 = vector.extract %16[0, 0, 0, 0] : f32 from vector<1x1x1x1xf32>
    %18 = vector.extract_strided_slice %5 {offsets = [0, 2, 0], sizes = [2, 6, 49], strides = [1, 1, 1]} : vector<2x8x49xf32> to vector<2x6x49xf32>
    %19 = vector.extract_strided_slice %5 {offsets = [0, 1, 0], sizes = [2, 6, 49], strides = [1, 1, 1]} : vector<2x8x49xf32> to vector<2x6x49xf32>
    %cst_15 = arith.constant 2.000000e+00 : f32
    %20 = vector.broadcast %cst_15 : f32 to vector<2x6x49xf32>
    %21 = arith.mulf %20, %19 : vector<2x6x49xf32>
    %22 = arith.subf %18, %21 : vector<2x6x49xf32>
    %23 = vector.extract_strided_slice %5 {offsets = [0, 0, 0], sizes = [2, 6, 49], strides = [1, 1, 1]} : vector<2x8x49xf32> to vector<2x6x49xf32>
    %24 = arith.addf %22, %23 : vector<2x6x49xf32>
    %25 = vector.extract_strided_slice %8 {offsets = [0, 2, 0], sizes = [2, 6, 49], strides = [1, 1, 1]} : vector<2x8x49xf32> to vector<2x6x49xf32>
    %26 = vector.extract_strided_slice %8 {offsets = [0, 1, 0], sizes = [2, 6, 49], strides = [1, 1, 1]} : vector<2x8x49xf32> to vector<2x6x49xf32>
    %cst_16 = arith.constant 2.000000e+00 : f32
    %27 = vector.broadcast %cst_16 : f32 to vector<2x6x49xf32>
    %28 = arith.mulf %27, %26 : vector<2x6x49xf32>
    %29 = arith.subf %25, %28 : vector<2x6x49xf32>
    %30 = vector.extract_strided_slice %8 {offsets = [0, 0, 0], sizes = [2, 6, 49], strides = [1, 1, 1]} : vector<2x8x49xf32> to vector<2x6x49xf32>
    %31 = arith.addf %29, %30 : vector<2x6x49xf32>
    %32 = vector.extract_strided_slice %9 {offsets = [0, 1, 0], sizes = [2, 6, 49], strides = [1, 1, 1]} : vector<2x8x49xf32> to vector<2x6x49xf32>
    %33 = arith.mulf %24, %24 : vector<2x6x49xf32>
    %34 = arith.mulf %31, %31 : vector<2x6x49xf32>
    %35 = arith.addf %33, %34 : vector<2x6x49xf32>
    %36 = arith.mulf %32, %35 : vector<2x6x49xf32>
    %37 = vector.shape_cast %36 : vector<2x6x49xf32> to vector<1x2x6x49xf32>
    %cst_17 = arith.constant dense<0.000000e+00> : vector<1xf32>
    %38 = vector.multi_reduction <add>, %37, %cst_17 [1, 2, 3] : vector<1x2x6x49xf32> to vector<1xf32>
    %39 = vector.shape_cast %38 : vector<1xf32> to vector<1x1x1x1xf32>
    %40 = vector.extract %39[0, 0, 0, 0] : f32 from vector<1x1x1x1xf32>
    %c0_18 = arith.constant 0 : index
    %c0_19 = arith.constant 0 : index
    %c0_20 = arith.constant 0 : index
    %41 = vector.load %arg20[%c0_18, %c0_19, %c0_20] : memref<2x8x1xf32, #tpu.memory_space<vmem>>, vector<2x8x1xf32>
    %c0_21 = arith.constant 0 : index
    %c0_22 = arith.constant 0 : index
    %c0_23 = arith.constant 0 : index
    %42 = vector.load %arg6[%c0_21, %c0_22, %c0_23] : memref<2x8x14xf32, #tpu.memory_space<vmem>>, vector<2x8x14xf32>
    %c0_24 = arith.constant 0 : index
    %c0_25 = arith.constant 0 : index
    %c0_26 = arith.constant 0 : index
    %43 = vector.load %arg9[%c0_24, %c0_25, %c0_26] : memref<2x8x14xf32, #tpu.memory_space<vmem>>, vector<2x8x14xf32>
    %44 = arith.subf %42, %43 : vector<2x8x14xf32>
    %c0_27 = arith.constant 0 : index
    %c0_28 = arith.constant 0 : index
    %c0_29 = arith.constant 0 : index
    %45 = vector.load %arg7[%c0_27, %c0_28, %c0_29] : memref<2x8x14xf32, #tpu.memory_space<vmem>>, vector<2x8x14xf32>
    %c0_30 = arith.constant 0 : index
    %c0_31 = arith.constant 0 : index
    %c0_32 = arith.constant 0 : index
    %46 = vector.load %arg10[%c0_30, %c0_31, %c0_32] : memref<2x8x14xf32, #tpu.memory_space<vmem>>, vector<2x8x14xf32>
    %47 = arith.subf %45, %46 : vector<2x8x14xf32>
    %c0_33 = arith.constant 0 : index
    %c0_34 = arith.constant 0 : index
    %c0_35 = arith.constant 0 : index
    %48 = vector.load %arg8[%c0_33, %c0_34, %c0_35] : memref<2x8x14xf32, #tpu.memory_space<vmem>>, vector<2x8x14xf32>
    %c0_36 = arith.constant 0 : index
    %c0_37 = arith.constant 0 : index
    %c0_38 = arith.constant 0 : index
    %49 = vector.load %arg11[%c0_36, %c0_37, %c0_38] : memref<2x8x14xf32, #tpu.memory_space<vmem>>, vector<2x8x14xf32>
    %50 = arith.subf %48, %49 : vector<2x8x14xf32>
    %51 = vector.extract_strided_slice %44 {offsets = [0, 0, 2], sizes = [2, 8, 1], strides = [1, 1, 1]} : vector<2x8x14xf32> to vector<2x8x1xf32>
    %52 = vector.extract_strided_slice %44 {offsets = [0, 0, 3], sizes = [2, 8, 1], strides = [1, 1, 1]} : vector<2x8x14xf32> to vector<2x8x1xf32>
    %53 = arith.addf %51, %52 : vector<2x8x1xf32>
    %cst_39 = arith.constant 5.000000e-01 : f32
    %54 = vector.broadcast %cst_39 : f32 to vector<2x8x1xf32>
    %55 = arith.mulf %53, %54 : vector<2x8x1xf32>
    %56 = vector.extract_strided_slice %47 {offsets = [0, 0, 2], sizes = [2, 8, 1], strides = [1, 1, 1]} : vector<2x8x14xf32> to vector<2x8x1xf32>
    %57 = vector.extract_strided_slice %47 {offsets = [0, 0, 3], sizes = [2, 8, 1], strides = [1, 1, 1]} : vector<2x8x14xf32> to vector<2x8x1xf32>
    %58 = arith.addf %56, %57 : vector<2x8x1xf32>
    %cst_40 = arith.constant 5.000000e-01 : f32
    %59 = vector.broadcast %cst_40 : f32 to vector<2x8x1xf32>
    %60 = arith.mulf %58, %59 : vector<2x8x1xf32>
    %61 = vector.extract_strided_slice %50 {offsets = [0, 0, 2], sizes = [2, 8, 1], strides = [1, 1, 1]} : vector<2x8x14xf32> to vector<2x8x1xf32>
    %62 = vector.extract_strided_slice %50 {offsets = [0, 0, 3], sizes = [2, 8, 1], strides = [1, 1, 1]} : vector<2x8x14xf32> to vector<2x8x1xf32>
    %63 = arith.addf %61, %62 : vector<2x8x1xf32>
    %cst_41 = arith.constant 5.000000e-01 : f32
    %64 = vector.broadcast %cst_41 : f32 to vector<2x8x1xf32>
    %65 = arith.mulf %63, %64 : vector<2x8x1xf32>
    %66 = vector.broadcast %55 : vector<2x8x1xf32> to vector<2x8x14xf32>
    %67 = arith.subf %44, %66 : vector<2x8x14xf32>
    %68 = vector.broadcast %60 : vector<2x8x1xf32> to vector<2x8x14xf32>
    %69 = arith.subf %47, %68 : vector<2x8x14xf32>
    %70 = vector.broadcast %65 : vector<2x8x1xf32> to vector<2x8x14xf32>
    %71 = arith.subf %50, %70 : vector<2x8x14xf32>
    %72 = arith.mulf %67, %67 : vector<2x8x14xf32>
    %73 = arith.mulf %69, %69 : vector<2x8x14xf32>
    %74 = arith.addf %72, %73 : vector<2x8x14xf32>
    %75 = arith.mulf %71, %71 : vector<2x8x14xf32>
    %76 = arith.addf %74, %75 : vector<2x8x14xf32>
    %77 = vector.broadcast %41 : vector<2x8x1xf32> to vector<2x8x14xf32>
    %78 = arith.mulf %77, %76 : vector<2x8x14xf32>
    %79 = vector.shape_cast %78 : vector<2x8x14xf32> to vector<1x2x8x14xf32>
    %cst_42 = arith.constant dense<0.000000e+00> : vector<1xf32>
    %80 = vector.multi_reduction <add>, %79, %cst_42 [1, 2, 3] : vector<1x2x8x14xf32> to vector<1xf32>
    %81 = vector.shape_cast %80 : vector<1xf32> to vector<1x1x1x1xf32>
    %82 = vector.extract %81[0, 0, 0, 0] : f32 from vector<1x1x1x1xf32>
    %83 = vector.extract_strided_slice %44 {offsets = [0, 2, 0], sizes = [2, 6, 14], strides = [1, 1, 1]} : vector<2x8x14xf32> to vector<2x6x14xf32>
    %84 = vector.extract_strided_slice %44 {offsets = [0, 1, 0], sizes = [2, 6, 14], strides = [1, 1, 1]} : vector<2x8x14xf32> to vector<2x6x14xf32>
    %cst_43 = arith.constant 2.000000e+00 : f32
    %85 = vector.broadcast %cst_43 : f32 to vector<2x6x14xf32>
    %86 = arith.mulf %85, %84 : vector<2x6x14xf32>
    %87 = arith.subf %83, %86 : vector<2x6x14xf32>
    %88 = vector.extract_strided_slice %44 {offsets = [0, 0, 0], sizes = [2, 6, 14], strides = [1, 1, 1]} : vector<2x8x14xf32> to vector<2x6x14xf32>
    %89 = arith.addf %87, %88 : vector<2x6x14xf32>
    %90 = vector.extract_strided_slice %47 {offsets = [0, 2, 0], sizes = [2, 6, 14], strides = [1, 1, 1]} : vector<2x8x14xf32> to vector<2x6x14xf32>
    %91 = vector.extract_strided_slice %47 {offsets = [0, 1, 0], sizes = [2, 6, 14], strides = [1, 1, 1]} : vector<2x8x14xf32> to vector<2x6x14xf32>
    %cst_44 = arith.constant 2.000000e+00 : f32
    %92 = vector.broadcast %cst_44 : f32 to vector<2x6x14xf32>
    %93 = arith.mulf %92, %91 : vector<2x6x14xf32>
    %94 = arith.subf %90, %93 : vector<2x6x14xf32>
    %95 = vector.extract_strided_slice %47 {offsets = [0, 0, 0], sizes = [2, 6, 14], strides = [1, 1, 1]} : vector<2x8x14xf32> to vector<2x6x14xf32>
    %96 = arith.addf %94, %95 : vector<2x6x14xf32>
    %97 = vector.extract_strided_slice %50 {offsets = [0, 2, 0], sizes = [2, 6, 14], strides = [1, 1, 1]} : vector<2x8x14xf32> to vector<2x6x14xf32>
    %98 = vector.extract_strided_slice %50 {offsets = [0, 1, 0], sizes = [2, 6, 14], strides = [1, 1, 1]} : vector<2x8x14xf32> to vector<2x6x14xf32>
    %cst_45 = arith.constant 2.000000e+00 : f32
    %99 = vector.broadcast %cst_45 : f32 to vector<2x6x14xf32>
    %100 = arith.mulf %99, %98 : vector<2x6x14xf32>
    %101 = arith.subf %97, %100 : vector<2x6x14xf32>
    %102 = vector.extract_strided_slice %50 {offsets = [0, 0, 0], sizes = [2, 6, 14], strides = [1, 1, 1]} : vector<2x8x14xf32> to vector<2x6x14xf32>
    %103 = arith.addf %101, %102 : vector<2x6x14xf32>
    %104 = vector.extract_strided_slice %41 {offsets = [0, 1, 0], sizes = [2, 6, 1], strides = [1, 1, 1]} : vector<2x8x1xf32> to vector<2x6x1xf32>
    %105 = arith.mulf %89, %89 : vector<2x6x14xf32>
    %106 = arith.mulf %96, %96 : vector<2x6x14xf32>
    %107 = arith.addf %105, %106 : vector<2x6x14xf32>
    %108 = arith.mulf %103, %103 : vector<2x6x14xf32>
    %109 = arith.addf %107, %108 : vector<2x6x14xf32>
    %110 = vector.broadcast %104 : vector<2x6x1xf32> to vector<2x6x14xf32>
    %111 = arith.mulf %110, %109 : vector<2x6x14xf32>
    %112 = vector.shape_cast %111 : vector<2x6x14xf32> to vector<1x2x6x14xf32>
    %cst_46 = arith.constant dense<0.000000e+00> : vector<1xf32>
    %113 = vector.multi_reduction <add>, %112, %cst_46 [1, 2, 3] : vector<1x2x6x14xf32> to vector<1xf32>
    %114 = vector.shape_cast %113 : vector<1xf32> to vector<1x1x1x1xf32>
    %115 = vector.extract %114[0, 0, 0, 0] : f32 from vector<1x1x1x1xf32>
    %c0_47 = arith.constant 0 : index
    %c0_48 = arith.constant 0 : index
    %c0_49 = arith.constant 0 : index
    %116 = vector.load %arg21[%c0_47, %c0_48, %c0_49] : memref<2x8x1xf32, #tpu.memory_space<vmem>>, vector<2x8x1xf32>
    %c0_50 = arith.constant 0 : index
    %c0_51 = arith.constant 0 : index
    %c0_52 = arith.constant 0 : index
    %117 = vector.load %arg12[%c0_50, %c0_51, %c0_52] : memref<2x8x24xf32, #tpu.memory_space<vmem>>, vector<2x8x24xf32>
    %c0_53 = arith.constant 0 : index
    %c0_54 = arith.constant 0 : index
    %c0_55 = arith.constant 0 : index
    %118 = vector.load %arg13[%c0_53, %c0_54, %c0_55] : memref<2x8x24xf32, #tpu.memory_space<vmem>>, vector<2x8x24xf32>
    %c0_56 = arith.constant 0 : index
    %c0_57 = arith.constant 0 : index
    %c0_58 = arith.constant 0 : index
    %119 = vector.load %arg14[%c0_56, %c0_57, %c0_58] : memref<2x8x24xf32, #tpu.memory_space<vmem>>, vector<2x8x24xf32>
    %cst_59 = arith.constant 9.99999993E-9 : f32
    %120 = vector.broadcast %cst_59 : f32 to vector<2x8x24xf32>
    %121 = arith.addf %117, %120 : vector<2x8x24xf32>
    %cst_60 = arith.constant 9.99999993E-9 : f32
    %122 = vector.broadcast %cst_60 : f32 to vector<2x8x24xf32>
    %123 = arith.addf %118, %122 : vector<2x8x24xf32>
    %cst_61 = arith.constant 9.99999993E-9 : f32
    %124 = vector.broadcast %cst_61 : f32 to vector<2x8x24xf32>
    %125 = arith.addf %119, %124 : vector<2x8x24xf32>
    %126 = arith.mulf %121, %121 : vector<2x8x24xf32>
    %127 = arith.mulf %123, %123 : vector<2x8x24xf32>
    %128 = arith.addf %126, %127 : vector<2x8x24xf32>
    %129 = arith.mulf %125, %125 : vector<2x8x24xf32>
    %130 = arith.addf %128, %129 : vector<2x8x24xf32>
    %131 = math.rsqrt %130 : vector<2x8x24xf32>
    %cst_62 = arith.constant 5.000000e-01 : f32
    %132 = vector.broadcast %cst_62 : f32 to vector<2x8x24xf32>
    %133 = arith.mulf %132, %130 : vector<2x8x24xf32>
    %134 = arith.mulf %133, %131 : vector<2x8x24xf32>
    %135 = math.cos %134 : vector<2x8x24xf32>
    %136 = math.sin %134 : vector<2x8x24xf32>
    %137 = arith.mulf %136, %131 : vector<2x8x24xf32>
    %138 = arith.mulf %137, %117 : vector<2x8x24xf32>
    %139 = arith.mulf %137, %118 : vector<2x8x24xf32>
    %140 = arith.mulf %137, %119 : vector<2x8x24xf32>
    %141 = arith.mulf %135, %135 : vector<2x8x24xf32>
    %142 = arith.mulf %138, %138 : vector<2x8x24xf32>
    %143 = arith.addf %141, %142 : vector<2x8x24xf32>
    %144 = arith.mulf %139, %139 : vector<2x8x24xf32>
    %145 = arith.addf %143, %144 : vector<2x8x24xf32>
    %146 = arith.mulf %140, %140 : vector<2x8x24xf32>
    %147 = arith.addf %145, %146 : vector<2x8x24xf32>
    %148 = math.rsqrt %147 : vector<2x8x24xf32>
    %149 = arith.mulf %135, %148 : vector<2x8x24xf32>
    %150 = arith.mulf %138, %148 : vector<2x8x24xf32>
    %151 = arith.mulf %139, %148 : vector<2x8x24xf32>
    %152 = arith.mulf %140, %148 : vector<2x8x24xf32>
    %c0_63 = arith.constant 0 : index
    %c0_64 = arith.constant 0 : index
    %c0_65 = arith.constant 0 : index
    %153 = vector.load %arg15[%c0_63, %c0_64, %c0_65] : memref<2x8x24xf32, #tpu.memory_space<vmem>>, vector<2x8x24xf32>
    %c0_66 = arith.constant 0 : index
    %c0_67 = arith.constant 0 : index
    %c0_68 = arith.constant 0 : index
    %154 = vector.load %arg16[%c0_66, %c0_67, %c0_68] : memref<2x8x24xf32, #tpu.memory_space<vmem>>, vector<2x8x24xf32>
    %c0_69 = arith.constant 0 : index
    %c0_70 = arith.constant 0 : index
    %c0_71 = arith.constant 0 : index
    %155 = vector.load %arg17[%c0_69, %c0_70, %c0_71] : memref<2x8x24xf32, #tpu.memory_space<vmem>>, vector<2x8x24xf32>
    %cst_72 = arith.constant 9.99999993E-9 : f32
    %156 = vector.broadcast %cst_72 : f32 to vector<2x8x24xf32>
    %157 = arith.addf %153, %156 : vector<2x8x24xf32>
    %cst_73 = arith.constant 9.99999993E-9 : f32
    %158 = vector.broadcast %cst_73 : f32 to vector<2x8x24xf32>
    %159 = arith.addf %154, %158 : vector<2x8x24xf32>
    %cst_74 = arith.constant 9.99999993E-9 : f32
    %160 = vector.broadcast %cst_74 : f32 to vector<2x8x24xf32>
    %161 = arith.addf %155, %160 : vector<2x8x24xf32>
    %162 = arith.mulf %157, %157 : vector<2x8x24xf32>
    %163 = arith.mulf %159, %159 : vector<2x8x24xf32>
    %164 = arith.addf %162, %163 : vector<2x8x24xf32>
    %165 = arith.mulf %161, %161 : vector<2x8x24xf32>
    %166 = arith.addf %164, %165 : vector<2x8x24xf32>
    %167 = math.rsqrt %166 : vector<2x8x24xf32>
    %cst_75 = arith.constant 5.000000e-01 : f32
    %168 = vector.broadcast %cst_75 : f32 to vector<2x8x24xf32>
    %169 = arith.mulf %168, %166 : vector<2x8x24xf32>
    %170 = arith.mulf %169, %167 : vector<2x8x24xf32>
    %171 = math.cos %170 : vector<2x8x24xf32>
    %172 = math.sin %170 : vector<2x8x24xf32>
    %173 = arith.mulf %172, %167 : vector<2x8x24xf32>
    %174 = arith.mulf %173, %153 : vector<2x8x24xf32>
    %175 = arith.mulf %173, %154 : vector<2x8x24xf32>
    %176 = arith.mulf %173, %155 : vector<2x8x24xf32>
    %177 = arith.mulf %171, %171 : vector<2x8x24xf32>
    %178 = arith.mulf %174, %174 : vector<2x8x24xf32>
    %179 = arith.addf %177, %178 : vector<2x8x24xf32>
    %180 = arith.mulf %175, %175 : vector<2x8x24xf32>
    %181 = arith.addf %179, %180 : vector<2x8x24xf32>
    %182 = arith.mulf %176, %176 : vector<2x8x24xf32>
    %183 = arith.addf %181, %182 : vector<2x8x24xf32>
    %184 = math.rsqrt %183 : vector<2x8x24xf32>
    %185 = arith.mulf %171, %184 : vector<2x8x24xf32>
    %186 = arith.mulf %174, %184 : vector<2x8x24xf32>
    %187 = arith.mulf %175, %184 : vector<2x8x24xf32>
    %188 = arith.mulf %176, %184 : vector<2x8x24xf32>
    %cst_76 = arith.constant 0.000000e+00 : f32
    %189 = vector.broadcast %cst_76 : f32 to vector<2x8x24xf32>
    %190 = arith.mulf %149, %149 : vector<2x8x24xf32>
    %191 = arith.mulf %150, %150 : vector<2x8x24xf32>
    %192 = arith.addf %190, %191 : vector<2x8x24xf32>
    %193 = arith.mulf %151, %151 : vector<2x8x24xf32>
    %194 = arith.subf %192, %193 : vector<2x8x24xf32>
    %195 = arith.mulf %152, %152 : vector<2x8x24xf32>
    %196 = arith.subf %194, %195 : vector<2x8x24xf32>
    %197 = arith.mulf %185, %185 : vector<2x8x24xf32>
    %198 = arith.mulf %186, %186 : vector<2x8x24xf32>
    %199 = arith.addf %197, %198 : vector<2x8x24xf32>
    %200 = arith.mulf %187, %187 : vector<2x8x24xf32>
    %201 = arith.subf %199, %200 : vector<2x8x24xf32>
    %202 = arith.mulf %188, %188 : vector<2x8x24xf32>
    %203 = arith.subf %201, %202 : vector<2x8x24xf32>
    %204 = arith.subf %196, %203 : vector<2x8x24xf32>
    %205 = arith.mulf %204, %204 : vector<2x8x24xf32>
    %206 = arith.addf %189, %205 : vector<2x8x24xf32>
    %207 = arith.mulf %150, %151 : vector<2x8x24xf32>
    %208 = arith.mulf %149, %152 : vector<2x8x24xf32>
    %209 = arith.subf %207, %208 : vector<2x8x24xf32>
    %cst_77 = arith.constant 2.000000e+00 : f32
    %210 = vector.broadcast %cst_77 : f32 to vector<2x8x24xf32>
    %211 = arith.mulf %210, %209 : vector<2x8x24xf32>
    %212 = arith.mulf %186, %187 : vector<2x8x24xf32>
    %213 = arith.mulf %185, %188 : vector<2x8x24xf32>
    %214 = arith.subf %212, %213 : vector<2x8x24xf32>
    %cst_78 = arith.constant 2.000000e+00 : f32
    %215 = vector.broadcast %cst_78 : f32 to vector<2x8x24xf32>
    %216 = arith.mulf %215, %214 : vector<2x8x24xf32>
    %217 = arith.subf %211, %216 : vector<2x8x24xf32>
    %218 = arith.mulf %217, %217 : vector<2x8x24xf32>
    %219 = arith.addf %206, %218 : vector<2x8x24xf32>
    %220 = arith.mulf %149, %151 : vector<2x8x24xf32>
    %221 = arith.mulf %150, %152 : vector<2x8x24xf32>
    %222 = arith.addf %220, %221 : vector<2x8x24xf32>
    %cst_79 = arith.constant 2.000000e+00 : f32
    %223 = vector.broadcast %cst_79 : f32 to vector<2x8x24xf32>
    %224 = arith.mulf %223, %222 : vector<2x8x24xf32>
    %225 = arith.mulf %185, %187 : vector<2x8x24xf32>
    %226 = arith.mulf %186, %188 : vector<2x8x24xf32>
    %227 = arith.addf %225, %226 : vector<2x8x24xf32>
    %cst_80 = arith.constant 2.000000e+00 : f32
    %228 = vector.broadcast %cst_80 : f32 to vector<2x8x24xf32>
    %229 = arith.mulf %228, %227 : vector<2x8x24xf32>
    %230 = arith.subf %224, %229 : vector<2x8x24xf32>
    %231 = arith.mulf %230, %230 : vector<2x8x24xf32>
    %232 = arith.addf %219, %231 : vector<2x8x24xf32>
    %233 = arith.mulf %149, %152 : vector<2x8x24xf32>
    %234 = arith.mulf %150, %151 : vector<2x8x24xf32>
    %235 = arith.addf %233, %234 : vector<2x8x24xf32>
    %cst_81 = arith.constant 2.000000e+00 : f32
    %236 = vector.broadcast %cst_81 : f32 to vector<2x8x24xf32>
    %237 = arith.mulf %236, %235 : vector<2x8x24xf32>
    %238 = arith.mulf %185, %188 : vector<2x8x24xf32>
    %239 = arith.mulf %186, %187 : vector<2x8x24xf32>
    %240 = arith.addf %238, %239 : vector<2x8x24xf32>
    %cst_82 = arith.constant 2.000000e+00 : f32
    %241 = vector.broadcast %cst_82 : f32 to vector<2x8x24xf32>
    %242 = arith.mulf %241, %240 : vector<2x8x24xf32>
    %243 = arith.subf %237, %242 : vector<2x8x24xf32>
    %244 = arith.mulf %243, %243 : vector<2x8x24xf32>
    %245 = arith.addf %232, %244 : vector<2x8x24xf32>
    %246 = arith.mulf %149, %149 : vector<2x8x24xf32>
    %247 = arith.mulf %150, %150 : vector<2x8x24xf32>
    %248 = arith.subf %246, %247 : vector<2x8x24xf32>
    %249 = arith.mulf %151, %151 : vector<2x8x24xf32>
    %250 = arith.addf %248, %249 : vector<2x8x24xf32>
    %251 = arith.mulf %152, %152 : vector<2x8x24xf32>
    %252 = arith.subf %250, %251 : vector<2x8x24xf32>
    %253 = arith.mulf %185, %185 : vector<2x8x24xf32>
    %254 = arith.mulf %186, %186 : vector<2x8x24xf32>
    %255 = arith.subf %253, %254 : vector<2x8x24xf32>
    %256 = arith.mulf %187, %187 : vector<2x8x24xf32>
    %257 = arith.addf %255, %256 : vector<2x8x24xf32>
    %258 = arith.mulf %188, %188 : vector<2x8x24xf32>
    %259 = arith.subf %257, %258 : vector<2x8x24xf32>
    %260 = arith.subf %252, %259 : vector<2x8x24xf32>
    %261 = arith.mulf %260, %260 : vector<2x8x24xf32>
    %262 = arith.addf %245, %261 : vector<2x8x24xf32>
    %263 = arith.mulf %151, %152 : vector<2x8x24xf32>
    %264 = arith.mulf %149, %150 : vector<2x8x24xf32>
    %265 = arith.subf %263, %264 : vector<2x8x24xf32>
    %cst_83 = arith.constant 2.000000e+00 : f32
    %266 = vector.broadcast %cst_83 : f32 to vector<2x8x24xf32>
    %267 = arith.mulf %266, %265 : vector<2x8x24xf32>
    %268 = arith.mulf %187, %188 : vector<2x8x24xf32>
    %269 = arith.mulf %185, %186 : vector<2x8x24xf32>
    %270 = arith.subf %268, %269 : vector<2x8x24xf32>
    %cst_84 = arith.constant 2.000000e+00 : f32
    %271 = vector.broadcast %cst_84 : f32 to vector<2x8x24xf32>
    %272 = arith.mulf %271, %270 : vector<2x8x24xf32>
    %273 = arith.subf %267, %272 : vector<2x8x24xf32>
    %274 = arith.mulf %273, %273 : vector<2x8x24xf32>
    %275 = arith.addf %262, %274 : vector<2x8x24xf32>
    %276 = arith.mulf %150, %152 : vector<2x8x24xf32>
    %277 = arith.mulf %149, %151 : vector<2x8x24xf32>
    %278 = arith.subf %276, %277 : vector<2x8x24xf32>
    %cst_85 = arith.constant 2.000000e+00 : f32
    %279 = vector.broadcast %cst_85 : f32 to vector<2x8x24xf32>
    %280 = arith.mulf %279, %278 : vector<2x8x24xf32>
    %281 = arith.mulf %186, %188 : vector<2x8x24xf32>
    %282 = arith.mulf %185, %187 : vector<2x8x24xf32>
    %283 = arith.subf %281, %282 : vector<2x8x24xf32>
    %cst_86 = arith.constant 2.000000e+00 : f32
    %284 = vector.broadcast %cst_86 : f32 to vector<2x8x24xf32>
    %285 = arith.mulf %284, %283 : vector<2x8x24xf32>
    %286 = arith.subf %280, %285 : vector<2x8x24xf32>
    %287 = arith.mulf %286, %286 : vector<2x8x24xf32>
    %288 = arith.addf %275, %287 : vector<2x8x24xf32>
    %289 = arith.mulf %149, %150 : vector<2x8x24xf32>
    %290 = arith.mulf %151, %152 : vector<2x8x24xf32>
    %291 = arith.addf %289, %290 : vector<2x8x24xf32>
    %cst_87 = arith.constant 2.000000e+00 : f32
    %292 = vector.broadcast %cst_87 : f32 to vector<2x8x24xf32>
    %293 = arith.mulf %292, %291 : vector<2x8x24xf32>
    %294 = arith.mulf %185, %186 : vector<2x8x24xf32>
    %295 = arith.mulf %187, %188 : vector<2x8x24xf32>
    %296 = arith.addf %294, %295 : vector<2x8x24xf32>
    %cst_88 = arith.constant 2.000000e+00 : f32
    %297 = vector.broadcast %cst_88 : f32 to vector<2x8x24xf32>
    %298 = arith.mulf %297, %296 : vector<2x8x24xf32>
    %299 = arith.subf %293, %298 : vector<2x8x24xf32>
    %300 = arith.mulf %299, %299 : vector<2x8x24xf32>
    %301 = arith.addf %288, %300 : vector<2x8x24xf32>
    %302 = arith.mulf %149, %149 : vector<2x8x24xf32>
    %303 = arith.mulf %150, %150 : vector<2x8x24xf32>
    %304 = arith.subf %302, %303 : vector<2x8x24xf32>
    %305 = arith.mulf %151, %151 : vector<2x8x24xf32>
    %306 = arith.subf %304, %305 : vector<2x8x24xf32>
    %307 = arith.mulf %152, %152 : vector<2x8x24xf32>
    %308 = arith.addf %306, %307 : vector<2x8x24xf32>
    %309 = arith.mulf %185, %185 : vector<2x8x24xf32>
    %310 = arith.mulf %186, %186 : vector<2x8x24xf32>
    %311 = arith.subf %309, %310 : vector<2x8x24xf32>
    %312 = arith.mulf %187, %187 : vector<2x8x24xf32>
    %313 = arith.subf %311, %312 : vector<2x8x24xf32>
    %314 = arith.mulf %188, %188 : vector<2x8x24xf32>
    %315 = arith.addf %313, %314 : vector<2x8x24xf32>
    %316 = arith.subf %308, %315 : vector<2x8x24xf32>
    %317 = arith.mulf %316, %316 : vector<2x8x24xf32>
    %318 = arith.addf %301, %317 : vector<2x8x24xf32>
    %319 = vector.broadcast %116 : vector<2x8x1xf32> to vector<2x8x24xf32>
    %320 = arith.mulf %319, %318 : vector<2x8x24xf32>
    %321 = vector.shape_cast %320 : vector<2x8x24xf32> to vector<1x2x8x24xf32>
    %cst_89 = arith.constant dense<0.000000e+00> : vector<1xf32>
    %322 = vector.multi_reduction <add>, %321, %cst_89 [1, 2, 3] : vector<1x2x8x24xf32> to vector<1xf32>
    %323 = vector.shape_cast %322 : vector<1xf32> to vector<1x1x1x1xf32>
    %324 = vector.extract %323[0, 0, 0, 0] : f32 from vector<1x1x1x1xf32>
    %c0_90 = arith.constant 0 : index
    %c0_91 = arith.constant 0 : index
    %c0_92 = arith.constant 0 : index
    %325 = vector.load %arg18[%c0_90, %c0_91, %c0_92] : memref<2x8x10xf32, #tpu.memory_space<vmem>>, vector<2x8x10xf32>
    %c0_93 = arith.constant 0 : index
    %c0_94 = arith.constant 0 : index
    %c0_95 = arith.constant 0 : index
    %326 = vector.load %arg19[%c0_93, %c0_94, %c0_95] : memref<2x8x10xf32, #tpu.memory_space<vmem>>, vector<2x8x10xf32>
    %327 = arith.subf %325, %326 : vector<2x8x10xf32>
    %328 = vector.broadcast %116 : vector<2x8x1xf32> to vector<2x8x10xf32>
    %329 = arith.mulf %328, %327 : vector<2x8x10xf32>
    %330 = arith.mulf %329, %327 : vector<2x8x10xf32>
    %331 = vector.shape_cast %330 : vector<2x8x10xf32> to vector<1x2x8x10xf32>
    %cst_96 = arith.constant dense<0.000000e+00> : vector<1xf32>
    %332 = vector.multi_reduction <add>, %331, %cst_96 [1, 2, 3] : vector<1x2x8x10xf32> to vector<1xf32>
    %333 = vector.shape_cast %332 : vector<1xf32> to vector<1x1x1x1xf32>
    %334 = vector.extract %333[0, 0, 0, 0] : f32 from vector<1x1x1x1xf32>
    %335 = tpu.iota {dimensions = array<i32: 1>} : vector<1x128xi32>
    %c0_i32_97 = arith.constant 0 : i32
    %336 = vector.broadcast %c0_i32_97 : i32 to vector<1x128xi32>
    %337 = arith.cmpi eq, %335, %336 : vector<1x128xi32>
    %cst_98 = arith.constant 0.000000e+00 : f32
    %338 = vector.broadcast %17 : f32 to vector<1x128xf32>
    %339 = vector.broadcast %cst_98 : f32 to vector<1x128xf32>
    %340 = arith.select %337, %338, %339 : vector<1x128xi1>, vector<1x128xf32>
    %c1_i32 = arith.constant 1 : i32
    %341 = vector.broadcast %c1_i32 : i32 to vector<1x128xi32>
    %342 = arith.cmpi eq, %335, %341 : vector<1x128xi32>
    %cst_99 = arith.constant 0.000000e+00 : f32
    %343 = vector.broadcast %40 : f32 to vector<1x128xf32>
    %344 = vector.broadcast %cst_99 : f32 to vector<1x128xf32>
    %345 = arith.select %342, %343, %344 : vector<1x128xi1>, vector<1x128xf32>
    %346 = arith.addf %340, %345 : vector<1x128xf32>
    %c2_i32 = arith.constant 2 : i32
    %347 = vector.broadcast %c2_i32 : i32 to vector<1x128xi32>
    %348 = arith.cmpi eq, %335, %347 : vector<1x128xi32>
    %cst_100 = arith.constant 0.000000e+00 : f32
    %349 = vector.broadcast %82 : f32 to vector<1x128xf32>
    %350 = vector.broadcast %cst_100 : f32 to vector<1x128xf32>
    %351 = arith.select %348, %349, %350 : vector<1x128xi1>, vector<1x128xf32>
    %352 = arith.addf %346, %351 : vector<1x128xf32>
    %c3_i32 = arith.constant 3 : i32
    %353 = vector.broadcast %c3_i32 : i32 to vector<1x128xi32>
    %354 = arith.cmpi eq, %335, %353 : vector<1x128xi32>
    %cst_101 = arith.constant 0.000000e+00 : f32
    %355 = vector.broadcast %115 : f32 to vector<1x128xf32>
    %356 = vector.broadcast %cst_101 : f32 to vector<1x128xf32>
    %357 = arith.select %354, %355, %356 : vector<1x128xi1>, vector<1x128xf32>
    %358 = arith.addf %352, %357 : vector<1x128xf32>
    %c4_i32 = arith.constant 4 : i32
    %359 = vector.broadcast %c4_i32 : i32 to vector<1x128xi32>
    %360 = arith.cmpi eq, %335, %359 : vector<1x128xi32>
    %cst_102 = arith.constant 0.000000e+00 : f32
    %361 = vector.broadcast %324 : f32 to vector<1x128xf32>
    %362 = vector.broadcast %cst_102 : f32 to vector<1x128xf32>
    %363 = arith.select %360, %361, %362 : vector<1x128xi1>, vector<1x128xf32>
    %364 = arith.addf %358, %363 : vector<1x128xf32>
    %c5_i32 = arith.constant 5 : i32
    %365 = vector.broadcast %c5_i32 : i32 to vector<1x128xi32>
    %366 = arith.cmpi eq, %335, %365 : vector<1x128xi32>
    %cst_103 = arith.constant 0.000000e+00 : f32
    %367 = vector.broadcast %334 : f32 to vector<1x128xf32>
    %368 = vector.broadcast %cst_103 : f32 to vector<1x128xf32>
    %369 = arith.select %366, %367, %368 : vector<1x128xi1>, vector<1x128xf32>
    %370 = arith.addf %364, %369 : vector<1x128xf32>
    %c0_104 = arith.constant 0 : index
    %c0_105 = arith.constant 0 : index
    %371 = vector.load %arg22[%c0_104, %c0_105] : memref<1x128xf32, #tpu.memory_space<vmem>>, vector<1x128xf32>
    %372 = arith.addf %371, %370 : vector<1x128xf32>
    %c0_106 = arith.constant 0 : index
    %c0_107 = arith.constant 0 : index
    %373 = vector.load %arg22[%c0_106, %c0_107] : memref<1x128xf32, #tpu.memory_space<vmem>>, vector<1x128xf32>
    tpu.vector_store %arg22[%c0_106, %c0_107], %372 {strides = array<i32>} : memref<1x128xf32, #tpu.memory_space<vmem>>, vector<1x128xf32>,
    return
  }
  func.func @transform_0(%arg0: i32) -> (i32, i32, i32) {
    %c0_i32 = arith.constant 0 : i32
    %c0_i32_0 = arith.constant 0 : i32
    %c0_i32_1 = arith.constant 0 : i32
    return %arg0, %c0_i32, %c0_i32_0 : i32, i32, i32
  }
  func.func @transform_1(%arg0: i32) -> (i32, i32, i32) {
    %c0_i32 = arith.constant 0 : i32
    %c0_i32_0 = arith.constant 0 : i32
    %c0_i32_1 = arith.constant 0 : i32
    return %arg0, %c0_i32, %c0_i32_0 : i32, i32, i32
  }
  func.func @transform_2(%arg0: i32) -> (i32, i32, i32) {
    %c0_i32 = arith.constant 0 : i32
    %c0_i32_0 = arith.constant 0 : i32
    %c0_i32_1 = arith.constant 0 : i32
    return %arg0, %c0_i32, %c0_i32_0 : i32, i32, i32
  }
  func.func @transform_3(%arg0: i32) -> (i32, i32, i32) {
    %c0_i32 = arith.constant 0 : i32
    %c0_i32_0 = arith.constant 0 : i32
    %c0_i32_1 = arith.constant 0 : i32
    return %arg0, %c0_i32, %c0_i32_0 : i32, i32, i32
  }
  func.func @transform_4(%arg0: i32) -> (i32, i32, i32) {
    %c0_i32 = arith.constant 0 : i32
    %c0_i32_0 = arith.constant 0 : i32
    %c0_i32_1 = arith.constant 0 : i32
    return %arg0, %c0_i32, %c0_i32_0 : i32, i32, i32
  }
  func.func @transform_5(%arg0: i32) -> (i32, i32, i32) {
    %c0_i32 = arith.constant 0 : i32
    %c0_i32_0 = arith.constant 0 : i32
    %c0_i32_1 = arith.constant 0 : i32
    return %arg0, %c0_i32, %c0_i32_0 : i32, i32, i32
  }
  func.func @transform_6(%arg0: i32) -> (i32, i32, i32) {
    %c0_i32 = arith.constant 0 : i32
    %c0_i32_0 = arith.constant 0 : i32
    %c0_i32_1 = arith.constant 0 : i32
    return %arg0, %c0_i32, %c0_i32_0 : i32, i32, i32
  }
  func.func @transform_7(%arg0: i32) -> (i32, i32, i32) {
    %c0_i32 = arith.constant 0 : i32
    %c0_i32_0 = arith.constant 0 : i32
    %c0_i32_1 = arith.constant 0 : i32
    return %arg0, %c0_i32, %c0_i32_0 : i32, i32, i32
  }
  func.func @transform_8(%arg0: i32) -> (i32, i32, i32) {
    %c0_i32 = arith.constant 0 : i32
    %c0_i32_0 = arith.constant 0 : i32
    %c0_i32_1 = arith.constant 0 : i32
    return %arg0, %c0_i32, %c0_i32_0 : i32, i32, i32
  }
  func.func @transform_9(%arg0: i32) -> (i32, i32, i32) {
    %c0_i32 = arith.constant 0 : i32
    %c0_i32_0 = arith.constant 0 : i32
    %c0_i32_1 = arith.constant 0 : i32
    return %arg0, %c0_i32, %c0_i32_0 : i32, i32, i32
  }
  func.func @transform_10(%arg0: i32) -> (i32, i32, i32) {
    %c0_i32 = arith.constant 0 : i32
    %c0_i32_0 = arith.constant 0 : i32
    %c0_i32_1 = arith.constant 0 : i32
    return %arg0, %c0_i32, %c0_i32_0 : i32, i32, i32
  }
  func.func @transform_11(%arg0: i32) -> (i32, i32, i32) {
    %c0_i32 = arith.constant 0 : i32
    %c0_i32_0 = arith.constant 0 : i32
    %c0_i32_1 = arith.constant 0 : i32
    return %arg0, %c0_i32, %c0_i32_0 : i32, i32, i32
  }
  func.func @transform_12(%arg0: i32) -> (i32, i32, i32) {
    %c0_i32 = arith.constant 0 : i32
    %c0_i32_0 = arith.constant 0 : i32
    %c0_i32_1 = arith.constant 0 : i32
    return %arg0, %c0_i32, %c0_i32_0 : i32, i32, i32
  }
  func.func @transform_13(%arg0: i32) -> (i32, i32, i32) {
    %c0_i32 = arith.constant 0 : i32
    %c0_i32_0 = arith.constant 0 : i32
    %c0_i32_1 = arith.constant 0 : i32
    return %arg0, %c0_i32, %c0_i32_0 : i32, i32, i32
  }
  func.func @transform_14(%arg0: i32) -> (i32, i32, i32) {
    %c0_i32 = arith.constant 0 : i32
    %c0_i32_0 = arith.constant 0 : i32
    %c0_i32_1 = arith.constant 0 : i32
    return %arg0, %c0_i32, %c0_i32_0 : i32, i32, i32
  }
  func.func @transform_15(%arg0: i32) -> (i32, i32, i32) {
    %c0_i32 = arith.constant 0 : i32
    %c0_i32_0 = arith.constant 0 : i32
    %c0_i32_1 = arith.constant 0 : i32
    return %arg0, %c0_i32, %c0_i32_0 : i32, i32, i32
  }
  func.func @transform_16(%arg0: i32) -> (i32, i32, i32) {
    %c0_i32 = arith.constant 0 : i32
    %c0_i32_0 = arith.constant 0 : i32
    %c0_i32_1 = arith.constant 0 : i32
    return %arg0, %c0_i32, %c0_i32_0 : i32, i32, i32
  }
  func.func @transform_17(%arg0: i32) -> (i32, i32, i32) {
    %c0_i32 = arith.constant 0 : i32
    %c0_i32_0 = arith.constant 0 : i32
    %c0_i32_1 = arith.constant 0 : i32
    return %arg0, %c0_i32, %c0_i32_0 : i32, i32, i32
  }
  func.func @transform_18(%arg0: i32) -> (i32, i32, i32) {
    %c0_i32 = arith.constant 0 : i32
    %c0_i32_0 = arith.constant 0 : i32
    %c0_i32_1 = arith.constant 0 : i32
    return %arg0, %c0_i32, %c0_i32_0 : i32, i32, i32
  }
  func.func @transform_19(%arg0: i32) -> (i32, i32, i32) {
    %c0_i32 = arith.constant 0 : i32
    %c0_i32_0 = arith.constant 0 : i32
    %c0_i32_1 = arith.constant 0 : i32
    return %arg0, %c0_i32, %c0_i32_0 : i32, i32, i32
  }
  func.func @transform_20(%arg0: i32) -> (i32, i32, i32) {
    %c0_i32 = arith.constant 0 : i32
    %c0_i32_0 = arith.constant 0 : i32
    %c0_i32_1 = arith.constant 0 : i32
    return %arg0, %c0_i32, %c0_i32_0 : i32, i32, i32
  }
  func.func @transform_21(%arg0: i32) -> (i32, i32) {
    %c0_i32 = arith.constant 0 : i32
    %c0_i32_0 = arith.constant 0 : i32
    %c0_i32_1 = arith.constant 0 : i32
    return %c0_i32, %c0_i32_0 : i32, i32
  }
}

</mosaic_0001>

<llo_original>
// kernel: tpu_custom_call.1
$region0: #{tpu_custom_call.1}
  #allocation0 [shape = 'u32[]', space=smem, size = 0x4, offset = 0x4, fixed_abs, tag = 'smem constant byte address 0x4 - core index']
  #allocation1 [shape = 'u32[72,128]{1,0:T(1,128)}', space=vmem, size = 0x9000, scoped, tag = 'internal scratch']
  %s0 = inlined_call_operand.vmem [shape: f32[2,8,49], index: 0, kind: input, shape index: {}]
  %s1 = inlined_call_operand.vmem [shape: f32[2,8,49], index: 1, kind: input, shape index: {}]
  %s2 = inlined_call_operand.hbm [shape: f32[2,8,49], index: 2, kind: input, shape index: {}]
  %s3 = inlined_call_operand.hbm [shape: f32[2,8,49], index: 3, kind: input, shape index: {}]
  %s4 = inlined_call_operand.hbm [shape: f32[2,8,49], index: 4, kind: input, shape index: {}]
  %s5 = inlined_call_operand.hbm [shape: f32[2,8,14], index: 5, kind: input, shape index: {}]
  %s6 = inlined_call_operand.hbm [shape: f32[2,8,14], index: 6, kind: input, shape index: {}]
  %s7 = inlined_call_operand.hbm [shape: f32[2,8,14], index: 7, kind: input, shape index: {}]
  %s8 = inlined_call_operand.hbm [shape: f32[2,8,14], index: 8, kind: input, shape index: {}]
  %s9 = inlined_call_operand.hbm [shape: f32[2,8,14], index: 9, kind: input, shape index: {}]
  %s10 = inlined_call_operand.hbm [shape: f32[2,8,14], index: 10, kind: input, shape index: {}]
  %s11 = inlined_call_operand.hbm [shape: f32[2,8,24], index: 11, kind: input, shape index: {}]
  %s12 = inlined_call_operand.hbm [shape: f32[2,8,24], index: 12, kind: input, shape index: {}]
  %s13 = inlined_call_operand.hbm [shape: f32[2,8,24], index: 13, kind: input, shape index: {}]
  %s14 = inlined_call_operand.hbm [shape: f32[2,8,24], index: 14, kind: input, shape index: {}]
  %s15 = inlined_call_operand.hbm [shape: f32[2,8,24], index: 15, kind: input, shape index: {}]
  %s16 = inlined_call_operand.hbm [shape: f32[2,8,24], index: 16, kind: input, shape index: {}]
  %s17 = inlined_call_operand.hbm [shape: f32[2,8,10], index: 17, kind: input, shape index: {}]
  %s18 = inlined_call_operand.hbm [shape: f32[2,8,10], index: 18, kind: input, shape index: {}]
  %s19 = inlined_call_operand.vmem [shape: f32[2,8,1], index: 19, kind: input, shape index: {}]
  %s20 = inlined_call_operand.vmem [shape: f32[2,8,1], index: 20, kind: input, shape index: {}]
  %s21 = inlined_call_operand.hbm [shape: f32[1,128], index: 21, kind: output, shape index: {}]
  %s22 = sld [smem:[#allocation0]]
  $region166: #{tpu_custom_call.1} parent=0
    _
  %s24 = ssub.s32 1, %s22
  %s25 = scalar_select 0, %s24, %s22
  $region1: #{tpu_custom_call.1} parent=0
    #allocation2 [shape = 'u8[8192]{0}', space=vmem, size = 0x2000, scoped, tag = 'input window, operand 2, single buffered']
    #allocation3 [shape = 's32[1]{0}', space=sflag, size = 0x4, scoped, tag = 'scoped memory for tpu_custom_call.1']
    #allocation4 [shape = 's32[1]{0}', space=sflag, size = 0x4, scoped, tag = 'scoped memory for tpu_custom_call.1']
    #allocation5 [shape = 'u8[8192]{0}', space=vmem, size = 0x2000, scoped, tag = 'input window, operand 3, single buffered']
    #allocation6 [shape = 's32[1]{0}', space=sflag, size = 0x4, scoped, tag = 'scoped memory for tpu_custom_call.1']
    #allocation7 [shape = 'u8[8192]{0}', space=vmem, size = 0x2000, scoped, tag = 'input window, operand 4, single buffered']
    #allocation8 [shape = 'u8[8192]{0}', space=vmem, size = 0x2000, scoped, tag = 'input window, operand 5, single buffered']
    #allocation9 [shape = 's32[1]{0}', space=sflag, size = 0x4, scoped, tag = 'scoped memory for tpu_custom_call.1']
    #allocation10 [shape = 'u8[8192]{0}', space=vmem, size = 0x2000, scoped, tag = 'input window, operand 6, single buffered']
    #allocation11 [shape = 'u8[8192]{0}', space=vmem, size = 0x2000, scoped, tag = 'input window, operand 7, single buffered']
    #allocation12 [shape = 's32[1]{0}', space=sflag, size = 0x4, scoped, tag = 'scoped memory for tpu_custom_call.1']
    #allocation13 [shape = 'u8[8192]{0}', space=vmem, size = 0x2000, scoped, tag = 'input window, operand 8, single buffered']
    #allocation14 [shape = 'u8[8192]{0}', space=vmem, size = 0x2000, scoped, tag = 'input window, operand 9, single buffered']
    #allocation15 [shape = 's32[1]{0}', space=sflag, size = 0x4, scoped, tag = 'scoped memory for tpu_custom_call.1']
    #allocation16 [shape = 'u8[8192]{0}', space=vmem, size = 0x2000, scoped, tag = 'input window, operand 10, single buffered']
    #allocation17 [shape = 'u8[8192]{0}', space=vmem, size = 0x2000, scoped, tag = 'input window, operand 11, single buffered']
    #allocation18 [shape = 's32[1]{0}', space=sflag, size = 0x4, scoped, tag = 'scoped memory for tpu_custom_call.1']
    #allocation19 [shape = 'u8[8192]{0}', space=vmem, size = 0x2000, scoped, tag = 'input window, operand 12, single buffered']
    #allocation20 [shape = 'u8[8192]{0}', space=vmem, size = 0x2000, scoped, tag = 'input window, operand 13, single buffered']
    #allocation21 [shape = 's32[1]{0}', space=sflag, size = 0x4, scoped, tag = 'scoped memory for tpu_custom_call.1']
    #allocation22 [shape = 'u8[8192]{0}', space=vmem, size = 0x2000, scoped, tag = 'input window, operand 14, single buffered']
    #allocation23 [shape = 'u8[8192]{0}', space=vmem, size = 0x2000, scoped, tag = 'input window, operand 15, single buffered']
    #allocation24 [shape = 's32[1]{0}', space=sflag, size = 0x4, scoped, tag = 'scoped memory for tpu_custom_call.1']
    #allocation25 [shape = 'u8[8192]{0}', space=vmem, size = 0x2000, scoped, tag = 'input window, operand 16, single buffered']
    #allocation26 [shape = 'u8[8192]{0}', space=vmem, size = 0x2000, scoped, tag = 'input window, operand 17, single buffered']
    #allocation27 [shape = 's32[1]{0}', space=sflag, size = 0x4, scoped, tag = 'scoped memory for tpu_custom_call.1']
    #allocation28 [shape = 'u8[8192]{0}', space=vmem, size = 0x2000, scoped, tag = 'input window, operand 18, single buffered']
    #allocation29 [shape = 'u8[512]{0}', space=vmem, size = 0x400, scoped, tag = 'output window, operand 0, single buffered']
    %26 = vsyncpa [#allocation3], 0
    %27 = vsyncpa [#allocation6], 0
    %28 = vsyncpa [#allocation9], 0
    %29 = vsyncpa [#allocation12], 0
    %30 = vsyncpa [#allocation15], 0
    %31 = vsyncpa [#allocation18], 0
    %32 = vsyncpa [#allocation21], 0
    %33 = vsyncpa [#allocation24], 0
    %34 = vsyncpa [#allocation27], 0
    %35 = vsyncpa [#allocation4], 0
    // Predicated region
    $region2: #{tpu_custom_call.1} parent=1 // pred_check
      _
    $region3: #{tpu_custom_call.1} parent=1 // pred_check_branch
      %37 = sbr.rel (0) target = $region5
    $region4: #{tpu_custom_call.1} parent=1 // pred_region
      _
    $region5: #{tpu_custom_call.1} parent=1 // pred_fallthru
      _
    // Predicated region
    $region6: #{tpu_custom_call.1} parent=1 // pred_check
      _
    $region7: #{tpu_custom_call.1} parent=1 // pred_check_branch
      %39 = sbr.rel (0) target = $region9
    $region8: #{tpu_custom_call.1} parent=1 // pred_region
      _
    $region9: #{tpu_custom_call.1} parent=1 // pred_fallthru
      _
    // Predicated region
    $region10: #{tpu_custom_call.1} parent=1 // pred_check
      _
    $region11: #{tpu_custom_call.1} parent=1 // pred_check_branch
      %41 = sbr.rel (0) target = $region13
    $region12: #{tpu_custom_call.1} parent=1 // pred_region
      %43 = vsyncadd [#allocation3], 0
      %s44 = sshll.u32 %s2, 4
      %s45 = int_to_ptr.hbm [resolvable:$true] %s44
      %s46 = sshll.u32 [#allocation2], 4
      %s47 = int_to_ptr.vmem [resolvable:$true] %s46
      %52 = dma.hbm_to_vmem [thread:$0]  %s45, 256, %s47, [#allocation3], 128, 128, 8
    $region13: #{tpu_custom_call.1} parent=1 // pred_fallthru
      _
    // Predicated region
    $region14: #{tpu_custom_call.1} parent=1 // pred_check
      _
    $region15: #{tpu_custom_call.1} parent=1 // pred_check_branch
      %54 = sbr.rel (0) target = $region17
    $region16: #{tpu_custom_call.1} parent=1 // pred_region
      %56 = vsyncadd [#allocation6], 0
      %s57 = sshll.u32 %s3, 4
      %s58 = int_to_ptr.hbm [resolvable:$true] %s57
      %s59 = sshll.u32 [#allocation5], 4
      %s60 = int_to_ptr.vmem [resolvable:$true] %s59
      %65 = dma.hbm_to_vmem [thread:$0]  %s58, 256, %s60, [#allocation6], 128, 128, 8
    $region17: #{tpu_custom_call.1} parent=1 // pred_fallthru
      _
    // Predicated region
    $region18: #{tpu_custom_call.1} parent=1 // pred_check
      _
    $region19: #{tpu_custom_call.1} parent=1 // pred_check_branch
      %67 = sbr.rel (0) target = $region21
    $region20: #{tpu_custom_call.1} parent=1 // pred_region
      %69 = vsyncadd [#allocation6], 0
      %s70 = sshll.u32 %s4, 4
      %s71 = int_to_ptr.hbm [resolvable:$true] %s70
      %s72 = sshll.u32 [#allocation7], 4
      %s73 = int_to_ptr.vmem [resolvable:$true] %s72
      %78 = dma.hbm_to_vmem [thread:$0]  %s71, 256, %s73, [#allocation6], 128, 128, 8
    $region21: #{tpu_custom_call.1} parent=1 // pred_fallthru
      _
    // Predicated region
    $region22: #{tpu_custom_call.1} parent=1 // pred_check
      _
    $region23: #{tpu_custom_call.1} parent=1 // pred_check_branch
      %80 = sbr.rel (0) target = $region25
    $region24: #{tpu_custom_call.1} parent=1 // pred_region
      %82 = vsyncadd [#allocation9], 0
      %s83 = sshll.u32 %s5, 4
      %s84 = int_to_ptr.hbm [resolvable:$true] %s83
      %s85 = sshll.u32 [#allocation8], 4
      %s86 = int_to_ptr.vmem [resolvable:$true] %s85
      %91 = dma.hbm_to_vmem [thread:$0]  %s84, 256, %s86, [#allocation9], 128, 128, 8
    $region25: #{tpu_custom_call.1} parent=1 // pred_fallthru
      _
    // Predicated region
    $region26: #{tpu_custom_call.1} parent=1 // pred_check
      _
    $region27: #{tpu_custom_call.1} parent=1 // pred_check_branch
      %93 = sbr.rel (0) target = $region29
    $region28: #{tpu_custom_call.1} parent=1 // pred_region
      %95 = vsyncadd [#allocation9], 0
      %s96 = sshll.u32 %s6, 4
      %s97 = int_to_ptr.hbm [resolvable:$true] %s96
      %s98 = sshll.u32 [#allocation10], 4
      %s99 = int_to_ptr.vmem [resolvable:$true] %s98
      %104 = dma.hbm_to_vmem [thread:$0]  %s97, 256, %s99, [#allocation9], 128, 128, 8
    $region29: #{tpu_custom_call.1} parent=1 // pred_fallthru
      _
    // Predicated region
    $region30: #{tpu_custom_call.1} parent=1 // pred_check
      _
    $region31: #{tpu_custom_call.1} parent=1 // pred_check_branch
      %106 = sbr.rel (0) target = $region33
    $region32: #{tpu_custom_call.1} parent=1 // pred_region
      %108 = vsyncadd [#allocation12], 0
      %s109 = sshll.u32 %s7, 4
      %s110 = int_to_ptr.hbm [resolvable:$true] %s109
      %s111 = sshll.u32 [#allocation11], 4
      %s112 = int_to_ptr.vmem [resolvable:$true] %s111
      %117 = dma.hbm_to_vmem [thread:$0]  %s110, 256, %s112, [#allocation12], 128, 128, 8
    $region33: #{tpu_custom_call.1} parent=1 // pred_fallthru
      _
    // Predicated region
    $region34: #{tpu_custom_call.1} parent=1 // pred_check
      _
    $region35: #{tpu_custom_call.1} parent=1 // pred_check_branch
      %119 = sbr.rel (0) target = $region37
    $region36: #{tpu_custom_call.1} parent=1 // pred_region
      %121 = vsyncadd [#allocation12], 0
      %s122 = sshll.u32 %s8, 4
      %s123 = int_to_ptr.hbm [resolvable:$true] %s122
      %s124 = sshll.u32 [#allocation13], 4
      %s125 = int_to_ptr.vmem [resolvable:$true] %s124
      %130 = dma.hbm_to_vmem [thread:$0]  %s123, 256, %s125, [#allocation12], 128, 128, 8
    $region37: #{tpu_custom_call.1} parent=1 // pred_fallthru
      _
    // Predicated region
    $region38: #{tpu_custom_call.1} parent=1 // pred_check
      _
    $region39: #{tpu_custom_call.1} parent=1 // pred_check_branch
      %132 = sbr.rel (0) target = $region41
    $region40: #{tpu_custom_call.1} parent=1 // pred_region
      %134 = vsyncadd [#allocation15], 0
      %s135 = sshll.u32 %s9, 4
      %s136 = int_to_ptr.hbm [resolvable:$true] %s135
      %s137 = sshll.u32 [#allocation14], 4
      %s138 = int_to_ptr.vmem [resolvable:$true] %s137
      %143 = dma.hbm_to_vmem [thread:$0]  %s136, 256, %s138, [#allocation15], 128, 128, 8
    $region41: #{tpu_custom_call.1} parent=1 // pred_fallthru
      _
    // Predicated region
    $region42: #{tpu_custom_call.1} parent=1 // pred_check
      _
    $region43: #{tpu_custom_call.1} parent=1 // pred_check_branch
      %145 = sbr.rel (0) target = $region45
    $region44: #{tpu_custom_call.1} parent=1 // pred_region
      %147 = vsyncadd [#allocation15], 0
      %s148 = sshll.u32 %s10, 4
      %s149 = int_to_ptr.hbm [resolvable:$true] %s148
      %s150 = sshll.u32 [#allocation16], 4
      %s151 = int_to_ptr.vmem [resolvable:$true] %s150
      %156 = dma.hbm_to_vmem [thread:$0]  %s149, 256, %s151, [#allocation15], 128, 128, 8
    $region45: #{tpu_custom_call.1} parent=1 // pred_fallthru
      _
    // Predicated region
    $region46: #{tpu_custom_call.1} parent=1 // pred_check
      _
    $region47: #{tpu_custom_call.1} parent=1 // pred_check_branch
      %158 = sbr.rel (0) target = $region49
    $region48: #{tpu_custom_call.1} parent=1 // pred_region
      %160 = vsyncadd [#allocation18], 0
      %s161 = sshll.u32 %s11, 4
      %s162 = int_to_ptr.hbm [resolvable:$true] %s161
      %s163 = sshll.u32 [#allocation17], 4
      %s164 = int_to_ptr.vmem [resolvable:$true] %s163
      %169 = dma.hbm_to_vmem [thread:$0]  %s162, 256, %s164, [#allocation18], 128, 128, 8
    $region49: #{tpu_custom_call.1} parent=1 // pred_fallthru
      _
    // Predicated region
    $region50: #{tpu_custom_call.1} parent=1 // pred_check
      _
    $region51: #{tpu_custom_call.1} parent=1 // pred_check_branch
      %171 = sbr.rel (0) target = $region53
    $region52: #{tpu_custom_call.1} parent=1 // pred_region
      %173 = vsyncadd [#allocation18], 0
      %s174 = sshll.u32 %s12, 4
      %s175 = int_to_ptr.hbm [resolvable:$true] %s174
      %s176 = sshll.u32 [#allocation19], 4
      %s177 = int_to_ptr.vmem [resolvable:$true] %s176
      %182 = dma.hbm_to_vmem [thread:$0]  %s175, 256, %s177, [#allocation18], 128, 128, 8
    $region53: #{tpu_custom_call.1} parent=1 // pred_fallthru
      _
    // Predicated region
    $region54: #{tpu_custom_call.1} parent=1 // pred_check
      _
    $region55: #{tpu_custom_call.1} parent=1 // pred_check_branch
      %184 = sbr.rel (0) target = $region57
    $region56: #{tpu_custom_call.1} parent=1 // pred_region
      %186 = vsyncadd [#allocation21], 0
      %s187 = sshll.u32 %s13, 4
      %s188 = int_to_ptr.hbm [resolvable:$true] %s187
      %s189 = sshll.u32 [#allocation20], 4
      %s190 = int_to_ptr.vmem [resolvable:$true] %s189
      %195 = dma.hbm_to_vmem [thread:$0]  %s188, 256, %s190, [#allocation21], 128, 128, 8
    $region57: #{tpu_custom_call.1} parent=1 // pred_fallthru
      _
    // Predicated region
    $region58: #{tpu_custom_call.1} parent=1 // pred_check
      _
    $region59: #{tpu_custom_call.1} parent=1 // pred_check_branch
      %197 = sbr.rel (0) target = $region61
    $region60: #{tpu_custom_call.1} parent=1 // pred_region
      %199 = vsyncadd [#allocation21], 0
      %s200 = sshll.u32 %s14, 4
      %s201 = int_to_ptr.hbm [resolvable:$true] %s200
      %s202 = sshll.u32 [#allocation22], 4
      %s203 = int_to_ptr.vmem [resolvable:$true] %s202
      %208 = dma.hbm_to_vmem [thread:$0]  %s201, 256, %s203, [#allocation21], 128, 128, 8
    $region61: #{tpu_custom_call.1} parent=1 // pred_fallthru
      _
    // Predicated region
    $region62: #{tpu_custom_call.1} parent=1 // pred_check
      _
    $region63: #{tpu_custom_call.1} parent=1 // pred_check_branch
      %210 = sbr.rel (0) target = $region65
    $region64: #{tpu_custom_call.1} parent=1 // pred_region
      %212 = vsyncadd [#allocation24], 0
      %s213 = sshll.u32 %s15, 4
      %s214 = int_to_ptr.hbm [resolvable:$true] %s213
      %s215 = sshll.u32 [#allocation23], 4
      %s216 = int_to_ptr.vmem [resolvable:$true] %s215
      %221 = dma.hbm_to_vmem [thread:$0]  %s214, 256, %s216, [#allocation24], 128, 128, 8
    $region65: #{tpu_custom_call.1} parent=1 // pred_fallthru
      _
    // Predicated region
    $region66: #{tpu_custom_call.1} parent=1 // pred_check
      _
    $region67: #{tpu_custom_call.1} parent=1 // pred_check_branch
      %223 = sbr.rel (0) target = $region69
    $region68: #{tpu_custom_call.1} parent=1 // pred_region
      %225 = vsyncadd [#allocation24], 0
      %s226 = sshll.u32 %s16, 4
      %s227 = int_to_ptr.hbm [resolvable:$true] %s226
      %s228 = sshll.u32 [#allocation25], 4
      %s229 = int_to_ptr.vmem [resolvable:$true] %s228
      %234 = dma.hbm_to_vmem [thread:$0]  %s227, 256, %s229, [#allocation24], 128, 128, 8
    $region69: #{tpu_custom_call.1} parent=1 // pred_fallthru
      _
    // Predicated region
    $region70: #{tpu_custom_call.1} parent=1 // pred_check
      _
    $region71: #{tpu_custom_call.1} parent=1 // pred_check_branch
      %236 = sbr.rel (0) target = $region73
    $region72: #{tpu_custom_call.1} parent=1 // pred_region
      %238 = vsyncadd [#allocation27], 0
      %s239 = sshll.u32 %s17, 4
      %s240 = int_to_ptr.hbm [resolvable:$true] %s239
      %s241 = sshll.u32 [#allocation26], 4
      %s242 = int_to_ptr.vmem [resolvable:$true] %s241
      %247 = dma.hbm_to_vmem [thread:$0]  %s240, 256, %s242, [#allocation27], 128, 128, 8
    $region73: #{tpu_custom_call.1} parent=1 // pred_fallthru
      _
    // Predicated region
    $region74: #{tpu_custom_call.1} parent=1 // pred_check
      _
    $region75: #{tpu_custom_call.1} parent=1 // pred_check_branch
      %249 = sbr.rel (0) target = $region77
    $region76: #{tpu_custom_call.1} parent=1 // pred_region
      %251 = vsyncadd [#allocation27], 0
      %s252 = sshll.u32 %s18, 4
      %s253 = int_to_ptr.hbm [resolvable:$true] %s252
      %s254 = sshll.u32 [#allocation28], 4
      %s255 = int_to_ptr.vmem [resolvable:$true] %s254
      %260 = dma.hbm_to_vmem [thread:$0]  %s253, 256, %s255, [#allocation27], 128, 128, 8
    $region77: #{tpu_custom_call.1} parent=1 // pred_fallthru
      _
    // Predicated region
    $region78: #{tpu_custom_call.1} parent=1 // pred_check
      _
    $region79: #{tpu_custom_call.1} parent=1 // pred_check_branch
      %262 = sbr.rel (0) target = $region81
    $region80: #{tpu_custom_call.1} parent=1 // pred_region
      _
    $region81: #{tpu_custom_call.1} parent=1 // pred_fallthru
      _
    // Predicated region
    $region82: #{tpu_custom_call.1} parent=1 // pred_check
      _
    $region83: #{tpu_custom_call.1} parent=1 // pred_check_branch
      %264 = sbr.rel (0) target = $region85
    $region84: #{tpu_custom_call.1} parent=1 // pred_region
      _
    $region85: #{tpu_custom_call.1} parent=1 // pred_fallthru
      _
    // Predicated region
    $region86: #{tpu_custom_call.1} parent=1 // pred_check
      _
    $region87: #{tpu_custom_call.1} parent=1 // pred_check_branch
      %266 = sbr.rel (0) target = $region89
    $region88: #{tpu_custom_call.1} parent=1 // pred_region
      %268 = dma.done [#allocation3], 256
    $region89: #{tpu_custom_call.1} parent=1 // pred_fallthru
      _
    // Predicated region
    $region90: #{tpu_custom_call.1} parent=1 // pred_check
      _
    $region91: #{tpu_custom_call.1} parent=1 // pred_check_branch
      %270 = sbr.rel (0) target = $region93
    $region92: #{tpu_custom_call.1} parent=1 // pred_region
      %272 = dma.done [#allocation6], 256
    $region93: #{tpu_custom_call.1} parent=1 // pred_fallthru
      _
    // Predicated region
    $region94: #{tpu_custom_call.1} parent=1 // pred_check
      _
    $region95: #{tpu_custom_call.1} parent=1 // pred_check_branch
      %274 = sbr.rel (0) target = $region97
    $region96: #{tpu_custom_call.1} parent=1 // pred_region
      %276 = dma.done [#allocation6], 256
    $region97: #{tpu_custom_call.1} parent=1 // pred_fallthru
      _
    // Predicated region
    $region98: #{tpu_custom_call.1} parent=1 // pred_check
      _
    $region99: #{tpu_custom_call.1} parent=1 // pred_check_branch
      %278 = sbr.rel (0) target = $region101
    $region100: #{tpu_custom_call.1} parent=1 // pred_region
      %280 = dma.done [#allocation9], 256
    $region101: #{tpu_custom_call.1} parent=1 // pred_fallthru
      _
    // Predicated region
    $region102: #{tpu_custom_call.1} parent=1 // pred_check
      _
    $region103: #{tpu_custom_call.1} parent=1 // pred_check_branch
      %282 = sbr.rel (0) target = $region105
    $region104: #{tpu_custom_call.1} parent=1 // pred_region
      %284 = dma.done [#allocation9], 256
    $region105: #{tpu_custom_call.1} parent=1 // pred_fallthru
      _
    // Predicated region
    $region106: #{tpu_custom_call.1} parent=1 // pred_check
      _
    $region107: #{tpu_custom_call.1} parent=1 // pred_check_branch
      %286 = sbr.rel (0) target = $region109
    $region108: #{tpu_custom_call.1} parent=1 // pred_region
      %288 = dma.done [#allocation12], 256
    $region109: #{tpu_custom_call.1} parent=1 // pred_fallthru
      _
    // Predicated region
    $region110: #{tpu_custom_call.1} parent=1 // pred_check
      _
    $region111: #{tpu_custom_call.1} parent=1 // pred_check_branch
      %290 = sbr.rel (0) target = $region113
    $region112: #{tpu_custom_call.1} parent=1 // pred_region
      %292 = dma.done [#allocation12], 256
    $region113: #{tpu_custom_call.1} parent=1 // pred_fallthru
      _
    // Predicated region
    $region114: #{tpu_custom_call.1} parent=1 // pred_check
      _
    $region115: #{tpu_custom_call.1} parent=1 // pred_check_branch
      %294 = sbr.rel (0) target = $region117
    $region116: #{tpu_custom_call.1} parent=1 // pred_region
      %296 = dma.done [#allocation15], 256
    $region117: #{tpu_custom_call.1} parent=1 // pred_fallthru
      _
    // Predicated region
    $region118: #{tpu_custom_call.1} parent=1 // pred_check
      _
    $region119: #{tpu_custom_call.1} parent=1 // pred_check_branch
      %298 = sbr.rel (0) target = $region121
    $region120: #{tpu_custom_call.1} parent=1 // pred_region
      %300 = dma.done [#allocation15], 256
    $region121: #{tpu_custom_call.1} parent=1 // pred_fallthru
      _
    // Predicated region
    $region122: #{tpu_custom_call.1} parent=1 // pred_check
      _
    $region123: #{tpu_custom_call.1} parent=1 // pred_check_branch
      %302 = sbr.rel (0) target = $region125
    $region124: #{tpu_custom_call.1} parent=1 // pred_region
      %304 = dma.done [#allocation18], 256
    $region125: #{tpu_custom_call.1} parent=1 // pred_fallthru
      _
    // Predicated region
    $region126: #{tpu_custom_call.1} parent=1 // pred_check
      _
    $region127: #{tpu_custom_call.1} parent=1 // pred_check_branch
      %306 = sbr.rel (0) target = $region129
    $region128: #{tpu_custom_call.1} parent=1 // pred_region
      %308 = dma.done [#allocation18], 256
    $region129: #{tpu_custom_call.1} parent=1 // pred_fallthru
      _
    // Predicated region
    $region130: #{tpu_custom_call.1} parent=1 // pred_check
      _
    $region131: #{tpu_custom_call.1} parent=1 // pred_check_branch
      %310 = sbr.rel (0) target = $region133
    $region132: #{tpu_custom_call.1} parent=1 // pred_region
      %312 = dma.done [#allocation21], 256
    $region133: #{tpu_custom_call.1} parent=1 // pred_fallthru
      _
    // Predicated region
    $region134: #{tpu_custom_call.1} parent=1 // pred_check
      _
    $region135: #{tpu_custom_call.1} parent=1 // pred_check_branch
      %314 = sbr.rel (0) target = $region137
    $region136: #{tpu_custom_call.1} parent=1 // pred_region
      %316 = dma.done [#allocation21], 256
    $region137: #{tpu_custom_call.1} parent=1 // pred_fallthru
      _
    // Predicated region
    $region138: #{tpu_custom_call.1} parent=1 // pred_check
      _
    $region139: #{tpu_custom_call.1} parent=1 // pred_check_branch
      %318 = sbr.rel (0) target = $region141
    $region140: #{tpu_custom_call.1} parent=1 // pred_region
      %320 = dma.done [#allocation24], 256
    $region141: #{tpu_custom_call.1} parent=1 // pred_fallthru
      _
    // Predicated region
    $region142: #{tpu_custom_call.1} parent=1 // pred_check
      _
    $region143: #{tpu_custom_call.1} parent=1 // pred_check_branch
      %322 = sbr.rel (0) target = $region145
    $region144: #{tpu_custom_call.1} parent=1 // pred_region
      %324 = dma.done [#allocation24], 256
    $region145: #{tpu_custom_call.1} parent=1 // pred_fallthru
      _
    // Predicated region
    $region146: #{tpu_custom_call.1} parent=1 // pred_check
      _
    $region147: #{tpu_custom_call.1} parent=1 // pred_check_branch
      %326 = sbr.rel (0) target = $region149
    $region148: #{tpu_custom_call.1} parent=1 // pred_region
      %328 = dma.done [#allocation27], 256
    $region149: #{tpu_custom_call.1} parent=1 // pred_fallthru
      _
    // Predicated region
    $region150: #{tpu_custom_call.1} parent=1 // pred_check
      _
    $region151: #{tpu_custom_call.1} parent=1 // pred_check_branch
      %330 = sbr.rel (0) target = $region153
    $region152: #{tpu_custom_call.1} parent=1 // pred_region
      %332 = dma.done [#allocation27], 256
    $region153: #{tpu_custom_call.1} parent=1 // pred_fallthru
      _
    %p333 = scmp.eq.s32.totalorder 0, 0
    // Predicated region
    $region154: #{tpu_custom_call.1} parent=1 // pred_check
      %p334 = pneg %p333
    $region155: #{tpu_custom_call.1} parent=1 // pred_check_branch
      %336 = sbr.rel (%p334) target = $region157
    $region156: #{tpu_custom_call.1} parent=1 // pred_region
      %337 = vst [vmem:[#allocation29] sm:$0x1] 0.0
    $region157: #{tpu_custom_call.1} parent=1 // pred_fallthru
      _
    %v338 = vld [vmem:[%s0] sm:$0xff]
    %v339 = vld [vmem:[%s0 + $0x8] sm:$0xff]
    %v340 = vld [vmem:[#allocation2] sm:$0xff]
    %v341 = vld [vmem:[#allocation2 + $0x8] sm:$0xff]
    %v342 = vsub.f32 %v338, %v340
    %v343 = vsub.f32 %v339, %v341
    %v344 = vld [vmem:[%s1] sm:$0xff]
    %v345 = vld [vmem:[%s1 + $0x8] sm:$0xff]
    %v346 = vld [vmem:[#allocation5] sm:$0xff]
    %v347 = vld [vmem:[#allocation5 + $0x8] sm:$0xff]
    %v348 = vsub.f32 %v344, %v346
    %v349 = vsub.f32 %v345, %v347
    %v350 = vld [vmem:[#allocation7] sm:$0xff]
    %v351 = vld [vmem:[#allocation7 + $0x8] sm:$0xff]
    %v352 = vmul.f32 %v342, %v342
    %v353 = vmul.f32 %v343, %v343
    %v354 = vmul.f32 %v348, %v348
    %v355 = vmul.f32 %v349, %v349
    %v356 = vadd.f32 %v352, %v354
    %v357 = vadd.f32 %v353, %v355
    %v358 = vmul.f32 %v350, %v356
    %v359 = vmul.f32 %v351, %v357
    %vm360 = vcmask 400384
    %v361 = vsel %vm360, %v358, 0.0
    %v362 = vsel %vm360, %v359, 0.0
    %v363 = vadd.f32 %v361, %v362
    %364 = vadd.xlane.f32.xlu0 %v363
    %v365 = vpop.xlane.xlu0 %364
    %v366 = vrot.slane %v365, 4
    %v367 = vadd.f32 %v365, %v366
    %v368 = vrot.slane %v367, 2
    %v369 = vadd.f32 %v367, %v368
    %v370 = vrot.slane %v369, 1
    %v371 = vadd.f32 %v369, %v370
    %s372 = vtos %v371
    %v373 = vmul.f32 %v342, 2.0
    %v374 = vmul.f32 %v343, 2.0
    %v377 = vrot.slane %v373, 7
    %v378 = vrot.slane %v374, 7
    %v381 = vsub.f32 %v342, %v377
    %v382 = vsub.f32 %v343, %v378
    %v385 = vrot.slane %v342, 6
    %v386 = vrot.slane %v343, 6
    %v389 = vadd.f32 %v381, %v385
    %v390 = vadd.f32 %v382, %v386
    %v391 = vmul.f32 %v348, 2.0
    %v392 = vmul.f32 %v349, 2.0
    %v395 = vrot.slane %v391, 7
    %v396 = vrot.slane %v392, 7
    %v399 = vsub.f32 %v348, %v395
    %v400 = vsub.f32 %v349, %v396
    %v403 = vrot.slane %v348, 6
    %v404 = vrot.slane %v349, 6
    %v407 = vadd.f32 %v399, %v403
    %v408 = vadd.f32 %v400, %v404
    %v409 = vmul.f32 %v389, %v389
    %v410 = vmul.f32 %v390, %v390
    %v411 = vmul.f32 %v407, %v407
    %v412 = vmul.f32 %v408, %v408
    %v413 = vadd.f32 %v409, %v411
    %v414 = vadd.f32 %v410, %v412
    %v417 = vrot.slane %v413, 1
    %v418 = vrot.slane %v414, 1
    %v421 = vmul.f32 %v350, %v417
    %v422 = vmul.f32 %v351, %v418
    %v425 = vrot.slane %v421, 1
    %v426 = vrot.slane %v422, 1
    %vm429 = vcmask 398336
    %v430 = vsel %vm429, %v425, 0.0
    %v431 = vsel %vm429, %v426, 0.0
    %v432 = vadd.f32 %v430, %v431
    %433 = vadd.xlane.f32.xlu0 %v432
    %v434 = vpop.xlane.xlu0 %433
    %v435 = vrot.slane %v434, 4
    %v436 = vadd.f32 %v434, %v435
    %v437 = vrot.slane %v436, 2
    %v438 = vadd.f32 %v436, %v437
    %v439 = vrot.slane %v438, 1
    %v440 = vadd.f32 %v438, %v439
    %s441 = vtos %v440
    %v442 = vld [vmem:[%s19] sm:$0xff]
    %v443 = vld [vmem:[%s19 + $0x8] sm:$0xff]
    %v444 = vld [vmem:[#allocation8] sm:$0xff]
    %v445 = vld [vmem:[#allocation8 + $0x8] sm:$0xff]
    %v446 = vld [vmem:[#allocation13] sm:$0xff]
    %v447 = vld [vmem:[#allocation13 + $0x8] sm:$0xff]
    %v448 = vsub.f32 %v444, %v446
    %v449 = vsub.f32 %v445, %v447
    %v450 = vld [vmem:[#allocation10] sm:$0xff]
    %v451 = vld [vmem:[#allocation10 + $0x8] sm:$0xff]
    %v452 = vld [vmem:[#allocation14] sm:$0xff]
    %v453 = vld [vmem:[#allocation14 + $0x8] sm:$0xff]
    %v454 = vsub.f32 %v450, %v452
    %v455 = vsub.f32 %v451, %v453
    %v456 = vld [vmem:[#allocation11] sm:$0xff]
    %v457 = vld [vmem:[#allocation11 + $0x8] sm:$0xff]
    %v458 = vld [vmem:[#allocation16] sm:$0xff]
    %v459 = vld [vmem:[#allocation16 + $0x8] sm:$0xff]
    %v460 = vsub.f32 %v456, %v458
    %v461 = vsub.f32 %v457, %v459
    %464 = vrot.lane.b32.xlu0 %v448, 127
    %v465 = vpop.permute.xlu0 %464
    %466 = vrot.lane.b32.xlu0 %v449, 127
    %v467 = vpop.permute.xlu0 %466
    %v470 = vadd.f32 %v448, %v465
    %v471 = vadd.f32 %v449, %v467
    %v472 = vmul.f32 %v470, 0.5
    %v473 = vmul.f32 %v471, 0.5
    %476 = vrot.lane.b32.xlu0 %v454, 127
    %v477 = vpop.permute.xlu0 %476
    %478 = vrot.lane.b32.xlu0 %v455, 127
    %v479 = vpop.permute.xlu0 %478
    %v482 = vadd.f32 %v454, %v477
    %v483 = vadd.f32 %v455, %v479
    %v484 = vmul.f32 %v482, 0.5
    %v485 = vmul.f32 %v483, 0.5
    %488 = vrot.lane.b32.xlu0 %v460, 127
    %v489 = vpop.permute.xlu0 %488
    %490 = vrot.lane.b32.xlu0 %v461, 127
    %v491 = vpop.permute.xlu0 %490
    %v494 = vadd.f32 %v460, %v489
    %v495 = vadd.f32 %v461, %v491
    %v496 = vmul.f32 %v494, 0.5
    %v497 = vmul.f32 %v495, 0.5
    %499 = vset.pattern.permute.xlu0 2
    %500 = vperm.xlu0 %499, %v472
    %v501 = vpop.permute.xlu0 %500
    %504 = vset.pattern.permute.xlu0 2
    %505 = vperm.xlu0 %504, %v473
    %v506 = vpop.permute.xlu0 %505
    %v508 = vsub.f32 %v448, %v501
    %v509 = vsub.f32 %v449, %v506
    %511 = vset.pattern.permute.xlu0 2
    %512 = vperm.xlu0 %511, %v484
    %v513 = vpop.permute.xlu0 %512
    %516 = vset.pattern.permute.xlu0 2
    %517 = vperm.xlu0 %516, %v485
    %v518 = vpop.permute.xlu0 %517
    %v520 = vsub.f32 %v454, %v513
    %v521 = vsub.f32 %v455, %v518
    %523 = vset.pattern.permute.xlu0 2
    %524 = vperm.xlu0 %523, %v496
    %v525 = vpop.permute.xlu0 %524
    %528 = vset.pattern.permute.xlu0 2
    %529 = vperm.xlu0 %528, %v497
    %v530 = vpop.permute.xlu0 %529
    %v532 = vsub.f32 %v460, %v525
    %v533 = vsub.f32 %v461, %v530
    %v534 = vmul.f32 %v508, %v508
    %v535 = vmul.f32 %v509, %v509
    %v536 = vmul.f32 %v520, %v520
    %v537 = vmul.f32 %v521, %v521
    %v538 = vadd.f32 %v534, %v536
    %v539 = vadd.f32 %v535, %v537
    %v540 = vmul.f32 %v532, %v532
    %v541 = vmul.f32 %v533, %v533
    %v542 = vadd.f32 %v538, %v540
    %v543 = vadd.f32 %v539, %v541
    %545 = vset.pattern.permute.xlu0 0
    %546 = vperm.xlu0 %545, %v442
    %v547 = vpop.permute.xlu0 %546
    %550 = vset.pattern.permute.xlu0 0
    %551 = vperm.xlu0 %550, %v443
    %v552 = vpop.permute.xlu0 %551
    %v554 = vmul.f32 %v547, %v542
    %v555 = vmul.f32 %v552, %v543
    %vm556 = vcmask 113664
    %v557 = vsel %vm556, %v554, 0.0
    %v558 = vsel %vm556, %v555, 0.0
    %v559 = vadd.f32 %v557, %v558
    %560 = vadd.xlane.f32.xlu0 %v559
    %v561 = vpop.xlane.xlu0 %560
    %v562 = vrot.slane %v561, 4
    %v563 = vadd.f32 %v561, %v562
    %v564 = vrot.slane %v563, 2
    %v565 = vadd.f32 %v563, %v564
    %v566 = vrot.slane %v565, 1
    %v567 = vadd.f32 %v565, %v566
    %s568 = vtos %v567
    %v569 = vmul.f32 %v448, 2.0
    %v570 = vmul.f32 %v449, 2.0
    %v573 = vrot.slane %v569, 7
    %v574 = vrot.slane %v570, 7
    %v577 = vsub.f32 %v448, %v573
    %v578 = vsub.f32 %v449, %v574
    %v579 = vrot.slane %v448, 6
    %v580 = vrot.slane %v449, 6
    %v583 = vadd.f32 %v577, %v579
    %v584 = vadd.f32 %v578, %v580
    %v585 = vmul.f32 %v454, 2.0
    %v586 = vmul.f32 %v455, 2.0
    %v589 = vrot.slane %v585, 7
    %v590 = vrot.slane %v586, 7
    %v593 = vsub.f32 %v454, %v589
    %v594 = vsub.f32 %v455, %v590
    %v595 = vrot.slane %v454, 6
    %v596 = vrot.slane %v455, 6
    %v599 = vadd.f32 %v593, %v595
    %v600 = vadd.f32 %v594, %v596
    %v601 = vmul.f32 %v460, 2.0
    %v602 = vmul.f32 %v461, 2.0
    %v605 = vrot.slane %v601, 7
    %v606 = vrot.slane %v602, 7
    %v609 = vsub.f32 %v460, %v605
    %v610 = vsub.f32 %v461, %v606
    %v611 = vrot.slane %v460, 6
    %v612 = vrot.slane %v461, 6
    %v615 = vadd.f32 %v609, %v611
    %v616 = vadd.f32 %v610, %v612
    %v617 = vmul.f32 %v583, %v583
    %v618 = vmul.f32 %v584, %v584
    %v619 = vmul.f32 %v599, %v599
    %v620 = vmul.f32 %v600, %v600
    %v621 = vadd.f32 %v617, %v619
    %v622 = vadd.f32 %v618, %v620
    %v623 = vmul.f32 %v615, %v615
    %v624 = vmul.f32 %v616, %v616
    %v625 = vadd.f32 %v621, %v623
    %v626 = vadd.f32 %v622, %v624
    %v629 = vrot.slane %v625, 1
    %v630 = vrot.slane %v626, 1
    %v633 = vmul.f32 %v547, %v629
    %v634 = vmul.f32 %v552, %v630
    %v637 = vrot.slane %v633, 1
    %v638 = vrot.slane %v634, 1
    %vm641 = vcmask 111616
    %v642 = vsel %vm641, %v637, 0.0
    %v643 = vsel %vm641, %v638, 0.0
    %v644 = vadd.f32 %v642, %v643
    %645 = vadd.xlane.f32.xlu0 %v644
    %v646 = vpop.xlane.xlu0 %645
    %v647 = vrot.slane %v646, 4
    %v648 = vadd.f32 %v646, %v647
    %v649 = vrot.slane %v648, 2
    %v650 = vadd.f32 %v648, %v649
    %v651 = vrot.slane %v650, 1
    %v652 = vadd.f32 %v650, %v651
    %s653 = vtos %v652
    %v654 = vld [vmem:[%s20] sm:$0xff]
    %v655 = vld [vmem:[%s20 + $0x8] sm:$0xff]
    %v656 = vld [vmem:[#allocation17] sm:$0xff]
    %v657 = vld [vmem:[#allocation17 + $0x8] sm:$0xff]
    %v658 = vld [vmem:[#allocation19] sm:$0xff]
    %v659 = vld [vmem:[#allocation19 + $0x8] sm:$0xff]
    %v660 = vld [vmem:[#allocation20] sm:$0xff]
    %v661 = vld [vmem:[#allocation20 + $0x8] sm:$0xff]
    %v662 = vadd.f32 %v656, 1e-08
    %v663 = vadd.f32 %v657, 1e-08
    %v664 = vadd.f32 %v658, 1e-08
    %v665 = vadd.f32 %v659, 1e-08
    %v666 = vadd.f32 %v660, 1e-08
    %v667 = vadd.f32 %v661, 1e-08
    %v668 = vmul.f32 %v662, %v662
    %v669 = vmul.f32 %v663, %v663
    %v670 = vmul.f32 %v664, %v664
    %v671 = vmul.f32 %v665, %v665
    %v672 = vadd.f32 %v668, %v670
    %v673 = vadd.f32 %v669, %v671
    %v674 = vmul.f32 %v666, %v666
    %v675 = vmul.f32 %v667, %v667
    %v676 = vadd.f32 %v672, %v674
    %v677 = vadd.f32 %v673, %v675
    %v678 = vrsqrt.pop %v676
    %v679 = vmul.f32 %v678, %v676
    %v680 = vmul.f32 %v679, %v678
    %v681 = vmul.f32 0.5, %v680
    %v682 = vsub.f32 1.5, %v681
    %v683 = vmul.f32 %v678, %v682
    %vm684 = vweird.f32 %v676
    %vm685 = vweird.f32 %v678
    %vm686 = vmor %vm684, %vm685
    %v687 = vsel %vm686, %v678, %v683
    %v688 = vrsqrt.pop %v677
    %v689 = vmul.f32 %v688, %v677
    %v690 = vmul.f32 %v689, %v688
    %v691 = vmul.f32 0.5, %v690
    %v692 = vsub.f32 1.5, %v691
    %v693 = vmul.f32 %v688, %v692
    %vm694 = vweird.f32 %v677
    %vm695 = vweird.f32 %v688
    %vm696 = vmor %vm694, %vm695
    %v697 = vsel %vm696, %v688, %v693
    %v698 = vmul.f32 %v676, 0.5
    %v699 = vmul.f32 %v677, 0.5
    %v700 = vmul.f32 %v698, %v687
    %v701 = vmul.f32 %v699, %v697
    %v702 = vand.u32 2147483647, %v700
    %vm703 = vcmp.le.f32.partialorder %v702, 0.7853982
    %vm704 = vcmp.lt.s32.totalorder %v700, 0
    %v705 = vand.u32 %v700, 2139095040
    %v706 = vshrl.u32 %v705, 23
    %v707 = vsub.s32 %v706, 127
    %v708 = vand.u32 2147483647, %v700
    %v709 = vand.u32 %v708, 8388607
    %v710 = vor.u32 %v709, 8388608
    %v711 = vsub.s32 0, %v710
    %v712 = vadd.s32 %v707, 1
    %vm713 = vcmp.gt.s32.totalorder %v712, 0
    %v714 = vsel %vm713, %v712, 0
    %v715 = vshrl.u32 %v714, 5
    %v716 = vand.u32 %v714, 31
    %v717 = vsub.s32 32, %v716
    %v718 = vshrl.u32 683565275, %v717
    %v719 = vshll.u32 683565275, %v716
    %v720 = vshrl.u32 2475754826, %v717
    %v721 = vor.u32 %v719, %v720
    %v722 = vshll.u32 2475754826, %v716
    %v723 = vshrl.u32 2131351028, %v717
    %v724 = vor.u32 %v722, %v723
    %v725 = vshll.u32 2131351028, %v716
    %v726 = vshrl.u32 2102212464, %v717
    %v727 = vor.u32 %v725, %v726
    %v728 = vshll.u32 2102212464, %v716
    %v729 = vshrl.u32 920167782, %v717
    %v730 = vor.u32 %v728, %v729
    %v731 = vshll.u32 920167782, %v716
    %v732 = vshrl.u32 1326507024, %v717
    %v733 = vor.u32 %v731, %v732
    %vm734 = vcmp.lt.s32.totalorder %v715, 1
    %vm735 = vcmp.lt.s32.totalorder %v715, 2
    %vm736 = vcmp.lt.s32.totalorder %v715, 3
    %vm737 = vcmp.lt.s32.totalorder %v715, 4
    %v738 = vsel %vm734, %v718, %v721
    %v739 = vsel %vm737, %v727, 2102212464
    %v740 = vsel %vm736, %v724, %v739
    %v741 = vsel %vm735, %v738, %v740
    %v742 = vsel %vm734, %v721, %v724
    %v743 = vsel %vm737, %v730, 920167782
    %v744 = vsel %vm736, %v727, %v743
    %v745 = vsel %vm735, %v742, %v744
    %v746 = vsel %vm734, %v724, %v727
    %v747 = vsel %vm737, %v733, 1326507024
    %v748 = vsel %vm736, %v730, %v747
    %v749 = vsel %vm735, %v746, %v748
    %v750 = vshll.u32 %v710, 8
    %v751 = vand.u32 %v750, 65535
    %v752 = vshrl.u32 %v750, 16
    %v753 = vand.u32 %v749, 65535
    %v754 = vshrl.u32 %v749, 16
    %v755 = vmul.u32 %v751, %v753
    %v756 = vmul.u32 %v751, %v754
    %v757 = vmul.u32 %v752, %v753
    %v758 = vmul.u32 %v752, %v754
    %v759 = vshll.u32 %v756, 16
    %v760 = vshrl.u32 %v756, 16
    %v761 = vshll.u32 %v757, 16
    %v762 = vshrl.u32 %v757, 16
    %vm763 = vc.u32 %v755, %v759
    %v764 = vsel %vm763, 1, 0
    %v765 = vadd.s32 %v755, %v759
    %v766 = vadd.s32 %v758, %v764
    %vm767 = vc.u32 %v765, %v761
    %v768 = vsel %vm767, 1, 0
    %v769 = vadd.s32 %v765, %v761
    %v770 = vadd.s32 %v766, %v768
    %v771 = vadd.s32 %v770, %v760
    %v772 = vadd.s32 %v771, %v762
    %v773 = vand.u32 %v750, 65535
    %v774 = vshrl.u32 %v750, 16
    %v775 = vand.u32 %v745, 65535
    %v776 = vshrl.u32 %v745, 16
    %v777 = vmul.u32 %v773, %v775
    %v778 = vmul.u32 %v773, %v776
    %v779 = vmul.u32 %v774, %v775
    %v780 = vmul.u32 %v774, %v776
    %v781 = vshll.u32 %v778, 16
    %v782 = vshrl.u32 %v778, 16
    %v783 = vshll.u32 %v779, 16
    %v784 = vshrl.u32 %v779, 16
    %vm785 = vc.u32 %v777, %v781
    %v786 = vsel %vm785, 1, 0
    %v787 = vadd.s32 %v777, %v781
    %v788 = vadd.s32 %v780, %v786
    %vm789 = vc.u32 %v787, %v783
    %v790 = vsel %vm789, 1, 0
    %v791 = vadd.s32 %v787, %v783
    %v792 = vadd.s32 %v788, %v790
    %v793 = vadd.s32 %v792, %v782
    %v794 = vadd.s32 %v793, %v784
    %v795 = vmul.u32 %v750, %v741
    %v796 = vadd.s32 %v772, %v791
    %vm797 = vc.u32 %v772, %v791
    %v798 = vadd.s32 %v794, 1
    %v799 = vsel %vm797, %v798, %v794
    %v800 = vadd.s32 %v795, %v799
    %v801 = vadd.s32 %v800, 536870912
    %v802 = vshrl.u32 %v801, 30
    %v803 = vshll.u32 %v802, 30
    %v804 = vsub.s32 %v800, %v803
    %vm805 = vcmp.lt.s32.totalorder %v804, 0
    %v806 = vsub.s32 0, %v804
    %v807 = vsel %vm805, %v806, %v804
    %v808 = vclz %v807
    %v809 = vsub.s32 %v808, 2
    %vm810 = vcmp.gt.s32.totalorder 0, %v809
    %v811 = vsel %vm810, 0, %v809
    %v812 = vsub.s32 32, %v811
    %v813 = vshll.u32 %v804, %v811
    %v814 = vshrl.u32 %v796, %v812
    %v815 = vor.u32 %v813, %v814
    %v816 = vsub.s32 4294967266, %v811
    %v817 = vadd.s32 %v816, 127
    %v818 = vshll.u32 %v817, 23
    %v819 = vor.u32 4788187, %v818
    %v820 = vand.u32 2147483647, %v819
    %v822 = vcvt.s32.f32 %v815
    %v823 = vmul.f32 %v822, %v820
    %v824 = vxor.u32 %v823, 2147483648
    %v825 = vsel %vm704, %v824, %v823
    %v826 = vsub.s32 4, %v802
    %v827 = vsel %vm704, %v826, %v802
    %v828 = vsel %vm703, %v700, %v825
    %v829 = vsel %vm703, 0, %v827
    %v830 = vmul.f32 %v828, %v828
    %v831 = vmul.f32 %v830, -0.001358992
    %v832 = vadd.f32 %v831, 0.041655596
    %v833 = vmul.f32 %v830, %v832
    %v834 = vadd.f32 %v833, -0.4999988
    %v835 = vmul.f32 %v830, %v834
    %v836 = vadd.f32 1.0, %v835
    %v837 = vmul.f32 %v828, %v828
    %v838 = vmul.f32 %v837, -0.00019511016
    %v839 = vadd.f32 %v838, 0.008332121
    %v840 = vmul.f32 %v837, %v839
    %v841 = vadd.f32 %v840, -0.16666654
    %v842 = vmul.f32 %v837, %v841
    %v843 = vadd.f32 %v842, 1.0
    %v844 = vmul.f32 %v843, %v828
    %vm845 = vweird.f32 %v700
    %v846 = vand.u32 %v829, 3
    %vm847 = vcmp.lt.s32.totalorder %v846, 2
    %vm848 = vcmp.eq.s32.totalorder %v846, 0
    %v849 = vxor.u32 %v844, 2147483648
    %v850 = vsel %vm848, %v836, %v849
    %vm851 = vcmp.eq.s32.totalorder %v846, 2
    %v852 = vxor.u32 %v836, 2147483648
    %v853 = vsel %vm851, %v852, %v844
    %v854 = vsel %vm847, %v850, %v853
    %v855 = vsel %vm845, nan, %v854
    %v856 = vand.u32 2147483647, %v701
    %vm857 = vcmp.le.f32.partialorder %v856, 0.7853982
    %vm858 = vcmp.lt.s32.totalorder %v701, 0
    %v859 = vand.u32 %v701, 2139095040
    %v860 = vshrl.u32 %v859, 23
    %v861 = vsub.s32 %v860, 127
    %v862 = vand.u32 2147483647, %v701
    %v863 = vand.u32 %v862, 8388607
    %v864 = vor.u32 %v863, 8388608
    %v865 = vsub.s32 0, %v864
    %v866 = vadd.s32 %v861, 1
    %vm867 = vcmp.gt.s32.totalorder %v866, 0
    %v868 = vsel %vm867, %v866, 0
    %v869 = vshrl.u32 %v868, 5
    %v870 = vand.u32 %v868, 31
    %v871 = vsub.s32 32, %v870
    %v872 = vshrl.u32 683565275, %v871
    %v873 = vshll.u32 683565275, %v870
    %v874 = vshrl.u32 2475754826, %v871
    %v875 = vor.u32 %v873, %v874
    %v876 = vshll.u32 2475754826, %v870
    %v877 = vshrl.u32 2131351028, %v871
    %v878 = vor.u32 %v876, %v877
    %v879 = vshll.u32 2131351028, %v870
    %v880 = vshrl.u32 2102212464, %v871
    %v881 = vor.u32 %v879, %v880
    %v882 = vshll.u32 2102212464, %v870
    %v883 = vshrl.u32 920167782, %v871
    %v884 = vor.u32 %v882, %v883
    %v885 = vshll.u32 920167782, %v870
    %v886 = vshrl.u32 1326507024, %v871
    %v887 = vor.u32 %v885, %v886
    %vm888 = vcmp.lt.s32.totalorder %v869, 1
    %vm889 = vcmp.lt.s32.totalorder %v869, 2
    %vm890 = vcmp.lt.s32.totalorder %v869, 3
    %vm891 = vcmp.lt.s32.totalorder %v869, 4
    %v892 = vsel %vm888, %v872, %v875
    %v893 = vsel %vm891, %v881, 2102212464
    %v894 = vsel %vm890, %v878, %v893
    %v895 = vsel %vm889, %v892, %v894
    %v896 = vsel %vm888, %v875, %v878
    %v897 = vsel %vm891, %v884, 920167782
    %v898 = vsel %vm890, %v881, %v897
    %v899 = vsel %vm889, %v896, %v898
    %v900 = vsel %vm888, %v878, %v881
    %v901 = vsel %vm891, %v887, 1326507024
    %v902 = vsel %vm890, %v884, %v901
    %v903 = vsel %vm889, %v900, %v902
    %v904 = vshll.u32 %v864, 8
    %v905 = vand.u32 %v904, 65535
    %v906 = vshrl.u32 %v904, 16
    %v907 = vand.u32 %v903, 65535
    %v908 = vshrl.u32 %v903, 16
    %v909 = vmul.u32 %v905, %v907
    %v910 = vmul.u32 %v905, %v908
    %v911 = vmul.u32 %v906, %v907
    %v912 = vmul.u32 %v906, %v908
    %v913 = vshll.u32 %v910, 16
    %v914 = vshrl.u32 %v910, 16
    %v915 = vshll.u32 %v911, 16
    %v916 = vshrl.u32 %v911, 16
    %vm917 = vc.u32 %v909, %v913
    %v918 = vsel %vm917, 1, 0
    %v919 = vadd.s32 %v909, %v913
    %v920 = vadd.s32 %v912, %v918
    %vm921 = vc.u32 %v919, %v915
    %v922 = vsel %vm921, 1, 0
    %v923 = vadd.s32 %v919, %v915
    %v924 = vadd.s32 %v920, %v922
    %v925 = vadd.s32 %v924, %v914
    %v926 = vadd.s32 %v925, %v916
    %v927 = vand.u32 %v904, 65535
    %v928 = vshrl.u32 %v904, 16
    %v929 = vand.u32 %v899, 65535
    %v930 = vshrl.u32 %v899, 16
    %v931 = vmul.u32 %v927, %v929
    %v932 = vmul.u32 %v927, %v930
    %v933 = vmul.u32 %v928, %v929
    %v934 = vmul.u32 %v928, %v930
    %v935 = vshll.u32 %v932, 16
    %v936 = vshrl.u32 %v932, 16
    %v937 = vshll.u32 %v933, 16
    %v938 = vshrl.u32 %v933, 16
    %vm939 = vc.u32 %v931, %v935
    %v940 = vsel %vm939, 1, 0
    %v941 = vadd.s32 %v931, %v935
    %v942 = vadd.s32 %v934, %v940
    %vm943 = vc.u32 %v941, %v937
    %v944 = vsel %vm943, 1, 0
    %v945 = vadd.s32 %v941, %v937
    %v946 = vadd.s32 %v942, %v944
    %v947 = vadd.s32 %v946, %v936
    %v948 = vadd.s32 %v947, %v938
    %v949 = vmul.u32 %v904, %v895
    %v950 = vadd.s32 %v926, %v945
    %vm951 = vc.u32 %v926, %v945
    %v952 = vadd.s32 %v948, 1
    %v953 = vsel %vm951, %v952, %v948
    %v954 = vadd.s32 %v949, %v953
    %v955 = vadd.s32 %v954, 536870912
    %v956 = vshrl.u32 %v955, 30
    %v957 = vshll.u32 %v956, 30
    %v958 = vsub.s32 %v954, %v957
    %vm959 = vcmp.lt.s32.totalorder %v958, 0
    %v960 = vsub.s32 0, %v958
    %v961 = vsel %vm959, %v960, %v958
    %v962 = vclz %v961
    %v963 = vsub.s32 %v962, 2
    %vm964 = vcmp.gt.s32.totalorder 0, %v963
    %v965 = vsel %vm964, 0, %v963
    %v966 = vsub.s32 32, %v965
    %v967 = vshll.u32 %v958, %v965
    %v968 = vshrl.u32 %v950, %v966
    %v969 = vor.u32 %v967, %v968
    %v970 = vsub.s32 4294967266, %v965
    %v971 = vadd.s32 %v970, 127
    %v972 = vshll.u32 %v971, 23
    %v973 = vor.u32 4788187, %v972
    %v974 = vand.u32 2147483647, %v973
    %v976 = vcvt.s32.f32 %v969
    %v977 = vmul.f32 %v976, %v974
    %v978 = vxor.u32 %v977, 2147483648
    %v979 = vsel %vm858, %v978, %v977
    %v980 = vsub.s32 4, %v956
    %v981 = vsel %vm858, %v980, %v956
    %v982 = vsel %vm857, %v701, %v979
    %v983 = vsel %vm857, 0, %v981
    %v984 = vmul.f32 %v982, %v982
    %v985 = vmul.f32 %v984, -0.001358992
    %v986 = vadd.f32 %v985, 0.041655596
    %v987 = vmul.f32 %v984, %v986
    %v988 = vadd.f32 %v987, -0.4999988
    %v989 = vmul.f32 %v984, %v988
    %v990 = vadd.f32 1.0, %v989
    %v991 = vmul.f32 %v982, %v982
    %v992 = vmul.f32 %v991, -0.00019511016
    %v993 = vadd.f32 %v992, 0.008332121
    %v994 = vmul.f32 %v991, %v993
    %v995 = vadd.f32 %v994, -0.16666654
    %v996 = vmul.f32 %v991, %v995
    %v997 = vadd.f32 %v996, 1.0
    %v998 = vmul.f32 %v997, %v982
    %vm999 = vweird.f32 %v701
    %v1000 = vand.u32 %v983, 3
    %vm1001 = vcmp.lt.s32.totalorder %v1000, 2
    %vm1002 = vcmp.eq.s32.totalorder %v1000, 0
    %v1003 = vxor.u32 %v998, 2147483648
    %v1004 = vsel %vm1002, %v990, %v1003
    %vm1005 = vcmp.eq.s32.totalorder %v1000, 2
    %v1006 = vxor.u32 %v990, 2147483648
    %v1007 = vsel %vm1005, %v1006, %v998
    %v1008 = vsel %vm1001, %v1004, %v1007
    %v1009 = vsel %vm999, nan, %v1008
    %v1010 = vand.u32 2147483647, %v700
    %vm1011 = vcmp.le.f32.partialorder %v1010, 0.7853982
    %vm1012 = vcmp.lt.s32.totalorder %v700, 0
    %v1013 = vand.u32 %v700, 2139095040
    %v1014 = vshrl.u32 %v1013, 23
    %v1015 = vsub.s32 %v1014, 127
    %v1016 = vand.u32 2147483647, %v700
    %v1017 = vand.u32 %v1016, 8388607
    %v1018 = vor.u32 %v1017, 8388608
    %v1019 = vsub.s32 0, %v1018
    %v1020 = vadd.s32 %v1015, 1
    %vm1021 = vcmp.gt.s32.totalorder %v1020, 0
    %v1022 = vsel %vm1021, %v1020, 0
    %v1023 = vshrl.u32 %v1022, 5
    %v1024 = vand.u32 %v1022, 31
    %v1025 = vsub.s32 32, %v1024
    %v1026 = vshrl.u32 683565275, %v1025
    %v1027 = vshll.u32 683565275, %v1024
    %v1028 = vshrl.u32 2475754826, %v1025
    %v1029 = vor.u32 %v1027, %v1028
    %v1030 = vshll.u32 2475754826, %v1024
    %v1031 = vshrl.u32 2131351028, %v1025
    %v1032 = vor.u32 %v1030, %v1031
    %v1033 = vshll.u32 2131351028, %v1024
    %v1034 = vshrl.u32 2102212464, %v1025
    %v1035 = vor.u32 %v1033, %v1034
    %v1036 = vshll.u32 2102212464, %v1024
    %v1037 = vshrl.u32 920167782, %v1025
    %v1038 = vor.u32 %v1036, %v1037
    %v1039 = vshll.u32 920167782, %v1024
    %v1040 = vshrl.u32 1326507024, %v1025
    %v1041 = vor.u32 %v1039, %v1040
    %vm1042 = vcmp.lt.s32.totalorder %v1023, 1
    %vm1043 = vcmp.lt.s32.totalorder %v1023, 2
    %vm1044 = vcmp.lt.s32.totalorder %v1023, 3
    %vm1045 = vcmp.lt.s32.totalorder %v1023, 4
    %v1046 = vsel %vm1042, %v1026, %v1029
    %v1047 = vsel %vm1045, %v1035, 2102212464
    %v1048 = vsel %vm1044, %v1032, %v1047
    %v1049 = vsel %vm1043, %v1046, %v1048
    %v1050 = vsel %vm1042, %v1029, %v1032
    %v1051 = vsel %vm1045, %v1038, 920167782
    %v1052 = vsel %vm1044, %v1035, %v1051
    %v1053 = vsel %vm1043, %v1050, %v1052
    %v1054 = vsel %vm1042, %v1032, %v1035
    %v1055 = vsel %vm1045, %v1041, 1326507024
    %v1056 = vsel %vm1044, %v1038, %v1055
    %v1057 = vsel %vm1043, %v1054, %v1056
    %v1058 = vshll.u32 %v1018, 8
    %v1059 = vand.u32 %v1058, 65535
    %v1060 = vshrl.u32 %v1058, 16
    %v1061 = vand.u32 %v1057, 65535
    %v1062 = vshrl.u32 %v1057, 16
    %v1063 = vmul.u32 %v1059, %v1061
    %v1064 = vmul.u32 %v1059, %v1062
    %v1065 = vmul.u32 %v1060, %v1061
    %v1066 = vmul.u32 %v1060, %v1062
    %v1067 = vshll.u32 %v1064, 16
    %v1068 = vshrl.u32 %v1064, 16
    %v1069 = vshll.u32 %v1065, 16
    %v1070 = vshrl.u32 %v1065, 16
    %vm1071 = vc.u32 %v1063, %v1067
    %v1072 = vsel %vm1071, 1, 0
    %v1073 = vadd.s32 %v1063, %v1067
    %v1074 = vadd.s32 %v1066, %v1072
    %vm1075 = vc.u32 %v1073, %v1069
    %v1076 = vsel %vm1075, 1, 0
    %v1077 = vadd.s32 %v1073, %v1069
    %v1078 = vadd.s32 %v1074, %v1076
    %v1079 = vadd.s32 %v1078, %v1068
    %v1080 = vadd.s32 %v1079, %v1070
    %v1081 = vand.u32 %v1058, 65535
    %v1082 = vshrl.u32 %v1058, 16
    %v1083 = vand.u32 %v1053, 65535
    %v1084 = vshrl.u32 %v1053, 16
    %v1085 = vmul.u32 %v1081, %v1083
    %v1086 = vmul.u32 %v1081, %v1084
    %v1087 = vmul.u32 %v1082, %v1083
    %v1088 = vmul.u32 %v1082, %v1084
    %v1089 = vshll.u32 %v1086, 16
    %v1090 = vshrl.u32 %v1086, 16
    %v1091 = vshll.u32 %v1087, 16
    %v1092 = vshrl.u32 %v1087, 16
    %vm1093 = vc.u32 %v1085, %v1089
    %v1094 = vsel %vm1093, 1, 0
    %v1095 = vadd.s32 %v1085, %v1089
    %v1096 = vadd.s32 %v1088, %v1094
    %vm1097 = vc.u32 %v1095, %v1091
    %v1098 = vsel %vm1097, 1, 0
    %v1099 = vadd.s32 %v1095, %v1091
    %v1100 = vadd.s32 %v1096, %v1098
    %v1101 = vadd.s32 %v1100, %v1090
    %v1102 = vadd.s32 %v1101, %v1092
    %v1103 = vmul.u32 %v1058, %v1049
    %v1104 = vadd.s32 %v1080, %v1099
    %vm1105 = vc.u32 %v1080, %v1099
    %v1106 = vadd.s32 %v1102, 1
    %v1107 = vsel %vm1105, %v1106, %v1102
    %v1108 = vadd.s32 %v1103, %v1107
    %v1109 = vadd.s32 %v1108, 536870912
    %v1110 = vshrl.u32 %v1109, 30
    %v1111 = vshll.u32 %v1110, 30
    %v1112 = vsub.s32 %v1108, %v1111
    %vm1113 = vcmp.lt.s32.totalorder %v1112, 0
    %v1114 = vsub.s32 0, %v1112
    %v1115 = vsel %vm1113, %v1114, %v1112
    %v1116 = vclz %v1115
    %v1117 = vsub.s32 %v1116, 2
    %vm1118 = vcmp.gt.s32.totalorder 0, %v1117
    %v1119 = vsel %vm1118, 0, %v1117
    %v1120 = vsub.s32 32, %v1119
    %v1121 = vshll.u32 %v1112, %v1119
    %v1122 = vshrl.u32 %v1104, %v1120
    %v1123 = vor.u32 %v1121, %v1122
    %v1124 = vsub.s32 4294967266, %v1119
    %v1125 = vadd.s32 %v1124, 127
    %v1126 = vshll.u32 %v1125, 23
    %v1127 = vor.u32 4788187, %v1126
    %v1128 = vand.u32 2147483647, %v1127
    %v1130 = vcvt.s32.f32 %v1123
    %v1131 = vmul.f32 %v1130, %v1128
    %v1132 = vxor.u32 %v1131, 2147483648
    %v1133 = vsel %vm1012, %v1132, %v1131
    %v1134 = vsub.s32 4, %v1110
    %v1135 = vsel %vm1012, %v1134, %v1110
    %v1136 = vsel %vm1011, %v700, %v1133
    %v1137 = vsel %vm1011, 0, %v1135
    %v1138 = vmul.f32 %v1136, %v1136
    %v1139 = vmul.f32 %v1138, -0.001358992
    %v1140 = vadd.f32 %v1139, 0.041655596
    %v1141 = vmul.f32 %v1138, %v1140
    %v1142 = vadd.f32 %v1141, -0.4999988
    %v1143 = vmul.f32 %v1138, %v1142
    %v1144 = vadd.f32 1.0, %v1143
    %v1145 = vmul.f32 %v1136, %v1136
    %v1146 = vmul.f32 %v1145, -0.00019511016
    %v1147 = vadd.f32 %v1146, 0.008332121
    %v1148 = vmul.f32 %v1145, %v1147
    %v1149 = vadd.f32 %v1148, -0.16666654
    %v1150 = vmul.f32 %v1145, %v1149
    %v1151 = vadd.f32 %v1150, 1.0
    %v1152 = vmul.f32 %v1151, %v1136
    %vm1153 = vweird.f32 %v700
    %v1154 = vadd.s32 %v1137, 3
    %v1155 = vand.u32 %v1154, 3
    %vm1156 = vcmp.lt.s32.totalorder %v1155, 2
    %vm1157 = vcmp.eq.s32.totalorder %v1155, 0
    %v1158 = vxor.u32 %v1152, 2147483648
    %v1159 = vsel %vm1157, %v1144, %v1158
    %vm1160 = vcmp.eq.s32.totalorder %v1155, 2
    %v1161 = vxor.u32 %v1144, 2147483648
    %v1162 = vsel %vm1160, %v1161, %v1152
    %v1163 = vsel %vm1156, %v1159, %v1162
    %v1164 = vsel %vm1153, nan, %v1163
    %v1165 = vand.u32 2147483647, %v701
    %vm1166 = vcmp.le.f32.partialorder %v1165, 0.7853982
    %vm1167 = vcmp.lt.s32.totalorder %v701, 0
    %v1168 = vand.u32 %v701, 2139095040
    %v1169 = vshrl.u32 %v1168, 23
    %v1170 = vsub.s32 %v1169, 127
    %v1171 = vand.u32 2147483647, %v701
    %v1172 = vand.u32 %v1171, 8388607
    %v1173 = vor.u32 %v1172, 8388608
    %v1174 = vsub.s32 0, %v1173
    %v1175 = vadd.s32 %v1170, 1
    %vm1176 = vcmp.gt.s32.totalorder %v1175, 0
    %v1177 = vsel %vm1176, %v1175, 0
    %v1178 = vshrl.u32 %v1177, 5
    %v1179 = vand.u32 %v1177, 31
    %v1180 = vsub.s32 32, %v1179
    %v1181 = vshrl.u32 683565275, %v1180
    %v1182 = vshll.u32 683565275, %v1179
    %v1183 = vshrl.u32 2475754826, %v1180
    %v1184 = vor.u32 %v1182, %v1183
    %v1185 = vshll.u32 2475754826, %v1179
    %v1186 = vshrl.u32 2131351028, %v1180
    %v1187 = vor.u32 %v1185, %v1186
    %v1188 = vshll.u32 2131351028, %v1179
    %v1189 = vshrl.u32 2102212464, %v1180
    %v1190 = vor.u32 %v1188, %v1189
    %v1191 = vshll.u32 2102212464, %v1179
    %v1192 = vshrl.u32 920167782, %v1180
    %v1193 = vor.u32 %v1191, %v1192
    %v1194 = vshll.u32 920167782, %v1179
    %v1195 = vshrl.u32 1326507024, %v1180
    %v1196 = vor.u32 %v1194, %v1195
    %vm1197 = vcmp.lt.s32.totalorder %v1178, 1
    %vm1198 = vcmp.lt.s32.totalorder %v1178, 2
    %vm1199 = vcmp.lt.s32.totalorder %v1178, 3
    %vm1200 = vcmp.lt.s32.totalorder %v1178, 4
    %v1201 = vsel %vm1197, %v1181, %v1184
    %v1202 = vsel %vm1200, %v1190, 2102212464
    %v1203 = vsel %vm1199, %v1187, %v1202
    %v1204 = vsel %vm1198, %v1201, %v1203
    %v1205 = vsel %vm1197, %v1184, %v1187
    %v1206 = vsel %vm1200, %v1193, 920167782
    %v1207 = vsel %vm1199, %v1190, %v1206
    %v1208 = vsel %vm1198, %v1205, %v1207
    %v1209 = vsel %vm1197, %v1187, %v1190
    %v1210 = vsel %vm1200, %v1196, 1326507024
    %v1211 = vsel %vm1199, %v1193, %v1210
    %v1212 = vsel %vm1198, %v1209, %v1211
    %v1213 = vshll.u32 %v1173, 8
    %v1214 = vand.u32 %v1213, 65535
    %v1215 = vshrl.u32 %v1213, 16
    %v1216 = vand.u32 %v1212, 65535
    %v1217 = vshrl.u32 %v1212, 16
    %v1218 = vmul.u32 %v1214, %v1216
    %v1219 = vmul.u32 %v1214, %v1217
    %v1220 = vmul.u32 %v1215, %v1216
    %v1221 = vmul.u32 %v1215, %v1217
    %v1222 = vshll.u32 %v1219, 16
    %v1223 = vshrl.u32 %v1219, 16
    %v1224 = vshll.u32 %v1220, 16
    %v1225 = vshrl.u32 %v1220, 16
    %vm1226 = vc.u32 %v1218, %v1222
    %v1227 = vsel %vm1226, 1, 0
    %v1228 = vadd.s32 %v1218, %v1222
    %v1229 = vadd.s32 %v1221, %v1227
    %vm1230 = vc.u32 %v1228, %v1224
    %v1231 = vsel %vm1230, 1, 0
    %v1232 = vadd.s32 %v1228, %v1224
    %v1233 = vadd.s32 %v1229, %v1231
    %v1234 = vadd.s32 %v1233, %v1223
    %v1235 = vadd.s32 %v1234, %v1225
    %v1236 = vand.u32 %v1213, 65535
    %v1237 = vshrl.u32 %v1213, 16
    %v1238 = vand.u32 %v1208, 65535
    %v1239 = vshrl.u32 %v1208, 16
    %v1240 = vmul.u32 %v1236, %v1238
    %v1241 = vmul.u32 %v1236, %v1239
    %v1242 = vmul.u32 %v1237, %v1238
    %v1243 = vmul.u32 %v1237, %v1239
    %v1244 = vshll.u32 %v1241, 16
    %v1245 = vshrl.u32 %v1241, 16
    %v1246 = vshll.u32 %v1242, 16
    %v1247 = vshrl.u32 %v1242, 16
    %vm1248 = vc.u32 %v1240, %v1244
    %v1249 = vsel %vm1248, 1, 0
    %v1250 = vadd.s32 %v1240, %v1244
    %v1251 = vadd.s32 %v1243, %v1249
    %vm1252 = vc.u32 %v1250, %v1246
    %v1253 = vsel %vm1252, 1, 0
    %v1254 = vadd.s32 %v1250, %v1246
    %v1255 = vadd.s32 %v1251, %v1253
    %v1256 = vadd.s32 %v1255, %v1245
    %v1257 = vadd.s32 %v1256, %v1247
    %v1258 = vmul.u32 %v1213, %v1204
    %v1259 = vadd.s32 %v1235, %v1254
    %vm1260 = vc.u32 %v1235, %v1254
    %v1261 = vadd.s32 %v1257, 1
    %v1262 = vsel %vm1260, %v1261, %v1257
    %v1263 = vadd.s32 %v1258, %v1262
    %v1264 = vadd.s32 %v1263, 536870912
    %v1265 = vshrl.u32 %v1264, 30
    %v1266 = vshll.u32 %v1265, 30
    %v1267 = vsub.s32 %v1263, %v1266
    %vm1268 = vcmp.lt.s32.totalorder %v1267, 0
    %v1269 = vsub.s32 0, %v1267
    %v1270 = vsel %vm1268, %v1269, %v1267
    %v1271 = vclz %v1270
    %v1272 = vsub.s32 %v1271, 2
    %vm1273 = vcmp.gt.s32.totalorder 0, %v1272
    %v1274 = vsel %vm1273, 0, %v1272
    %v1275 = vsub.s32 32, %v1274
    %v1276 = vshll.u32 %v1267, %v1274
    %v1277 = vshrl.u32 %v1259, %v1275
    %v1278 = vor.u32 %v1276, %v1277
    %v1279 = vsub.s32 4294967266, %v1274
    %v1280 = vadd.s32 %v1279, 127
    %v1281 = vshll.u32 %v1280, 23
    %v1282 = vor.u32 4788187, %v1281
    %v1283 = vand.u32 2147483647, %v1282
    %v1285 = vcvt.s32.f32 %v1278
    %v1286 = vmul.f32 %v1285, %v1283
    %v1287 = vxor.u32 %v1286, 2147483648
    %v1288 = vsel %vm1167, %v1287, %v1286
    %v1289 = vsub.s32 4, %v1265
    %v1290 = vsel %vm1167, %v1289, %v1265
    %v1291 = vsel %vm1166, %v701, %v1288
    %v1292 = vsel %vm1166, 0, %v1290
    %v1293 = vmul.f32 %v1291, %v1291
    %v1294 = vmul.f32 %v1293, -0.001358992
    %v1295 = vadd.f32 %v1294, 0.041655596
    %v1296 = vmul.f32 %v1293, %v1295
    %v1297 = vadd.f32 %v1296, -0.4999988
    %v1298 = vmul.f32 %v1293, %v1297
    %v1299 = vadd.f32 1.0, %v1298
    %v1300 = vmul.f32 %v1291, %v1291
    %v1301 = vmul.f32 %v1300, -0.00019511016
    %v1302 = vadd.f32 %v1301, 0.008332121
    %v1303 = vmul.f32 %v1300, %v1302
    %v1304 = vadd.f32 %v1303, -0.16666654
    %v1305 = vmul.f32 %v1300, %v1304
    %v1306 = vadd.f32 %v1305, 1.0
    %v1307 = vmul.f32 %v1306, %v1291
    %vm1308 = vweird.f32 %v701
    %v1309 = vadd.s32 %v1292, 3
    %v1310 = vand.u32 %v1309, 3
    %vm1311 = vcmp.lt.s32.totalorder %v1310, 2
    %vm1312 = vcmp.eq.s32.totalorder %v1310, 0
    %v1313 = vxor.u32 %v1307, 2147483648
    %v1314 = vsel %vm1312, %v1299, %v1313
    %vm1315 = vcmp.eq.s32.totalorder %v1310, 2
    %v1316 = vxor.u32 %v1299, 2147483648
    %v1317 = vsel %vm1315, %v1316, %v1307
    %v1318 = vsel %vm1311, %v1314, %v1317
    %v1319 = vsel %vm1308, nan, %v1318
    %v1320 = vmul.f32 %v1164, %v687
    %v1321 = vmul.f32 %v1319, %v697
    %v1322 = vmul.f32 %v1320, %v656
    %v1323 = vmul.f32 %v1321, %v657
    %v1324 = vmul.f32 %v1320, %v658
    %v1325 = vmul.f32 %v1321, %v659
    %v1326 = vmul.f32 %v1320, %v660
    %v1327 = vmul.f32 %v1321, %v661
    %v1328 = vmul.f32 %v855, %v855
    %v1329 = vmul.f32 %v1009, %v1009
    %v1330 = vmul.f32 %v1322, %v1322
    %v1331 = vmul.f32 %v1323, %v1323
    %v1332 = vadd.f32 %v1328, %v1330
    %v1333 = vadd.f32 %v1329, %v1331
    %v1334 = vmul.f32 %v1324, %v1324
    %v1335 = vmul.f32 %v1325, %v1325
    %v1336 = vadd.f32 %v1332, %v1334
    %v1337 = vadd.f32 %v1333, %v1335
    %v1338 = vmul.f32 %v1326, %v1326
    %v1339 = vmul.f32 %v1327, %v1327
    %v1340 = vadd.f32 %v1336, %v1338
    %v1341 = vadd.f32 %v1337, %v1339
    %v1342 = vrsqrt.pop %v1340
    %v1343 = vmul.f32 %v1342, %v1340
    %v1344 = vmul.f32 %v1343, %v1342
    %v1345 = vmul.f32 0.5, %v1344
    %v1346 = vsub.f32 1.5, %v1345
    %v1347 = vmul.f32 %v1342, %v1346
    %vm1348 = vweird.f32 %v1340
    %vm1349 = vweird.f32 %v1342
    %vm1350 = vmor %vm1348, %vm1349
    %v1351 = vsel %vm1350, %v1342, %v1347
    %v1352 = vrsqrt.pop %v1341
    %v1353 = vmul.f32 %v1352, %v1341
    %v1354 = vmul.f32 %v1353, %v1352
    %v1355 = vmul.f32 0.5, %v1354
    %v1356 = vsub.f32 1.5, %v1355
    %v1357 = vmul.f32 %v1352, %v1356
    %vm1358 = vweird.f32 %v1341
    %vm1359 = vweird.f32 %v1352
    %vm1360 = vmor %vm1358, %vm1359
    %v1361 = vsel %vm1360, %v1352, %v1357
    %v1362 = vmul.f32 %v855, %v1351
    %v1363 = vmul.f32 %v1009, %v1361
    %v1364 = vmul.f32 %v1322, %v1351
    %v1365 = vmul.f32 %v1323, %v1361
    %v1366 = vmul.f32 %v1324, %v1351
    %v1367 = vmul.f32 %v1325, %v1361
    %v1368 = vmul.f32 %v1326, %v1351
    %v1369 = vmul.f32 %v1327, %v1361
    %v1370 = vld [vmem:[#allocation22] sm:$0xff]
    %v1371 = vld [vmem:[#allocation22 + $0x8] sm:$0xff]
    %v1372 = vld [vmem:[#allocation23] sm:$0xff]
    %v1373 = vld [vmem:[#allocation23 + $0x8] sm:$0xff]
    %v1374 = vld [vmem:[#allocation25] sm:$0xff]
    %v1375 = vld [vmem:[#allocation25 + $0x8] sm:$0xff]
    %v1376 = vadd.f32 %v1370, 1e-08
    %v1377 = vadd.f32 %v1371, 1e-08
    %v1378 = vadd.f32 %v1372, 1e-08
    %v1379 = vadd.f32 %v1373, 1e-08
    %v1380 = vadd.f32 %v1374, 1e-08
    %v1381 = vadd.f32 %v1375, 1e-08
    %v1382 = vmul.f32 %v1376, %v1376
    %v1383 = vmul.f32 %v1377, %v1377
    %v1384 = vmul.f32 %v1378, %v1378
    %v1385 = vmul.f32 %v1379, %v1379
    %v1386 = vadd.f32 %v1382, %v1384
    %v1387 = vadd.f32 %v1383, %v1385
    %v1388 = vmul.f32 %v1380, %v1380
    %v1389 = vmul.f32 %v1381, %v1381
    %v1390 = vadd.f32 %v1386, %v1388
    %v1391 = vadd.f32 %v1387, %v1389
    %v1392 = vrsqrt.pop %v1390
    %v1393 = vmul.f32 %v1392, %v1390
    %v1394 = vmul.f32 %v1393, %v1392
    %v1395 = vmul.f32 0.5, %v1394
    %v1396 = vsub.f32 1.5, %v1395
    %v1397 = vmul.f32 %v1392, %v1396
    %vm1398 = vweird.f32 %v1390
    %vm1399 = vweird.f32 %v1392
    %vm1400 = vmor %vm1398, %vm1399
    %v1401 = vsel %vm1400, %v1392, %v1397
    %v1402 = vrsqrt.pop %v1391
    %v1403 = vmul.f32 %v1402, %v1391
    %v1404 = vmul.f32 %v1403, %v1402
    %v1405 = vmul.f32 0.5, %v1404
    %v1406 = vsub.f32 1.5, %v1405
    %v1407 = vmul.f32 %v1402, %v1406
    %vm1408 = vweird.f32 %v1391
    %vm1409 = vweird.f32 %v1402
    %vm1410 = vmor %vm1408, %vm1409
    %v1411 = vsel %vm1410, %v1402, %v1407
    %v1412 = vmul.f32 %v1390, 0.5
    %v1413 = vmul.f32 %v1391, 0.5
    %v1414 = vmul.f32 %v1412, %v1401
    %v1415 = vmul.f32 %v1413, %v1411
    %v1416 = vand.u32 2147483647, %v1414
    %vm1417 = vcmp.le.f32.partialorder %v1416, 0.7853982
    %vm1418 = vcmp.lt.s32.totalorder %v1414, 0
    %v1419 = vand.u32 %v1414, 2139095040
    %v1420 = vshrl.u32 %v1419, 23
    %v1421 = vsub.s32 %v1420, 127
    %v1422 = vand.u32 2147483647, %v1414
    %v1423 = vand.u32 %v1422, 8388607
    %v1424 = vor.u32 %v1423, 8388608
    %v1425 = vsub.s32 0, %v1424
    %v1426 = vadd.s32 %v1421, 1
    %vm1427 = vcmp.gt.s32.totalorder %v1426, 0
    %v1428 = vsel %vm1427, %v1426, 0
    %v1429 = vshrl.u32 %v1428, 5
    %v1430 = vand.u32 %v1428, 31
    %v1431 = vsub.s32 32, %v1430
    %v1432 = vshrl.u32 683565275, %v1431
    %v1433 = vshll.u32 683565275, %v1430
    %v1434 = vshrl.u32 2475754826, %v1431
    %v1435 = vor.u32 %v1433, %v1434
    %v1436 = vshll.u32 2475754826, %v1430
    %v1437 = vshrl.u32 2131351028, %v1431
    %v1438 = vor.u32 %v1436, %v1437
    %v1439 = vshll.u32 2131351028, %v1430
    %v1440 = vshrl.u32 2102212464, %v1431
    %v1441 = vor.u32 %v1439, %v1440
    %v1442 = vshll.u32 2102212464, %v1430
    %v1443 = vshrl.u32 920167782, %v1431
    %v1444 = vor.u32 %v1442, %v1443
    %v1445 = vshll.u32 920167782, %v1430
    %v1446 = vshrl.u32 1326507024, %v1431
    %v1447 = vor.u32 %v1445, %v1446
    %vm1448 = vcmp.lt.s32.totalorder %v1429, 1
    %vm1449 = vcmp.lt.s32.totalorder %v1429, 2
    %vm1450 = vcmp.lt.s32.totalorder %v1429, 3
    %vm1451 = vcmp.lt.s32.totalorder %v1429, 4
    %v1452 = vsel %vm1448, %v1432, %v1435
    %v1453 = vsel %vm1451, %v1441, 2102212464
    %v1454 = vsel %vm1450, %v1438, %v1453
    %v1455 = vsel %vm1449, %v1452, %v1454
    %v1456 = vsel %vm1448, %v1435, %v1438
    %v1457 = vsel %vm1451, %v1444, 920167782
    %v1458 = vsel %vm1450, %v1441, %v1457
    %v1459 = vsel %vm1449, %v1456, %v1458
    %v1460 = vsel %vm1448, %v1438, %v1441
    %v1461 = vsel %vm1451, %v1447, 1326507024
    %v1462 = vsel %vm1450, %v1444, %v1461
    %v1463 = vsel %vm1449, %v1460, %v1462
    %v1464 = vshll.u32 %v1424, 8
    %v1465 = vand.u32 %v1464, 65535
    %v1466 = vshrl.u32 %v1464, 16
    %v1467 = vand.u32 %v1463, 65535
    %v1468 = vshrl.u32 %v1463, 16
    %v1469 = vmul.u32 %v1465, %v1467
    %v1470 = vmul.u32 %v1465, %v1468
    %v1471 = vmul.u32 %v1466, %v1467
    %v1472 = vmul.u32 %v1466, %v1468
    %v1473 = vshll.u32 %v1470, 16
    %v1474 = vshrl.u32 %v1470, 16
    %v1475 = vshll.u32 %v1471, 16
    %v1476 = vshrl.u32 %v1471, 16
    %vm1477 = vc.u32 %v1469, %v1473
    %v1478 = vsel %vm1477, 1, 0
    %v1479 = vadd.s32 %v1469, %v1473
    %v1480 = vadd.s32 %v1472, %v1478
    %vm1481 = vc.u32 %v1479, %v1475
    %v1482 = vsel %vm1481, 1, 0
    %v1483 = vadd.s32 %v1479, %v1475
    %v1484 = vadd.s32 %v1480, %v1482
    %v1485 = vadd.s32 %v1484, %v1474
    %v1486 = vadd.s32 %v1485, %v1476
    %v1487 = vand.u32 %v1464, 65535
    %v1488 = vshrl.u32 %v1464, 16
    %v1489 = vand.u32 %v1459, 65535
    %v1490 = vshrl.u32 %v1459, 16
    %v1491 = vmul.u32 %v1487, %v1489
    %v1492 = vmul.u32 %v1487, %v1490
    %v1493 = vmul.u32 %v1488, %v1489
    %v1494 = vmul.u32 %v1488, %v1490
    %v1495 = vshll.u32 %v1492, 16
    %v1496 = vshrl.u32 %v1492, 16
    %v1497 = vshll.u32 %v1493, 16
    %v1498 = vshrl.u32 %v1493, 16
    %vm1499 = vc.u32 %v1491, %v1495
    %v1500 = vsel %vm1499, 1, 0
    %v1501 = vadd.s32 %v1491, %v1495
    %v1502 = vadd.s32 %v1494, %v1500
    %vm1503 = vc.u32 %v1501, %v1497
    %v1504 = vsel %vm1503, 1, 0
    %v1505 = vadd.s32 %v1501, %v1497
    %v1506 = vadd.s32 %v1502, %v1504
    %v1507 = vadd.s32 %v1506, %v1496
    %v1508 = vadd.s32 %v1507, %v1498
    %v1509 = vmul.u32 %v1464, %v1455
    %v1510 = vadd.s32 %v1486, %v1505
    %vm1511 = vc.u32 %v1486, %v1505
    %v1512 = vadd.s32 %v1508, 1
    %v1513 = vsel %vm1511, %v1512, %v1508
    %v1514 = vadd.s32 %v1509, %v1513
    %v1515 = vadd.s32 %v1514, 536870912
    %v1516 = vshrl.u32 %v1515, 30
    %v1517 = vshll.u32 %v1516, 30
    %v1518 = vsub.s32 %v1514, %v1517
    %vm1519 = vcmp.lt.s32.totalorder %v1518, 0
    %v1520 = vsub.s32 0, %v1518
    %v1521 = vsel %vm1519, %v1520, %v1518
    %v1522 = vclz %v1521
    %v1523 = vsub.s32 %v1522, 2
    %vm1524 = vcmp.gt.s32.totalorder 0, %v1523
    %v1525 = vsel %vm1524, 0, %v1523
    %v1526 = vsub.s32 32, %v1525
    %v1527 = vshll.u32 %v1518, %v1525
    %v1528 = vshrl.u32 %v1510, %v1526
    %v1529 = vor.u32 %v1527, %v1528
    %v1530 = vsub.s32 4294967266, %v1525
    %v1531 = vadd.s32 %v1530, 127
    %v1532 = vshll.u32 %v1531, 23
    %v1533 = vor.u32 4788187, %v1532
    %v1534 = vand.u32 2147483647, %v1533
    %v1536 = vcvt.s32.f32 %v1529
    %v1537 = vmul.f32 %v1536, %v1534
    %v1538 = vxor.u32 %v1537, 2147483648
    %v1539 = vsel %vm1418, %v1538, %v1537
    %v1540 = vsub.s32 4, %v1516
    %v1541 = vsel %vm1418, %v1540, %v1516
    %v1542 = vsel %vm1417, %v1414, %v1539
    %v1543 = vsel %vm1417, 0, %v1541
    %v1544 = vmul.f32 %v1542, %v1542
    %v1545 = vmul.f32 %v1544, -0.001358992
    %v1546 = vadd.f32 %v1545, 0.041655596
    %v1547 = vmul.f32 %v1544, %v1546
    %v1548 = vadd.f32 %v1547, -0.4999988
    %v1549 = vmul.f32 %v1544, %v1548
    %v1550 = vadd.f32 1.0, %v1549
    %v1551 = vmul.f32 %v1542, %v1542
    %v1552 = vmul.f32 %v1551, -0.00019511016
    %v1553 = vadd.f32 %v1552, 0.008332121
    %v1554 = vmul.f32 %v1551, %v1553
    %v1555 = vadd.f32 %v1554, -0.16666654
    %v1556 = vmul.f32 %v1551, %v1555
    %v1557 = vadd.f32 %v1556, 1.0
    %v1558 = vmul.f32 %v1557, %v1542
    %vm1559 = vweird.f32 %v1414
    %v1560 = vand.u32 %v1543, 3
    %vm1561 = vcmp.lt.s32.totalorder %v1560, 2
    %vm1562 = vcmp.eq.s32.totalorder %v1560, 0
    %v1563 = vxor.u32 %v1558, 2147483648
    %v1564 = vsel %vm1562, %v1550, %v1563
    %vm1565 = vcmp.eq.s32.totalorder %v1560, 2
    %v1566 = vxor.u32 %v1550, 2147483648
    %v1567 = vsel %vm1565, %v1566, %v1558
    %v1568 = vsel %vm1561, %v1564, %v1567
    %v1569 = vsel %vm1559, nan, %v1568
    %v1570 = vand.u32 2147483647, %v1415
    %vm1571 = vcmp.le.f32.partialorder %v1570, 0.7853982
    %vm1572 = vcmp.lt.s32.totalorder %v1415, 0
    %v1573 = vand.u32 %v1415, 2139095040
    %v1574 = vshrl.u32 %v1573, 23
    %v1575 = vsub.s32 %v1574, 127
    %v1576 = vand.u32 2147483647, %v1415
    %v1577 = vand.u32 %v1576, 8388607
    %v1578 = vor.u32 %v1577, 8388608
    %v1579 = vsub.s32 0, %v1578
    %v1580 = vadd.s32 %v1575, 1
    %vm1581 = vcmp.gt.s32.totalorder %v1580, 0
    %v1582 = vsel %vm1581, %v1580, 0
    %v1583 = vshrl.u32 %v1582, 5
    %v1584 = vand.u32 %v1582, 31
    %v1585 = vsub.s32 32, %v1584
    %v1586 = vshrl.u32 683565275, %v1585
    %v1587 = vshll.u32 683565275, %v1584
    %v1588 = vshrl.u32 2475754826, %v1585
    %v1589 = vor.u32 %v1587, %v1588
    %v1590 = vshll.u32 2475754826, %v1584
    %v1591 = vshrl.u32 2131351028, %v1585
    %v1592 = vor.u32 %v1590, %v1591
    %v1593 = vshll.u32 2131351028, %v1584
    %v1594 = vshrl.u32 2102212464, %v1585
    %v1595 = vor.u32 %v1593, %v1594
    %v1596 = vshll.u32 2102212464, %v1584
    %v1597 = vshrl.u32 920167782, %v1585
    %v1598 = vor.u32 %v1596, %v1597
    %v1599 = vshll.u32 920167782, %v1584
    %v1600 = vshrl.u32 1326507024, %v1585
    %v1601 = vor.u32 %v1599, %v1600
    %vm1602 = vcmp.lt.s32.totalorder %v1583, 1
    %vm1603 = vcmp.lt.s32.totalorder %v1583, 2
    %vm1604 = vcmp.lt.s32.totalorder %v1583, 3
    %vm1605 = vcmp.lt.s32.totalorder %v1583, 4
    %v1606 = vsel %vm1602, %v1586, %v1589
    %v1607 = vsel %vm1605, %v1595, 2102212464
    %v1608 = vsel %vm1604, %v1592, %v1607
    %v1609 = vsel %vm1603, %v1606, %v1608
    %v1610 = vsel %vm1602, %v1589, %v1592
    %v1611 = vsel %vm1605, %v1598, 920167782
    %v1612 = vsel %vm1604, %v1595, %v1611
    %v1613 = vsel %vm1603, %v1610, %v1612
    %v1614 = vsel %vm1602, %v1592, %v1595
    %v1615 = vsel %vm1605, %v1601, 1326507024
    %v1616 = vsel %vm1604, %v1598, %v1615
    %v1617 = vsel %vm1603, %v1614, %v1616
    %v1618 = vshll.u32 %v1578, 8
    %v1619 = vand.u32 %v1618, 65535
    %v1620 = vshrl.u32 %v1618, 16
    %v1621 = vand.u32 %v1617, 65535
    %v1622 = vshrl.u32 %v1617, 16
    %v1623 = vmul.u32 %v1619, %v1621
    %v1624 = vmul.u32 %v1619, %v1622
    %v1625 = vmul.u32 %v1620, %v1621
    %v1626 = vmul.u32 %v1620, %v1622
    %v1627 = vshll.u32 %v1624, 16
    %v1628 = vshrl.u32 %v1624, 16
    %v1629 = vshll.u32 %v1625, 16
    %v1630 = vshrl.u32 %v1625, 16
    %vm1631 = vc.u32 %v1623, %v1627
    %v1632 = vsel %vm1631, 1, 0
    %v1633 = vadd.s32 %v1623, %v1627
    %v1634 = vadd.s32 %v1626, %v1632
    %vm1635 = vc.u32 %v1633, %v1629
    %v1636 = vsel %vm1635, 1, 0
    %v1637 = vadd.s32 %v1633, %v1629
    %v1638 = vadd.s32 %v1634, %v1636
    %v1639 = vadd.s32 %v1638, %v1628
    %v1640 = vadd.s32 %v1639, %v1630
    %v1641 = vand.u32 %v1618, 65535
    %v1642 = vshrl.u32 %v1618, 16
    %v1643 = vand.u32 %v1613, 65535
    %v1644 = vshrl.u32 %v1613, 16
    %v1645 = vmul.u32 %v1641, %v1643
    %v1646 = vmul.u32 %v1641, %v1644
    %v1647 = vmul.u32 %v1642, %v1643
    %v1648 = vmul.u32 %v1642, %v1644
    %v1649 = vshll.u32 %v1646, 16
    %v1650 = vshrl.u32 %v1646, 16
    %v1651 = vshll.u32 %v1647, 16
    %v1652 = vshrl.u32 %v1647, 16
    %vm1653 = vc.u32 %v1645, %v1649
    %v1654 = vsel %vm1653, 1, 0
    %v1655 = vadd.s32 %v1645, %v1649
    %v1656 = vadd.s32 %v1648, %v1654
    %vm1657 = vc.u32 %v1655, %v1651
    %v1658 = vsel %vm1657, 1, 0
    %v1659 = vadd.s32 %v1655, %v1651
    %v1660 = vadd.s32 %v1656, %v1658
    %v1661 = vadd.s32 %v1660, %v1650
    %v1662 = vadd.s32 %v1661, %v1652
    %v1663 = vmul.u32 %v1618, %v1609
    %v1664 = vadd.s32 %v1640, %v1659
    %vm1665 = vc.u32 %v1640, %v1659
    %v1666 = vadd.s32 %v1662, 1
    %v1667 = vsel %vm1665, %v1666, %v1662
    %v1668 = vadd.s32 %v1663, %v1667
    %v1669 = vadd.s32 %v1668, 536870912
    %v1670 = vshrl.u32 %v1669, 30
    %v1671 = vshll.u32 %v1670, 30
    %v1672 = vsub.s32 %v1668, %v1671
    %vm1673 = vcmp.lt.s32.totalorder %v1672, 0
    %v1674 = vsub.s32 0, %v1672
    %v1675 = vsel %vm1673, %v1674, %v1672
    %v1676 = vclz %v1675
    %v1677 = vsub.s32 %v1676, 2
    %vm1678 = vcmp.gt.s32.totalorder 0, %v1677
    %v1679 = vsel %vm1678, 0, %v1677
    %v1680 = vsub.s32 32, %v1679
    %v1681 = vshll.u32 %v1672, %v1679
    %v1682 = vshrl.u32 %v1664, %v1680
    %v1683 = vor.u32 %v1681, %v1682
    %v1684 = vsub.s32 4294967266, %v1679
    %v1685 = vadd.s32 %v1684, 127
    %v1686 = vshll.u32 %v1685, 23
    %v1687 = vor.u32 4788187, %v1686
    %v1688 = vand.u32 2147483647, %v1687
    %v1690 = vcvt.s32.f32 %v1683
    %v1691 = vmul.f32 %v1690, %v1688
    %v1692 = vxor.u32 %v1691, 2147483648
    %v1693 = vsel %vm1572, %v1692, %v1691
    %v1694 = vsub.s32 4, %v1670
    %v1695 = vsel %vm1572, %v1694, %v1670
    %v1696 = vsel %vm1571, %v1415, %v1693
    %v1697 = vsel %vm1571, 0, %v1695
    %v1698 = vmul.f32 %v1696, %v1696
    %v1699 = vmul.f32 %v1698, -0.001358992
    %v1700 = vadd.f32 %v1699, 0.041655596
    %v1701 = vmul.f32 %v1698, %v1700
    %v1702 = vadd.f32 %v1701, -0.4999988
    %v1703 = vmul.f32 %v1698, %v1702
    %v1704 = vadd.f32 1.0, %v1703
    %v1705 = vmul.f32 %v1696, %v1696
    %v1706 = vmul.f32 %v1705, -0.00019511016
    %v1707 = vadd.f32 %v1706, 0.008332121
    %v1708 = vmul.f32 %v1705, %v1707
    %v1709 = vadd.f32 %v1708, -0.16666654
    %v1710 = vmul.f32 %v1705, %v1709
    %v1711 = vadd.f32 %v1710, 1.0
    %v1712 = vmul.f32 %v1711, %v1696
    %vm1713 = vweird.f32 %v1415
    %v1714 = vand.u32 %v1697, 3
    %vm1715 = vcmp.lt.s32.totalorder %v1714, 2
    %vm1716 = vcmp.eq.s32.totalorder %v1714, 0
    %v1717 = vxor.u32 %v1712, 2147483648
    %v1718 = vsel %vm1716, %v1704, %v1717
    %vm1719 = vcmp.eq.s32.totalorder %v1714, 2
    %v1720 = vxor.u32 %v1704, 2147483648
    %v1721 = vsel %vm1719, %v1720, %v1712
    %v1722 = vsel %vm1715, %v1718, %v1721
    %v1723 = vsel %vm1713, nan, %v1722
    %v1724 = vand.u32 2147483647, %v1414
    %vm1725 = vcmp.le.f32.partialorder %v1724, 0.7853982
    %vm1726 = vcmp.lt.s32.totalorder %v1414, 0
    %v1727 = vand.u32 %v1414, 2139095040
    %v1728 = vshrl.u32 %v1727, 23
    %v1729 = vsub.s32 %v1728, 127
    %v1730 = vand.u32 2147483647, %v1414
    %v1731 = vand.u32 %v1730, 8388607
    %v1732 = vor.u32 %v1731, 8388608
    %v1733 = vsub.s32 0, %v1732
    %v1734 = vadd.s32 %v1729, 1
    %vm1735 = vcmp.gt.s32.totalorder %v1734, 0
    %v1736 = vsel %vm1735, %v1734, 0
    %v1737 = vshrl.u32 %v1736, 5
    %v1738 = vand.u32 %v1736, 31
    %v1739 = vsub.s32 32, %v1738
    %v1740 = vshrl.u32 683565275, %v1739
    %v1741 = vshll.u32 683565275, %v1738
    %v1742 = vshrl.u32 2475754826, %v1739
    %v1743 = vor.u32 %v1741, %v1742
    %v1744 = vshll.u32 2475754826, %v1738
    %v1745 = vshrl.u32 2131351028, %v1739
    %v1746 = vor.u32 %v1744, %v1745
    %v1747 = vshll.u32 2131351028, %v1738
    %v1748 = vshrl.u32 2102212464, %v1739
    %v1749 = vor.u32 %v1747, %v1748
    %v1750 = vshll.u32 2102212464, %v1738
    %v1751 = vshrl.u32 920167782, %v1739
    %v1752 = vor.u32 %v1750, %v1751
    %v1753 = vshll.u32 920167782, %v1738
    %v1754 = vshrl.u32 1326507024, %v1739
    %v1755 = vor.u32 %v1753, %v1754
    %vm1756 = vcmp.lt.s32.totalorder %v1737, 1
    %vm1757 = vcmp.lt.s32.totalorder %v1737, 2
    %vm1758 = vcmp.lt.s32.totalorder %v1737, 3
    %vm1759 = vcmp.lt.s32.totalorder %v1737, 4
    %v1760 = vsel %vm1756, %v1740, %v1743
    %v1761 = vsel %vm1759, %v1749, 2102212464
    %v1762 = vsel %vm1758, %v1746, %v1761
    %v1763 = vsel %vm1757, %v1760, %v1762
    %v1764 = vsel %vm1756, %v1743, %v1746
    %v1765 = vsel %vm1759, %v1752, 920167782
    %v1766 = vsel %vm1758, %v1749, %v1765
    %v1767 = vsel %vm1757, %v1764, %v1766
    %v1768 = vsel %vm1756, %v1746, %v1749
    %v1769 = vsel %vm1759, %v1755, 1326507024
    %v1770 = vsel %vm1758, %v1752, %v1769
    %v1771 = vsel %vm1757, %v1768, %v1770
    %v1772 = vshll.u32 %v1732, 8
    %v1773 = vand.u32 %v1772, 65535
    %v1774 = vshrl.u32 %v1772, 16
    %v1775 = vand.u32 %v1771, 65535
    %v1776 = vshrl.u32 %v1771, 16
    %v1777 = vmul.u32 %v1773, %v1775
    %v1778 = vmul.u32 %v1773, %v1776
    %v1779 = vmul.u32 %v1774, %v1775
    %v1780 = vmul.u32 %v1774, %v1776
    %v1781 = vshll.u32 %v1778, 16
    %v1782 = vshrl.u32 %v1778, 16
    %v1783 = vshll.u32 %v1779, 16
    %v1784 = vshrl.u32 %v1779, 16
    %vm1785 = vc.u32 %v1777, %v1781
    %v1786 = vsel %vm1785, 1, 0
    %v1787 = vadd.s32 %v1777, %v1781
    %v1788 = vadd.s32 %v1780, %v1786
    %vm1789 = vc.u32 %v1787, %v1783
    %v1790 = vsel %vm1789, 1, 0
    %v1791 = vadd.s32 %v1787, %v1783
    %v1792 = vadd.s32 %v1788, %v1790
    %v1793 = vadd.s32 %v1792, %v1782
    %v1794 = vadd.s32 %v1793, %v1784
    %v1795 = vand.u32 %v1772, 65535
    %v1796 = vshrl.u32 %v1772, 16
    %v1797 = vand.u32 %v1767, 65535
    %v1798 = vshrl.u32 %v1767, 16
    %v1799 = vmul.u32 %v1795, %v1797
    %v1800 = vmul.u32 %v1795, %v1798
    %v1801 = vmul.u32 %v1796, %v1797
    %v1802 = vmul.u32 %v1796, %v1798
    %v1803 = vshll.u32 %v1800, 16
    %v1804 = vshrl.u32 %v1800, 16
    %v1805 = vshll.u32 %v1801, 16
    %v1806 = vshrl.u32 %v1801, 16
    %vm1807 = vc.u32 %v1799, %v1803
    %v1808 = vsel %vm1807, 1, 0
    %v1809 = vadd.s32 %v1799, %v1803
    %v1810 = vadd.s32 %v1802, %v1808
    %vm1811 = vc.u32 %v1809, %v1805
    %v1812 = vsel %vm1811, 1, 0
    %v1813 = vadd.s32 %v1809, %v1805
    %v1814 = vadd.s32 %v1810, %v1812
    %v1815 = vadd.s32 %v1814, %v1804
    %v1816 = vadd.s32 %v1815, %v1806
    %v1817 = vmul.u32 %v1772, %v1763
    %v1818 = vadd.s32 %v1794, %v1813
    %vm1819 = vc.u32 %v1794, %v1813
    %v1820 = vadd.s32 %v1816, 1
    %v1821 = vsel %vm1819, %v1820, %v1816
    %v1822 = vadd.s32 %v1817, %v1821
    %v1823 = vadd.s32 %v1822, 536870912
    %v1824 = vshrl.u32 %v1823, 30
    %v1825 = vshll.u32 %v1824, 30
    %v1826 = vsub.s32 %v1822, %v1825
    %vm1827 = vcmp.lt.s32.totalorder %v1826, 0
    %v1828 = vsub.s32 0, %v1826
    %v1829 = vsel %vm1827, %v1828, %v1826
    %v1830 = vclz %v1829
    %v1831 = vsub.s32 %v1830, 2
    %vm1832 = vcmp.gt.s32.totalorder 0, %v1831
    %v1833 = vsel %vm1832, 0, %v1831
    %v1834 = vsub.s32 32, %v1833
    %v1835 = vshll.u32 %v1826, %v1833
    %v1836 = vshrl.u32 %v1818, %v1834
    %v1837 = vor.u32 %v1835, %v1836
    %v1838 = vsub.s32 4294967266, %v1833
    %v1839 = vadd.s32 %v1838, 127
    %v1840 = vshll.u32 %v1839, 23
    %v1841 = vor.u32 4788187, %v1840
    %v1842 = vand.u32 2147483647, %v1841
    %v1844 = vcvt.s32.f32 %v1837
    %v1845 = vmul.f32 %v1844, %v1842
    %v1846 = vxor.u32 %v1845, 2147483648
    %v1847 = vsel %vm1726, %v1846, %v1845
    %v1848 = vsub.s32 4, %v1824
    %v1849 = vsel %vm1726, %v1848, %v1824
    %v1850 = vsel %vm1725, %v1414, %v1847
    %v1851 = vsel %vm1725, 0, %v1849
    %v1852 = vmul.f32 %v1850, %v1850
    %v1853 = vmul.f32 %v1852, -0.001358992
    %v1854 = vadd.f32 %v1853, 0.041655596
    %v1855 = vmul.f32 %v1852, %v1854
    %v1856 = vadd.f32 %v1855, -0.4999988
    %v1857 = vmul.f32 %v1852, %v1856
    %v1858 = vadd.f32 1.0, %v1857
    %v1859 = vmul.f32 %v1850, %v1850
    %v1860 = vmul.f32 %v1859, -0.00019511016
    %v1861 = vadd.f32 %v1860, 0.008332121
    %v1862 = vmul.f32 %v1859, %v1861
    %v1863 = vadd.f32 %v1862, -0.16666654
    %v1864 = vmul.f32 %v1859, %v1863
    %v1865 = vadd.f32 %v1864, 1.0
    %v1866 = vmul.f32 %v1865, %v1850
    %vm1867 = vweird.f32 %v1414
    %v1868 = vadd.s32 %v1851, 3
    %v1869 = vand.u32 %v1868, 3
    %vm1870 = vcmp.lt.s32.totalorder %v1869, 2
    %vm1871 = vcmp.eq.s32.totalorder %v1869, 0
    %v1872 = vxor.u32 %v1866, 2147483648
    %v1873 = vsel %vm1871, %v1858, %v1872
    %vm1874 = vcmp.eq.s32.totalorder %v1869, 2
    %v1875 = vxor.u32 %v1858, 2147483648
    %v1876 = vsel %vm1874, %v1875, %v1866
    %v1877 = vsel %vm1870, %v1873, %v1876
    %v1878 = vsel %vm1867, nan, %v1877
    %v1879 = vand.u32 2147483647, %v1415
    %vm1880 = vcmp.le.f32.partialorder %v1879, 0.7853982
    %vm1881 = vcmp.lt.s32.totalorder %v1415, 0
    %v1882 = vand.u32 %v1415, 2139095040
    %v1883 = vshrl.u32 %v1882, 23
    %v1884 = vsub.s32 %v1883, 127
    %v1885 = vand.u32 2147483647, %v1415
    %v1886 = vand.u32 %v1885, 8388607
    %v1887 = vor.u32 %v1886, 8388608
    %v1888 = vsub.s32 0, %v1887
    %v1889 = vadd.s32 %v1884, 1
    %vm1890 = vcmp.gt.s32.totalorder %v1889, 0
    %v1891 = vsel %vm1890, %v1889, 0
    %v1892 = vshrl.u32 %v1891, 5
    %v1893 = vand.u32 %v1891, 31
    %v1894 = vsub.s32 32, %v1893
    %v1895 = vshrl.u32 683565275, %v1894
    %v1896 = vshll.u32 683565275, %v1893
    %v1897 = vshrl.u32 2475754826, %v1894
    %v1898 = vor.u32 %v1896, %v1897
    %v1899 = vshll.u32 2475754826, %v1893
    %v1900 = vshrl.u32 2131351028, %v1894
    %v1901 = vor.u32 %v1899, %v1900
    %v1902 = vshll.u32 2131351028, %v1893
    %v1903 = vshrl.u32 2102212464, %v1894
    %v1904 = vor.u32 %v1902, %v1903
    %v1905 = vshll.u32 2102212464, %v1893
    %v1906 = vshrl.u32 920167782, %v1894
    %v1907 = vor.u32 %v1905, %v1906
    %v1908 = vshll.u32 920167782, %v1893
    %v1909 = vshrl.u32 1326507024, %v1894
    %v1910 = vor.u32 %v1908, %v1909
    %vm1911 = vcmp.lt.s32.totalorder %v1892, 1
    %vm1912 = vcmp.lt.s32.totalorder %v1892, 2
    %vm1913 = vcmp.lt.s32.totalorder %v1892, 3
    %vm1914 = vcmp.lt.s32.totalorder %v1892, 4
    %v1915 = vsel %vm1911, %v1895, %v1898
    %v1916 = vsel %vm1914, %v1904, 2102212464
    %v1917 = vsel %vm1913, %v1901, %v1916
    %v1918 = vsel %vm1912, %v1915, %v1917
    %v1919 = vsel %vm1911, %v1898, %v1901
    %v1920 = vsel %vm1914, %v1907, 920167782
    %v1921 = vsel %vm1913, %v1904, %v1920
    %v1922 = vsel %vm1912, %v1919, %v1921
    %v1923 = vsel %vm1911, %v1901, %v1904
    %v1924 = vsel %vm1914, %v1910, 1326507024
    %v1925 = vsel %vm1913, %v1907, %v1924
    %v1926 = vsel %vm1912, %v1923, %v1925
    %v1927 = vshll.u32 %v1887, 8
    %v1928 = vand.u32 %v1927, 65535
    %v1929 = vshrl.u32 %v1927, 16
    %v1930 = vand.u32 %v1926, 65535
    %v1931 = vshrl.u32 %v1926, 16
    %v1932 = vmul.u32 %v1928, %v1930
    %v1933 = vmul.u32 %v1928, %v1931
    %v1934 = vmul.u32 %v1929, %v1930
    %v1935 = vmul.u32 %v1929, %v1931
    %v1936 = vshll.u32 %v1933, 16
    %v1937 = vshrl.u32 %v1933, 16
    %v1938 = vshll.u32 %v1934, 16
    %v1939 = vshrl.u32 %v1934, 16
    %vm1940 = vc.u32 %v1932, %v1936
    %v1941 = vsel %vm1940, 1, 0
    %v1942 = vadd.s32 %v1932, %v1936
    %v1943 = vadd.s32 %v1935, %v1941
    %vm1944 = vc.u32 %v1942, %v1938
    %v1945 = vsel %vm1944, 1, 0
    %v1946 = vadd.s32 %v1942, %v1938
    %v1947 = vadd.s32 %v1943, %v1945
    %v1948 = vadd.s32 %v1947, %v1937
    %v1949 = vadd.s32 %v1948, %v1939
    %v1950 = vand.u32 %v1927, 65535
    %v1951 = vshrl.u32 %v1927, 16
    %v1952 = vand.u32 %v1922, 65535
    %v1953 = vshrl.u32 %v1922, 16
    %v1954 = vmul.u32 %v1950, %v1952
    %v1955 = vmul.u32 %v1950, %v1953
    %v1956 = vmul.u32 %v1951, %v1952
    %v1957 = vmul.u32 %v1951, %v1953
    %v1958 = vshll.u32 %v1955, 16
    %v1959 = vshrl.u32 %v1955, 16
    %v1960 = vshll.u32 %v1956, 16
    %v1961 = vshrl.u32 %v1956, 16
    %vm1962 = vc.u32 %v1954, %v1958
    %v1963 = vsel %vm1962, 1, 0
    %v1964 = vadd.s32 %v1954, %v1958
    %v1965 = vadd.s32 %v1957, %v1963
    %vm1966 = vc.u32 %v1964, %v1960
    %v1967 = vsel %vm1966, 1, 0
    %v1968 = vadd.s32 %v1964, %v1960
    %v1969 = vadd.s32 %v1965, %v1967
    %v1970 = vadd.s32 %v1969, %v1959
    %v1971 = vadd.s32 %v1970, %v1961
    %v1972 = vmul.u32 %v1927, %v1918
    %v1973 = vadd.s32 %v1949, %v1968
    %vm1974 = vc.u32 %v1949, %v1968
    %v1975 = vadd.s32 %v1971, 1
    %v1976 = vsel %vm1974, %v1975, %v1971
    %v1977 = vadd.s32 %v1972, %v1976
    %v1978 = vadd.s32 %v1977, 536870912
    %v1979 = vshrl.u32 %v1978, 30
    %v1980 = vshll.u32 %v1979, 30
    %v1981 = vsub.s32 %v1977, %v1980
    %vm1982 = vcmp.lt.s32.totalorder %v1981, 0
    %v1983 = vsub.s32 0, %v1981
    %v1984 = vsel %vm1982, %v1983, %v1981
    %v1985 = vclz %v1984
    %v1986 = vsub.s32 %v1985, 2
    %vm1987 = vcmp.gt.s32.totalorder 0, %v1986
    %v1988 = vsel %vm1987, 0, %v1986
    %v1989 = vsub.s32 32, %v1988
    %v1990 = vshll.u32 %v1981, %v1988
    %v1991 = vshrl.u32 %v1973, %v1989
    %v1992 = vor.u32 %v1990, %v1991
    %v1993 = vsub.s32 4294967266, %v1988
    %v1994 = vadd.s32 %v1993, 127
    %v1995 = vshll.u32 %v1994, 23
    %v1996 = vor.u32 4788187, %v1995
    %v1997 = vand.u32 2147483647, %v1996
    %v1999 = vcvt.s32.f32 %v1992
    %v2000 = vmul.f32 %v1999, %v1997
    %v2001 = vxor.u32 %v2000, 2147483648
    %v2002 = vsel %vm1881, %v2001, %v2000
    %v2003 = vsub.s32 4, %v1979
    %v2004 = vsel %vm1881, %v2003, %v1979
    %v2005 = vsel %vm1880, %v1415, %v2002
    %v2006 = vsel %vm1880, 0, %v2004
    %v2007 = vmul.f32 %v2005, %v2005
    %v2008 = vmul.f32 %v2007, -0.001358992
    %v2009 = vadd.f32 %v2008, 0.041655596
    %v2010 = vmul.f32 %v2007, %v2009
    %v2011 = vadd.f32 %v2010, -0.4999988
    %v2012 = vmul.f32 %v2007, %v2011
    %v2013 = vadd.f32 1.0, %v2012
    %v2014 = vmul.f32 %v2005, %v2005
    %v2015 = vmul.f32 %v2014, -0.00019511016
    %v2016 = vadd.f32 %v2015, 0.008332121
    %v2017 = vmul.f32 %v2014, %v2016
    %v2018 = vadd.f32 %v2017, -0.16666654
    %v2019 = vmul.f32 %v2014, %v2018
    %v2020 = vadd.f32 %v2019, 1.0
    %v2021 = vmul.f32 %v2020, %v2005
    %vm2022 = vweird.f32 %v1415
    %v2023 = vadd.s32 %v2006, 3
    %v2024 = vand.u32 %v2023, 3
    %vm2025 = vcmp.lt.s32.totalorder %v2024, 2
    %vm2026 = vcmp.eq.s32.totalorder %v2024, 0
    %v2027 = vxor.u32 %v2021, 2147483648
    %v2028 = vsel %vm2026, %v2013, %v2027
    %vm2029 = vcmp.eq.s32.totalorder %v2024, 2
    %v2030 = vxor.u32 %v2013, 2147483648
    %v2031 = vsel %vm2029, %v2030, %v2021
    %v2032 = vsel %vm2025, %v2028, %v2031
    %v2033 = vsel %vm2022, nan, %v2032
    %v2034 = vmul.f32 %v1878, %v1401
    %v2035 = vmul.f32 %v2033, %v1411
    %v2036 = vmul.f32 %v2034, %v1370
    %v2037 = vmul.f32 %v2035, %v1371
    %v2038 = vmul.f32 %v2034, %v1372
    %v2039 = vmul.f32 %v2035, %v1373
    %v2040 = vmul.f32 %v2034, %v1374
    %v2041 = vmul.f32 %v2035, %v1375
    %v2042 = vmul.f32 %v1569, %v1569
    %v2043 = vmul.f32 %v1723, %v1723
    %v2044 = vmul.f32 %v2036, %v2036
    %v2045 = vmul.f32 %v2037, %v2037
    %v2046 = vadd.f32 %v2042, %v2044
    %v2047 = vadd.f32 %v2043, %v2045
    %v2048 = vmul.f32 %v2038, %v2038
    %v2049 = vmul.f32 %v2039, %v2039
    %v2050 = vadd.f32 %v2046, %v2048
    %v2051 = vadd.f32 %v2047, %v2049
    %v2052 = vmul.f32 %v2040, %v2040
    %v2053 = vmul.f32 %v2041, %v2041
    %v2054 = vadd.f32 %v2050, %v2052
    %v2055 = vadd.f32 %v2051, %v2053
    %v2056 = vrsqrt.pop %v2054
    %v2057 = vmul.f32 %v2056, %v2054
    %v2058 = vmul.f32 %v2057, %v2056
    %v2059 = vmul.f32 0.5, %v2058
    %v2060 = vsub.f32 1.5, %v2059
    %v2061 = vmul.f32 %v2056, %v2060
    %vm2062 = vweird.f32 %v2054
    %vm2063 = vweird.f32 %v2056
    %vm2064 = vmor %vm2062, %vm2063
    %v2065 = vsel %vm2064, %v2056, %v2061
    %v2066 = vrsqrt.pop %v2055
    %v2067 = vmul.f32 %v2066, %v2055
    %v2068 = vmul.f32 %v2067, %v2066
    %v2069 = vmul.f32 0.5, %v2068
    %v2070 = vsub.f32 1.5, %v2069
    %v2071 = vmul.f32 %v2066, %v2070
    %vm2072 = vweird.f32 %v2055
    %vm2073 = vweird.f32 %v2066
    %vm2074 = vmor %vm2072, %vm2073
    %v2075 = vsel %vm2074, %v2066, %v2071
    %v2076 = vmul.f32 %v1569, %v2065
    %v2077 = vmul.f32 %v1723, %v2075
    %v2078 = vmul.f32 %v2036, %v2065
    %v2079 = vmul.f32 %v2037, %v2075
    %v2080 = vmul.f32 %v2038, %v2065
    %v2081 = vmul.f32 %v2039, %v2075
    %v2082 = vmul.f32 %v2040, %v2065
    %v2083 = vmul.f32 %v2041, %v2075
    %v2084 = vmul.f32 %v1362, %v1362
    %v2085 = vmul.f32 %v1363, %v1363
    %v2086 = vmul.f32 %v1364, %v1364
    %v2087 = vmul.f32 %v1365, %v1365
    %v2088 = vadd.f32 %v2084, %v2086
    %v2089 = vadd.f32 %v2085, %v2087
    %v2090 = vmul.f32 %v1366, %v1366
    %v2091 = vmul.f32 %v1367, %v1367
    %v2092 = vsub.f32 %v2088, %v2090
    %v2093 = vsub.f32 %v2089, %v2091
    %v2094 = vmul.f32 %v1368, %v1368
    %v2095 = vmul.f32 %v1369, %v1369
    %v2096 = vsub.f32 %v2092, %v2094
    %v2097 = vsub.f32 %v2093, %v2095
    %v2098 = vmul.f32 %v2076, %v2076
    %v2099 = vmul.f32 %v2077, %v2077
    %v2100 = vmul.f32 %v2078, %v2078
    %v2101 = vmul.f32 %v2079, %v2079
    %v2102 = vadd.f32 %v2098, %v2100
    %v2103 = vadd.f32 %v2099, %v2101
    %v2104 = vmul.f32 %v2080, %v2080
    %v2105 = vmul.f32 %v2081, %v2081
    %v2106 = vsub.f32 %v2102, %v2104
    %v2107 = vsub.f32 %v2103, %v2105
    %v2108 = vmul.f32 %v2082, %v2082
    %v2109 = vmul.f32 %v2083, %v2083
    %v2110 = vsub.f32 %v2106, %v2108
    %v2111 = vsub.f32 %v2107, %v2109
    %v2112 = vsub.f32 %v2096, %v2110
    %v2113 = vsub.f32 %v2097, %v2111
    %v2114 = vmul.f32 %v2112, %v2112
    %v2115 = vmul.f32 %v2113, %v2113
    %v2116 = vadd.f32 %v2114, 0.0
    %v2117 = vadd.f32 %v2115, 0.0
    %v2118 = vmul.f32 %v1364, %v1366
    %v2119 = vmul.f32 %v1365, %v1367
    %v2120 = vmul.f32 %v1362, %v1368
    %v2121 = vmul.f32 %v1363, %v1369
    %v2122 = vsub.f32 %v2118, %v2120
    %v2123 = vsub.f32 %v2119, %v2121
    %v2124 = vmul.f32 %v2122, 2.0
    %v2125 = vmul.f32 %v2123, 2.0
    %v2126 = vmul.f32 %v2078, %v2080
    %v2127 = vmul.f32 %v2079, %v2081
    %v2128 = vmul.f32 %v2076, %v2082
    %v2129 = vmul.f32 %v2077, %v2083
    %v2130 = vsub.f32 %v2126, %v2128
    %v2131 = vsub.f32 %v2127, %v2129
    %v2132 = vmul.f32 %v2130, 2.0
    %v2133 = vmul.f32 %v2131, 2.0
    %v2134 = vsub.f32 %v2124, %v2132
    %v2135 = vsub.f32 %v2125, %v2133
    %v2136 = vmul.f32 %v2134, %v2134
    %v2137 = vmul.f32 %v2135, %v2135
    %v2138 = vadd.f32 %v2116, %v2136
    %v2139 = vadd.f32 %v2117, %v2137
    %v2140 = vmul.f32 %v1362, %v1366
    %v2141 = vmul.f32 %v1363, %v1367
    %v2142 = vmul.f32 %v1364, %v1368
    %v2143 = vmul.f32 %v1365, %v1369
    %v2144 = vadd.f32 %v2140, %v2142
    %v2145 = vadd.f32 %v2141, %v2143
    %v2146 = vmul.f32 %v2144, 2.0
    %v2147 = vmul.f32 %v2145, 2.0
    %v2148 = vmul.f32 %v2076, %v2080
    %v2149 = vmul.f32 %v2077, %v2081
    %v2150 = vmul.f32 %v2078, %v2082
    %v2151 = vmul.f32 %v2079, %v2083
    %v2152 = vadd.f32 %v2148, %v2150
    %v2153 = vadd.f32 %v2149, %v2151
    %v2154 = vmul.f32 %v2152, 2.0
    %v2155 = vmul.f32 %v2153, 2.0
    %v2156 = vsub.f32 %v2146, %v2154
    %v2157 = vsub.f32 %v2147, %v2155
    %v2158 = vmul.f32 %v2156, %v2156
    %v2159 = vmul.f32 %v2157, %v2157
    %v2160 = vadd.f32 %v2138, %v2158
    %v2161 = vadd.f32 %v2139, %v2159
    %v2162 = vadd.f32 %v2120, %v2118
    %v2163 = vadd.f32 %v2121, %v2119
    %v2164 = vmul.f32 %v2162, 2.0
    %v2165 = vmul.f32 %v2163, 2.0
    %v2166 = vadd.f32 %v2128, %v2126
    %v2167 = vadd.f32 %v2129, %v2127
    %v2168 = vmul.f32 %v2166, 2.0
    %v2169 = vmul.f32 %v2167, 2.0
    %v2170 = vsub.f32 %v2164, %v2168
    %v2171 = vsub.f32 %v2165, %v2169
    %v2172 = vmul.f32 %v2170, %v2170
    %v2173 = vmul.f32 %v2171, %v2171
    %v2174 = vadd.f32 %v2160, %v2172
    %v2175 = vadd.f32 %v2161, %v2173
    %v2176 = vsub.f32 %v2084, %v2086
    %v2177 = vsub.f32 %v2085, %v2087
    %v2178 = vadd.f32 %v2176, %v2090
    %v2179 = vadd.f32 %v2177, %v2091
    %v2180 = vsub.f32 %v2178, %v2094
    %v2181 = vsub.f32 %v2179, %v2095
    %v2182 = vsub.f32 %v2098, %v2100
    %v2183 = vsub.f32 %v2099, %v2101
    %v2184 = vadd.f32 %v2182, %v2104
    %v2185 = vadd.f32 %v2183, %v2105
    %v2186 = vsub.f32 %v2184, %v2108
    %v2187 = vsub.f32 %v2185, %v2109
    %v2188 = vsub.f32 %v2180, %v2186
    %v2189 = vsub.f32 %v2181, %v2187
    %v2190 = vmul.f32 %v2188, %v2188
    %v2191 = vmul.f32 %v2189, %v2189
    %v2192 = vadd.f32 %v2174, %v2190
    %v2193 = vadd.f32 %v2175, %v2191
    %v2194 = vmul.f32 %v1366, %v1368
    %v2195 = vmul.f32 %v1367, %v1369
    %v2196 = vmul.f32 %v1362, %v1364
    %v2197 = vmul.f32 %v1363, %v1365
    %v2198 = vsub.f32 %v2194, %v2196
    %v2199 = vsub.f32 %v2195, %v2197
    %v2200 = vmul.f32 %v2198, 2.0
    %v2201 = vmul.f32 %v2199, 2.0
    %v2202 = vmul.f32 %v2080, %v2082
    %v2203 = vmul.f32 %v2081, %v2083
    %v2204 = vmul.f32 %v2076, %v2078
    %v2205 = vmul.f32 %v2077, %v2079
    %v2206 = vsub.f32 %v2202, %v2204
    %v2207 = vsub.f32 %v2203, %v2205
    %v2208 = vmul.f32 %v2206, 2.0
    %v2209 = vmul.f32 %v2207, 2.0
    %v2210 = vsub.f32 %v2200, %v2208
    %v2211 = vsub.f32 %v2201, %v2209
    %v2212 = vmul.f32 %v2210, %v2210
    %v2213 = vmul.f32 %v2211, %v2211
    %v2214 = vadd.f32 %v2192, %v2212
    %v2215 = vadd.f32 %v2193, %v2213
    %v2216 = vsub.f32 %v2142, %v2140
    %v2217 = vsub.f32 %v2143, %v2141
    %v2218 = vmul.f32 %v2216, 2.0
    %v2219 = vmul.f32 %v2217, 2.0
    %v2220 = vsub.f32 %v2150, %v2148
    %v2221 = vsub.f32 %v2151, %v2149
    %v2222 = vmul.f32 %v2220, 2.0
    %v2223 = vmul.f32 %v2221, 2.0
    %v2224 = vsub.f32 %v2218, %v2222
    %v2225 = vsub.f32 %v2219, %v2223
    %v2226 = vmul.f32 %v2224, %v2224
    %v2227 = vmul.f32 %v2225, %v2225
    %v2228 = vadd.f32 %v2214, %v2226
    %v2229 = vadd.f32 %v2215, %v2227
    %v2230 = vadd.f32 %v2196, %v2194
    %v2231 = vadd.f32 %v2197, %v2195
    %v2232 = vmul.f32 %v2230, 2.0
    %v2233 = vmul.f32 %v2231, 2.0
    %v2234 = vadd.f32 %v2204, %v2202
    %v2235 = vadd.f32 %v2205, %v2203
    %v2236 = vmul.f32 %v2234, 2.0
    %v2237 = vmul.f32 %v2235, 2.0
    %v2238 = vsub.f32 %v2232, %v2236
    %v2239 = vsub.f32 %v2233, %v2237
    %v2240 = vmul.f32 %v2238, %v2238
    %v2241 = vmul.f32 %v2239, %v2239
    %v2242 = vadd.f32 %v2228, %v2240
    %v2243 = vadd.f32 %v2229, %v2241
    %v2244 = vsub.f32 %v2176, %v2090
    %v2245 = vsub.f32 %v2177, %v2091
    %v2246 = vadd.f32 %v2244, %v2094
    %v2247 = vadd.f32 %v2245, %v2095
    %v2248 = vsub.f32 %v2182, %v2104
    %v2249 = vsub.f32 %v2183, %v2105
    %v2250 = vadd.f32 %v2248, %v2108
    %v2251 = vadd.f32 %v2249, %v2109
    %v2252 = vsub.f32 %v2246, %v2250
    %v2253 = vsub.f32 %v2247, %v2251
    %v2254 = vmul.f32 %v2252, %v2252
    %v2255 = vmul.f32 %v2253, %v2253
    %v2256 = vadd.f32 %v2242, %v2254
    %v2257 = vadd.f32 %v2243, %v2255
    %2259 = vset.pattern.permute.xlu0 0
    %2260 = vperm.xlu0 %2259, %v654
    %v2261 = vpop.permute.xlu0 %2260
    %2264 = vset.pattern.permute.xlu0 0
    %2265 = vperm.xlu0 %2264, %v655
    %v2266 = vpop.permute.xlu0 %2265
    %v2268 = vmul.f32 %v2261, %v2256
    %v2269 = vmul.f32 %v2266, %v2257
    %vm2270 = vcmask 195584
    %v2271 = vsel %vm2270, %v2268, 0.0
    %v2272 = vsel %vm2270, %v2269, 0.0
    %v2273 = vadd.f32 %v2271, %v2272
    %2274 = vadd.xlane.f32.xlu0 %v2273
    %v2275 = vpop.xlane.xlu0 %2274
    %v2276 = vrot.slane %v2275, 4
    %v2277 = vadd.f32 %v2275, %v2276
    %v2278 = vrot.slane %v2277, 2
    %v2279 = vadd.f32 %v2277, %v2278
    %v2280 = vrot.slane %v2279, 1
    %v2281 = vadd.f32 %v2279, %v2280
    %s2282 = vtos %v2281
    %v2283 = vld [vmem:[#allocation26] sm:$0xff]
    %v2284 = vld [vmem:[#allocation26 + $0x8] sm:$0xff]
    %v2285 = vld [vmem:[#allocation28] sm:$0xff]
    %v2286 = vld [vmem:[#allocation28 + $0x8] sm:$0xff]
    %v2287 = vsub.f32 %v2283, %v2285
    %v2288 = vsub.f32 %v2284, %v2286
    %v2289 = vmul.f32 %v2261, %v2287
    %v2290 = vmul.f32 %v2266, %v2288
    %v2291 = vmul.f32 %v2289, %v2287
    %v2292 = vmul.f32 %v2290, %v2288
    %vm2293 = vcmask 80896
    %v2294 = vsel %vm2293, %v2291, 0.0
    %v2295 = vsel %vm2293, %v2292, 0.0
    %v2296 = vadd.f32 %v2294, %v2295
    %2297 = vadd.xlane.f32.xlu0 %v2296
    %v2298 = vpop.xlane.xlu0 %2297
    %v2299 = vrot.slane %v2298, 4
    %v2300 = vadd.f32 %v2298, %v2299
    %v2301 = vrot.slane %v2300, 2
    %v2302 = vadd.f32 %v2300, %v2301
    %v2303 = vrot.slane %v2302, 1
    %v2304 = vadd.f32 %v2302, %v2303
    %s2305 = vtos %v2304
    %v2306 = vlaneseq
    %v2307 = vand.u32 %v2306, 127
    %vm2308 = vcmp.eq.s32.totalorder %v2307, 0
    %v2309 = vstv %s372
    %v2310 = vsel %vm2308, %v2309, 0.0
    %vm2311 = vcmp.eq.s32.totalorder %v2307, 1
    %v2312 = vstv %s441
    %v2313 = vsel %vm2311, %v2312, 0.0
    %v2314 = vadd.f32 %v2310, %v2313
    %vm2315 = vcmp.eq.s32.totalorder %v2307, 2
    %v2316 = vstv %s568
    %v2317 = vsel %vm2315, %v2316, 0.0
    %v2318 = vadd.f32 %v2314, %v2317
    %vm2319 = vcmp.eq.s32.totalorder %v2307, 3
    %v2320 = vstv %s653
    %v2321 = vsel %vm2319, %v2320, 0.0
    %v2322 = vadd.f32 %v2318, %v2321
    %vm2323 = vcmp.eq.s32.totalorder %v2307, 4
    %v2324 = vstv %s2282
    %v2325 = vsel %vm2323, %v2324, 0.0
    %v2326 = vadd.f32 %v2322, %v2325
    %vm2327 = vcmp.eq.s32.totalorder %v2307, 5
    %v2328 = vstv %s2305
    %v2329 = vsel %vm2327, %v2328, 0.0
    %v2330 = vadd.f32 %v2326, %v2329
    %v2331 = vld [vmem:[#allocation29] sm:$0x1]
    %v2332 = vadd.f32 %v2331, %v2330
    %2333 = vst [vmem:[#allocation29] sm:$0x1] %v2332
    // Predicated region
    $region158: #{tpu_custom_call.1} parent=1 // pred_check
      _
    $region159: #{tpu_custom_call.1} parent=1 // pred_check_branch
      %2335 = sbr.rel (0) target = $region161
    $region160: #{tpu_custom_call.1} parent=1 // pred_region
      %2337 = vsyncadd [#allocation4], 0
      %s2339 = sshll.u32 [#allocation29], 4
      %s2340 = int_to_ptr.vmem [resolvable:$true] %s2339
      %s2341 = sshll.u32 %s21, 4
      %s2342 = int_to_ptr.hbm [resolvable:$true] %s2341
      %2344 = dma.vmem_to_hbm [thread:$0]  %s2340, 16, %s2342, [#allocation4]
    $region161: #{tpu_custom_call.1} parent=1 // pred_fallthru
      _
    // Predicated region
    $region162: #{tpu_custom_call.1} parent=1 // pred_check
      _
    $region163: #{tpu_custom_call.1} parent=1 // pred_check_branch
      %2346 = sbr.rel (0) target = $region165
    $region164: #{tpu_custom_call.1} parent=1 // pred_region
      %2348 = dma.done [#allocation4], 16
    $region165: #{tpu_custom_call.1} parent=1 // pred_fallthru
      _
    %2349 = vsyncpa [#allocation3], 1
    %2350 = vsyncpa [#allocation6], 1
    %2351 = vsyncpa [#allocation9], 1
    %2352 = vsyncpa [#allocation12], 1
    %2353 = vsyncpa [#allocation15], 1
    %2354 = vsyncpa [#allocation18], 1
    %2355 = vsyncpa [#allocation21], 1
    %2356 = vsyncpa [#allocation24], 1
    %2357 = vsyncpa [#allocation27], 1
    %2358 = vsyncpa [#allocation4], 1

</llo_original>
